<compile_context>
chip_gen: v7x
topology: tpu7x:2x2x1
jax: 0.10.0
libtpu: 0.0.40
codegen_flags: <defaults>
</compile_context>

<pallas_src>
import math
from functools import partial

import jax
import jax.numpy as jnp
from jax.experimental import pallas as pl
from jax.experimental.pallas import tpu as pltpu


# --------------------------- VMEM budget helpers ----------------------------

_VMEM_CACHE = None


def _vmem_limits():
    """(scoped vmem limit to request, byte budget for tile sizing)."""
    global _VMEM_CACHE
    if _VMEM_CACHE is None:
        try:
            info = pltpu.get_tpu_info()
            cap = int(getattr(info, "vmem_capacity_bytes", 0)) or (64 << 20)
        except Exception:
            cap = 64 << 20                      # conservative (v7x per-core)
        limit = min(int(cap * 0.85), 100 << 20)
        _VMEM_CACHE = (limit, int(limit * 0.70))
    return _VMEM_CACHE


def _pick_seq_block(n_seq, lq, C, budget_bytes, *, min_steps=4, row_cap=512):
    """Largest divisor of n_seq whose per-step VMEM estimate fits the budget,
    keeps >= min_steps grid steps (pipelining per TensorCore even on v7x's two
    cores) and keeps the flattened M dimension modest."""
    L = 2 * lq

    def step_bytes(nblk):
        blk = nblk * lq * C
        io = 3 * 2 * blk * 2                            # xa/xb/out bf16, x2 buf
        weights = 8 * C * C + (L * C + 8 * C) * 4       # bf16 W's + f32 PE/affine
        inter = blk * 8 * 2                             # xna/xnb + concat, f32
        inter += blk * 2 + 2 * blk * 2 * 2              # q bf16, kv bf16
        inter += nblk * lq * L * (4 + 2)                # scores f32 + probs bf16
        inter += blk * (4 + 2 + 4)                      # head out + acc
        return io + weights + inter

    best = 1
    upper = max(1, n_seq // max(min_steps, 1))
    for nblk in range(1, upper + 1):
        if n_seq % nblk:
            continue
        if nblk * lq > row_cap:
            continue
        if step_bytes(nblk) <= budget_bytes:
            best = nblk
    return best


# ----------------------------- Pallas kernels ------------------------------


def _attn_kernel(xa_ref, xb_ref, pe_ref, g_ref, b_ref, wq_ref, wkv_ref,
                 wo_ref, bo_ref, o_ref, *, num_heads, eps):
    # xa_ref: (Nblk, lq, C) bf16  hidden half (queries come from here)
    # xb_ref: (Nblk, lq, C) bf16  reference half (keys/values only)
    # pe_ref: (2*lq, C) f32       positional table slice (grid-invariant)
    # wq_ref: (C, C) bf16         query projection, 1/sqrt(dh) pre-folded
    # wkv_ref:(C, 2C) bf16        fused key/value projection
    # wo_ref: (C, C) bf16         output projection; bo_ref: (1, C) f32 bias
    # o_ref:  (Nblk, lq, C) bf16  only the consumed query rows are produced
    nblk, lq, C = xa_ref.shape
    nh = num_heads
    dh = C // nh
    L = 2 * lq

    # pos-embed + LayerNorm over C; statistics in f32.  The two halves of the
    # virtual [hidden | ref] sequence take PE rows [0:lq) and [lq:2lq).
    xa = xa_ref[...].astype(jnp.float32) + pe_ref[:lq, :]
    xb = xb_ref[...].astype(jnp.float32) + pe_ref[lq:2 * lq, :]

    def _ln(x):
        mean = jnp.mean(x, axis=-1, keepdims=True)
        var = jnp.mean(jnp.square(x - mean), axis=-1, keepdims=True)
        xn = (x - mean) * jax.lax.rsqrt(var + eps)
        return xn * g_ref[0] + b_ref[0]

    xna = _ln(xa)                                   # (nblk, lq, C) f32
    xnb = _ln(xb)

    # Q from the hidden half only; fused K/V from the full (2*lq) sequence.
    q = jnp.dot(xna.reshape(nblk * lq, C).astype(jnp.bfloat16), wq_ref[...],
                preferred_element_type=jnp.float32)
    q = q.astype(jnp.bfloat16).reshape(nblk, lq, C)          # cast ONCE

    xfull = jnp.concatenate([xna, xnb], axis=1)              # (nblk, L, C) f32
    kv = jnp.dot(xfull.reshape(nblk * L, C).astype(jnp.bfloat16), wkv_ref[...],
                 preferred_element_type=jnp.float32)
    kv = kv.astype(jnp.bfloat16).reshape(nblk, L, 2 * C)     # cast ONCE

    # Per-head attention; head outputs joined once -> single K=C Wo matmul.
    heads = []
    for h in range(nh):                                      # static unroll
        qh = q[:, :, h * dh:(h + 1) * dh]
        kh = kv[:, :, h * dh:(h + 1) * dh]
        vh = kv[:, :, C + h * dh:C + (h + 1) * dh]
        s = jnp.einsum('nqd,nkd->nqk', qh, kh,
                       preferred_element_type=jnp.float32)   # scale in Wq
        m = jnp.max(s, axis=-1, keepdims=True)
        p = jnp.exp(s - m)
        p = p * pl.reciprocal(jnp.sum(p, axis=-1, keepdims=True), approx=True)
        ah = jnp.einsum('nqk,nkd->nqd', p.astype(jnp.bfloat16), vh,
                        preferred_element_type=jnp.float32)  # (nblk, lq, dh)
        heads.append(ah.astype(jnp.bfloat16))
    attn = heads[0] if nh == 1 else jnp.concatenate(heads, axis=-1)

    out = jnp.dot(attn.reshape(nblk * lq, C), wo_ref[...],
                  preferred_element_type=jnp.float32) + bo_ref[0]
    o_ref[...] = out.reshape(nblk, lq, C).astype(o_ref.dtype)


def _conv_res_kernel(xp_ref, hid_ref, w_ref, b_ref, o_ref):
    # xp_ref:  (1, H+2, W+2, C) bf16 padded branch-2 output (conv input)
    # hid_ref: (1, H, W, C) f32     residual input
    # w_ref:   (9, C, C) bf16       conv taps, (ky*3+kx, in, out) layout
    # b_ref:   (1, C) f32 bias;  o_ref: (1, H, W, C) f32
    # out = hidden + conv3x3(res2): nine shifted-tap MXU matmuls, no im2col.
    _, Hp, Wp, C = xp_ref.shape
    H, W = Hp - 2, Wp - 2
    xp = xp_ref[...]
    acc = jnp.zeros((H * W, C), jnp.float32)
    for dy in range(3):
        for dx in range(3):
            tap = xp[0, dy:dy + H, dx:dx + W, :].reshape(H * W, C)
            acc = acc + jnp.dot(tap, w_ref[dy * 3 + dx],
                                preferred_element_type=jnp.float32)
    out = hid_ref[0].reshape(H * W, C) + acc + b_ref[0]
    o_ref[...] = out.reshape(1, H, W, C).astype(o_ref.dtype)


# ----------------------------- Pallas wrappers ------------------------------


def _attention_block(xa, xb, pe, gamma, beta, wq, wkv, wo, bo,
                     *, num_heads, eps):
    # xa, xb: (N, lq, C) bf16 halves of the sequence; returns (N, lq, C) bf16.
    N, lq, C = xa.shape
    vmem_limit, vmem_budget = _vmem_limits()
    nblk = _pick_seq_block(N, lq, C, vmem_budget)
    kernel = partial(_attn_kernel, num_heads=num_heads, eps=eps)
    once = dict(pipeline_mode=pl.Buffered(1))   # single-buffer invariants
    return pl.pallas_call(
        kernel,
        out_shape=jax.ShapeDtypeStruct((N, lq, C), jnp.bfloat16),
        grid=(N // nblk,),
        in_specs=[
            pl.BlockSpec((nblk, lq, C), lambda n: (n, 0, 0)),
            pl.BlockSpec((nblk, lq, C), lambda n: (n, 0, 0)),
            pl.BlockSpec((2 * lq, C), lambda n: (0, 0), **once),
            pl.BlockSpec((1, C), lambda n: (0, 0), **once),
            pl.BlockSpec((1, C), lambda n: (0, 0), **once),
            pl.BlockSpec((C, C), lambda n: (0, 0), **once),
            pl.BlockSpec((C, 2 * C), lambda n: (0, 0), **once),
            pl.BlockSpec((C, C), lambda n: (0, 0), **once),
            pl.BlockSpec((1, C), lambda n: (0, 0), **once),
        ],
        out_specs=pl.BlockSpec((nblk, lq, C), lambda n: (n, 0, 0)),
        compiler_params=pltpu.CompilerParams(
            dimension_semantics=("parallel",),
            vmem_limit_bytes=vmem_limit),
    )(xa, xb, pe, gamma, beta, wq, wkv, wo, bo)


def _conv_residual(xp, hid, w9, bias):
    # xp: (B, H+2, W+2, C) bf16; hid: (B, H, W, C) f32; returns (B, H, W, C) f32.
    # TODO(synk): at very large H*W a manual halo-DMA row tiling of xp would be
    # needed to stay inside VMEM; one full padded image per grid step here.
    B, Hp, Wp, C = xp.shape
    H, W = Hp - 2, Wp - 2
    vmem_limit, _ = _vmem_limits()
    once = dict(pipeline_mode=pl.Buffered(1))
    return pl.pallas_call(
        _conv_res_kernel,
        out_shape=jax.ShapeDtypeStruct((B, H, W, C), jnp.float32),
        grid=(B,),
        in_specs=[
            pl.BlockSpec((1, Hp, Wp, C), lambda b: (b, 0, 0, 0)),
            pl.BlockSpec((1, H, W, C), lambda b: (b, 0, 0, 0)),
            pl.BlockSpec((9, C, C), lambda b: (0, 0, 0), **once),
            pl.BlockSpec((1, C), lambda b: (0, 0), **once),
        ],
        out_specs=pl.BlockSpec((1, H, W, C), lambda b: (b, 0, 0, 0)),
        compiler_params=pltpu.CompilerParams(
            dimension_semantics=("parallel",),
            vmem_limit_bytes=vmem_limit),
    )(xp, hid, w9, bias)


# ------------------------------- parameters --------------------------------


def sinusoidal_pe(max_len, dim):
    # diffusers SinusoidalPositionalEmbedding buffer.
    pos = jnp.arange(max_len, dtype=jnp.float32)[:, None]
    div = jnp.exp(jnp.arange(0, dim, 2, dtype=jnp.float32) *
                  (-math.log(10000.0) / dim))
    pe = jnp.zeros((max_len, dim), dtype=jnp.float32)
    pe = pe.at[:, 0::2].set(jnp.sin(pos * div))
    pe = pe.at[:, 1::2].set(jnp.cos(pos * div))
    return pe


def init_params(key, C, max_pos=128):
    ks = jax.random.split(key, 10)

    def w(k):  # nn.Linear weight in PyTorch (out, in) layout
        return jax.random.normal(k, (C, C), jnp.float32) * 0.05

    return dict(
        pe=sinusoidal_pe(max_pos, C),
        ln_g=jnp.ones((C,), jnp.float32),            # LayerNorm affine init
        ln_b=jnp.zeros((C,), jnp.float32),
        attn1=dict(wq=w(ks[0]), wk=w(ks[1]), wv=w(ks[2]), wo=w(ks[3]),
                   bo=jax.random.normal(ks[4], (C,), jnp.float32) * 0.05),
        attn2=dict(wq=w(ks[5]), wk=w(ks[6]), wv=w(ks[7]), wo=w(ks[8]),
                   bo=jax.random.normal(ks[9], (C,), jnp.float32) * 0.05),
        conv_w=jnp.zeros((C, C, 3, 3), jnp.float32),  # zero_module(Conv2d)
        conv_b=jnp.zeros((C,), jnp.float32),
    )


def _prep_attn_weights(a, C, num_heads):
    # PyTorch Linear weights are (out, in); kernels want (in, out) with the
    # attention scale folded into Wq and K/V fused.  bf16 at the MXU inputs.
    scale = 1.0 / math.sqrt(C // num_heads)
    wq = (a["wq"].T * scale).astype(jnp.bfloat16)                      # (C, C)
    wkv = jnp.concatenate([a["wk"].T, a["wv"].T], axis=1).astype(jnp.bfloat16)
    wo = a["wo"].T.astype(jnp.bfloat16)                                # (C, C)
    bo = a["bo"][None, :].astype(jnp.float32)
    return wq, wkv, wo, bo


# -------------------------------- forward ----------------------------------


@partial(jax.jit, static_argnames=("num_frames", "num_heads", "eps"))
def sk_reference_attention(hidden, ref, num_frames, params,
                           *, num_heads=1, eps=1e-5):
    B, C, H, W = hidden.shape
    if ref.shape[0] != B:
        ref = jnp.repeat(ref, num_frames, axis=0)    # repeat_interleave(dim=0)

    pe = params["pe"]
    assert pe.shape[0] >= 2 * max(H, W), "positional table shorter than 2*max(H,W)"
    g = params["ln_g"][None, :]
    b = params["ln_b"][None, :]

    # NHWC end-to-end: channels on the lane axis for every kernel.
    hidden_nhwc = jnp.transpose(hidden, (0, 2, 3, 1))          # (B, H, W, C) f32
    ref_nhwc = jnp.transpose(ref, (0, 2, 3, 1))
    hid_bf = hidden_nhwc.astype(jnp.bfloat16)
    ref_bf = ref_nhwc.astype(jnp.bfloat16)

    # ---- branch 1: virtual concat along width, attend over the width axis --
    # The [hidden | ref] halves are fed separately (joined in VMEM): no HBM
    # concat round-trip.  'b c h w -> (b h) w c' is a pure reshape in NHWC.
    xa1 = hid_bf.reshape(B * H, W, C)
    xb1 = ref_bf.reshape(B * H, W, C)
    wq1, wkv1, wo1, bo1 = _prep_attn_weights(params["attn1"], C, num_heads)
    out1 = _attention_block(xa1, xb1, pe[:2 * W], g, b, wq1, wkv1, wo1, bo1,
                            num_heads=num_heads, eps=eps)      # (B*H, W, C) bf16
    res1 = out1.reshape(B, H, W, C)

    # ---- branch 2: virtual concat along height, attend over the height axis
    xa2 = jnp.transpose(res1, (0, 2, 1, 3)).reshape(B * W, H, C)       # bf16
    xb2 = jnp.transpose(ref_bf, (0, 2, 1, 3)).reshape(B * W, H, C)
    wq2, wkv2, wo2, bo2 = _prep_attn_weights(params["attn2"], C, num_heads)
    out2 = _attention_block(xa2, xb2, pe[:2 * H], g, b, wq2, wkv2, wo2, bo2,
                            num_heads=num_heads, eps=eps)      # (B*W, H, C) bf16
    res2 = jnp.transpose(out2.reshape(B, W, H, C), (0, 2, 1, 3))  # (B,H,W,C) bf16

    # ---- zero-init 3x3 conv + residual: in-kernel shifted taps (no im2col) --
    xp = jnp.pad(res2, ((0, 0), (1, 1), (1, 1), (0, 0)))       # bf16 halo pad
    w9 = jnp.transpose(params["conv_w"],
                       (2, 3, 1, 0)).reshape(9, C, C).astype(jnp.bfloat16)
    out_nhwc = _conv_residual(xp, hidden_nhwc, w9, params["conv_b"][None, :])
    return jnp.transpose(out_nhwc, (0, 3, 1, 2))


# --------------------------------- main -------------------------------------


if __name__ == "__main__":
    key = jax.random.PRNGKey(0)
    B_ref, num_frames = 1, 2
    C, H, W = 32, 8, 8
    B = B_ref * num_frames

    k1, k2, k3 = jax.random.split(key, 3)
    hidden_states = jax.random.normal(k1, (B, C, H, W), jnp.float32)
    ref_stats = jax.random.normal(k2, (B_ref, C, H, W), jnp.float32)
    params = init_params(k3, C)

    out = sk_reference_attention(hidden_states, ref_stats, num_frames, params)
    out = jax.block_until_ready(out)

    assert out.shape == hidden_states.shape
    # proj (Conv2d) is zero-initialized per zero_module, so the forward must
    # return hidden_states exactly (residual of a zero conv, kept f32).
    assert bool(jnp.allclose(out, hidden_states, atol=1e-5))
    print("KERNEL_OK")
</pallas_src>

<mosaic_0001>
module attributes {stable_mosaic.version = 11 : i64} {
  func.func @_attn_kernel(%arg0: i32, %arg1: memref<4x8x32xbf16, #tpu.memory_space<vmem>>, %arg2: memref<4x8x32xbf16, #tpu.memory_space<vmem>>, %arg3: memref<16x32xf32, #tpu.memory_space<vmem>>, %arg4: memref<1x32xf32, #tpu.memory_space<vmem>>, %arg5: memref<1x32xf32, #tpu.memory_space<vmem>>, %arg6: memref<32x32xbf16, #tpu.memory_space<vmem>>, %arg7: memref<32x64xbf16, #tpu.memory_space<vmem>>, %arg8: memref<32x32xbf16, #tpu.memory_space<vmem>>, %arg9: memref<1x32xf32, #tpu.memory_space<vmem>>, %arg10: memref<4x8x32xbf16, #tpu.memory_space<vmem>>) attributes {dimension_semantics = [#tpu.dimension_semantics<parallel>], iteration_bounds = array<i64: 4>, scalar_prefetch = 0 : i64, scratch_operands = 0 : i64, tpu.core_type = #tpu.core_type<tc>, window_params = [{transform_indices = @transform_0, window_bounds = array<i64: 4, 8, 32>}, {transform_indices = @transform_1, window_bounds = array<i64: 4, 8, 32>}, {pipeline_mode = #tpu.pipeline_mode<synchronous>, transform_indices = @transform_2, window_bounds = array<i64: 16, 32>}, {pipeline_mode = #tpu.pipeline_mode<synchronous>, transform_indices = @transform_3, window_bounds = array<i64: 1, 32>}, {pipeline_mode = #tpu.pipeline_mode<synchronous>, transform_indices = @transform_4, window_bounds = array<i64: 1, 32>}, {pipeline_mode = #tpu.pipeline_mode<synchronous>, transform_indices = @transform_5, window_bounds = array<i64: 32, 32>}, {pipeline_mode = #tpu.pipeline_mode<synchronous>, transform_indices = @transform_6, window_bounds = array<i64: 32, 64>}, {pipeline_mode = #tpu.pipeline_mode<synchronous>, transform_indices = @transform_7, window_bounds = array<i64: 32, 32>}, {pipeline_mode = #tpu.pipeline_mode<synchronous>, transform_indices = @transform_8, window_bounds = array<i64: 1, 32>}, {transform_indices = @transform_9, window_bounds = array<i64: 4, 8, 32>}]} {
    %c0 = arith.constant 0 : index
    %c0_0 = arith.constant 0 : index
    %c0_1 = arith.constant 0 : index
    %0 = vector.load %arg1[%c0, %c0_0, %c0_1] : memref<4x8x32xbf16, #tpu.memory_space<vmem>>, vector<4x8x32xbf16>
    %1 = arith.extf %0 : vector<4x8x32xbf16> to vector<4x8x32xf32>
    %c0_2 = arith.constant 0 : index
    %c0_3 = arith.constant 0 : index
    %2 = vector.load %arg3[%c0_2, %c0_3] : memref<16x32xf32, #tpu.memory_space<vmem>>, vector<8x32xf32>
    %3 = vector.shape_cast %2 : vector<8x32xf32> to vector<1x8x32xf32>
    %4 = vector.broadcast %3 : vector<1x8x32xf32> to vector<4x8x32xf32>
    %5 = arith.addf %1, %4 : vector<4x8x32xf32>
    %c0_4 = arith.constant 0 : index
    %c0_5 = arith.constant 0 : index
    %c0_6 = arith.constant 0 : index
    %6 = vector.load %arg2[%c0_4, %c0_5, %c0_6] : memref<4x8x32xbf16, #tpu.memory_space<vmem>>, vector<4x8x32xbf16>
    %7 = arith.extf %6 : vector<4x8x32xbf16> to vector<4x8x32xf32>
    %c8 = arith.constant 8 : index
    %c0_7 = arith.constant 0 : index
    %8 = vector.load %arg3[%c8, %c0_7] : memref<16x32xf32, #tpu.memory_space<vmem>>, vector<8x32xf32>
    %9 = vector.shape_cast %8 : vector<8x32xf32> to vector<1x8x32xf32>
    %10 = vector.broadcast %9 : vector<1x8x32xf32> to vector<4x8x32xf32>
    %11 = arith.addf %7, %10 : vector<4x8x32xf32>
    %cst = arith.constant dense<0.000000e+00> : vector<4x8xf32>
    %12 = vector.multi_reduction <add>, %5, %cst [2] : vector<4x8x32xf32> to vector<4x8xf32>
    %13 = vector.shape_cast %12 : vector<4x8xf32> to vector<4x8x1xf32>
    %cst_8 = arith.constant 3.200000e+01 : f32
    %14 = vector.broadcast %cst_8 : f32 to vector<4x8x1xf32>
    %15 = arith.divf %13, %14 : vector<4x8x1xf32>
    %16 = vector.broadcast %15 : vector<4x8x1xf32> to vector<4x8x32xf32>
    %17 = arith.subf %5, %16 : vector<4x8x32xf32>
    %18 = arith.mulf %17, %17 : vector<4x8x32xf32>
    %cst_9 = arith.constant dense<0.000000e+00> : vector<4x8xf32>
    %19 = vector.multi_reduction <add>, %18, %cst_9 [2] : vector<4x8x32xf32> to vector<4x8xf32>
    %20 = vector.shape_cast %19 : vector<4x8xf32> to vector<4x8x1xf32>
    %cst_10 = arith.constant 3.200000e+01 : f32
    %21 = vector.broadcast %cst_10 : f32 to vector<4x8x1xf32>
    %22 = arith.divf %20, %21 : vector<4x8x1xf32>
    %23 = vector.broadcast %15 : vector<4x8x1xf32> to vector<4x8x32xf32>
    %24 = arith.subf %5, %23 : vector<4x8x32xf32>
    %cst_11 = arith.constant 9.99999974E-6 : f32
    %25 = vector.broadcast %cst_11 : f32 to vector<4x8x1xf32>
    %26 = arith.addf %22, %25 : vector<4x8x1xf32>
    %27 = math.rsqrt %26 : vector<4x8x1xf32>
    %28 = vector.broadcast %27 : vector<4x8x1xf32> to vector<4x8x32xf32>
    %29 = arith.mulf %24, %28 : vector<4x8x32xf32>
    %c0_12 = arith.constant 0 : index
    %c0_13 = arith.constant 0 : index
    %30 = vector.load %arg4[%c0_12, %c0_13] : memref<1x32xf32, #tpu.memory_space<vmem>>, vector<1x32xf32>
    %31 = vector.shape_cast %30 : vector<1x32xf32> to vector<32xf32>
    %32 = vector.shape_cast %31 : vector<32xf32> to vector<1x1x32xf32>
    %33 = vector.broadcast %32 : vector<1x1x32xf32> to vector<4x8x32xf32>
    %34 = arith.mulf %29, %33 : vector<4x8x32xf32>
    %c0_14 = arith.constant 0 : index
    %c0_15 = arith.constant 0 : index
    %35 = vector.load %arg5[%c0_14, %c0_15] : memref<1x32xf32, #tpu.memory_space<vmem>>, vector<1x32xf32>
    %36 = vector.shape_cast %35 : vector<1x32xf32> to vector<32xf32>
    %37 = vector.shape_cast %36 : vector<32xf32> to vector<1x1x32xf32>
    %38 = vector.broadcast %37 : vector<1x1x32xf32> to vector<4x8x32xf32>
    %39 = arith.addf %34, %38 : vector<4x8x32xf32>
    %cst_16 = arith.constant dense<0.000000e+00> : vector<4x8xf32>
    %40 = vector.multi_reduction <add>, %11, %cst_16 [2] : vector<4x8x32xf32> to vector<4x8xf32>
    %41 = vector.shape_cast %40 : vector<4x8xf32> to vector<4x8x1xf32>
    %cst_17 = arith.constant 3.200000e+01 : f32
    %42 = vector.broadcast %cst_17 : f32 to vector<4x8x1xf32>
    %43 = arith.divf %41, %42 : vector<4x8x1xf32>
    %44 = vector.broadcast %43 : vector<4x8x1xf32> to vector<4x8x32xf32>
    %45 = arith.subf %11, %44 : vector<4x8x32xf32>
    %46 = arith.mulf %45, %45 : vector<4x8x32xf32>
    %cst_18 = arith.constant dense<0.000000e+00> : vector<4x8xf32>
    %47 = vector.multi_reduction <add>, %46, %cst_18 [2] : vector<4x8x32xf32> to vector<4x8xf32>
    %48 = vector.shape_cast %47 : vector<4x8xf32> to vector<4x8x1xf32>
    %cst_19 = arith.constant 3.200000e+01 : f32
    %49 = vector.broadcast %cst_19 : f32 to vector<4x8x1xf32>
    %50 = arith.divf %48, %49 : vector<4x8x1xf32>
    %51 = vector.broadcast %43 : vector<4x8x1xf32> to vector<4x8x32xf32>
    %52 = arith.subf %11, %51 : vector<4x8x32xf32>
    %cst_20 = arith.constant 9.99999974E-6 : f32
    %53 = vector.broadcast %cst_20 : f32 to vector<4x8x1xf32>
    %54 = arith.addf %50, %53 : vector<4x8x1xf32>
    %55 = math.rsqrt %54 : vector<4x8x1xf32>
    %56 = vector.broadcast %55 : vector<4x8x1xf32> to vector<4x8x32xf32>
    %57 = arith.mulf %52, %56 : vector<4x8x32xf32>
    %c0_21 = arith.constant 0 : index
    %c0_22 = arith.constant 0 : index
    %58 = vector.load %arg4[%c0_21, %c0_22] : memref<1x32xf32, #tpu.memory_space<vmem>>, vector<1x32xf32>
    %59 = vector.shape_cast %58 : vector<1x32xf32> to vector<32xf32>
    %60 = vector.shape_cast %59 : vector<32xf32> to vector<1x1x32xf32>
    %61 = vector.broadcast %60 : vector<1x1x32xf32> to vector<4x8x32xf32>
    %62 = arith.mulf %57, %61 : vector<4x8x32xf32>
    %c0_23 = arith.constant 0 : index
    %c0_24 = arith.constant 0 : index
    %63 = vector.load %arg5[%c0_23, %c0_24] : memref<1x32xf32, #tpu.memory_space<vmem>>, vector<1x32xf32>
    %64 = vector.shape_cast %63 : vector<1x32xf32> to vector<32xf32>
    %65 = vector.shape_cast %64 : vector<32xf32> to vector<1x1x32xf32>
    %66 = vector.broadcast %65 : vector<1x1x32xf32> to vector<4x8x32xf32>
    %67 = arith.addf %62, %66 : vector<4x8x32xf32>
    %68 = vector.shape_cast %39 : vector<4x8x32xf32> to vector<32x32xf32>
    %69 = arith.truncf %68 : vector<32x32xf32> to vector<32x32xbf16>
    %c0_25 = arith.constant 0 : index
    %c0_26 = arith.constant 0 : index
    %70 = vector.load %arg6[%c0_25, %c0_26] : memref<32x32xbf16, #tpu.memory_space<vmem>>, vector<32x32xbf16>
    %cst_27 = arith.constant dense<0.000000e+00> : vector<32x32xf32>
    %71 = tpu.matmul %69, %70, %cst_27 {dimension_numbers = #tpu.dot_dimension_numbers<[1], [0], [0], [1], [0, 0, 1, 1], [], []>} : vector<32x32xbf16>, vector<32x32xbf16>, vector<32x32xf32> -> vector<32x32xf32>
    %72 = arith.truncf %71 : vector<32x32xf32> to vector<32x32xbf16>
    %73 = vector.shape_cast %72 : vector<32x32xbf16> to vector<4x8x32xbf16>
    %74 = tpu.concatenate %39, %67 in 1 : vector<4x8x32xf32>, vector<4x8x32xf32> -> vector<4x16x32xf32>
    %75 = vector.shape_cast %74 : vector<4x16x32xf32> to vector<64x32xf32>
    %76 = arith.truncf %75 : vector<64x32xf32> to vector<64x32xbf16>
    %c0_28 = arith.constant 0 : index
    %c0_29 = arith.constant 0 : index
    %77 = vector.load %arg7[%c0_28, %c0_29] : memref<32x64xbf16, #tpu.memory_space<vmem>>, vector<32x64xbf16>
    %cst_30 = arith.constant dense<0.000000e+00> : vector<64x64xf32>
    %78 = tpu.matmul %76, %77, %cst_30 {dimension_numbers = #tpu.dot_dimension_numbers<[1], [0], [0], [1], [0, 0, 1, 1], [], []>} : vector<64x32xbf16>, vector<32x64xbf16>, vector<64x64xf32> -> vector<64x64xf32>
    %79 = arith.truncf %78 : vector<64x64xf32> to vector<64x64xbf16>
    %80 = vector.shape_cast %79 : vector<64x64xbf16> to vector<4x16x64xbf16>
    %81 = vector.extract_strided_slice %80 {offsets = [0, 0, 0], sizes = [4, 16, 32], strides = [1, 1, 1]} : vector<4x16x64xbf16> to vector<4x16x32xbf16>
    %82 = vector.extract_strided_slice %80 {offsets = [0, 0, 32], sizes = [4, 16, 32], strides = [1, 1, 1]} : vector<4x16x64xbf16> to vector<4x16x32xbf16>
    "tpu.trace_start"() <{level = 10 : i32, message = "nqd,nkd->nqk"}> : () -> ()
    %cst_31 = arith.constant dense<0.000000e+00> : vector<4x8x16xf32>
    %83 = tpu.matmul %73, %81, %cst_31 {dimension_numbers = #tpu.dot_dimension_numbers<[2], [2], [1], [1], [0, 0, 0, 1, 1, 1], [0], [0]>} : vector<4x8x32xbf16>, vector<4x16x32xbf16>, vector<4x8x16xf32> -> vector<4x8x16xf32>
    "tpu.trace_stop"() : () -> ()
    %cst_32 = arith.constant dense<0xFF800000> : vector<4x8xf32>
    %84 = vector.multi_reduction <maximumf>, %83, %cst_32 [2] : vector<4x8x16xf32> to vector<4x8xf32>
    %85 = vector.shape_cast %84 : vector<4x8xf32> to vector<4x8x1xf32>
    %86 = vector.broadcast %85 : vector<4x8x1xf32> to vector<4x8x16xf32>
    %87 = arith.subf %83, %86 : vector<4x8x16xf32>
    %88 = math.exp %87 : vector<4x8x16xf32>
    %cst_33 = arith.constant dense<0.000000e+00> : vector<4x8xf32>
    %89 = vector.multi_reduction <add>, %88, %cst_33 [2] : vector<4x8x16xf32> to vector<4x8xf32>
    %90 = vector.shape_cast %89 : vector<4x8xf32> to vector<4x8x1xf32>
    %91 = tpu.reciprocal %90 {approx = true} : vector<4x8x1xf32> -> vector<4x8x1xf32>
    %92 = vector.broadcast %91 : vector<4x8x1xf32> to vector<4x8x16xf32>
    %93 = arith.mulf %88, %92 : vector<4x8x16xf32>
    %94 = arith.truncf %93 : vector<4x8x16xf32> to vector<4x8x16xbf16>
    "tpu.trace_start"() <{level = 10 : i32, message = "nqk,nkd->nqd"}> : () -> ()
    %cst_34 = arith.constant dense<0.000000e+00> : vector<4x8x32xf32>
    %95 = tpu.matmul %94, %82, %cst_34 {dimension_numbers = #tpu.dot_dimension_numbers<[2], [1], [1], [2], [0, 0, 0, 1, 1, 2], [0], [0]>} : vector<4x8x16xbf16>, vector<4x16x32xbf16>, vector<4x8x32xf32> -> vector<4x8x32xf32>
    "tpu.trace_stop"() : () -> ()
    %96 = arith.truncf %95 : vector<4x8x32xf32> to vector<4x8x32xbf16>
    %97 = vector.shape_cast %96 : vector<4x8x32xbf16> to vector<32x32xbf16>
    %c0_35 = arith.constant 0 : index
    %c0_36 = arith.constant 0 : index
    %98 = vector.load %arg8[%c0_35, %c0_36] : memref<32x32xbf16, #tpu.memory_space<vmem>>, vector<32x32xbf16>
    %cst_37 = arith.constant dense<0.000000e+00> : vector<32x32xf32>
    %99 = tpu.matmul %97, %98, %cst_37 {dimension_numbers = #tpu.dot_dimension_numbers<[1], [0], [0], [1], [0, 0, 1, 1], [], []>} : vector<32x32xbf16>, vector<32x32xbf16>, vector<32x32xf32> -> vector<32x32xf32>
    %c0_38 = arith.constant 0 : index
    %c0_39 = arith.constant 0 : index
    %100 = vector.load %arg9[%c0_38, %c0_39] : memref<1x32xf32, #tpu.memory_space<vmem>>, vector<1x32xf32>
    %101 = vector.shape_cast %100 : vector<1x32xf32> to vector<32xf32>
    %102 = vector.shape_cast %101 : vector<32xf32> to vector<1x32xf32>
    %103 = vector.broadcast %102 : vector<1x32xf32> to vector<32x32xf32>
    %104 = arith.addf %99, %103 : vector<32x32xf32>
    %105 = vector.shape_cast %104 : vector<32x32xf32> to vector<4x8x32xf32>
    %106 = arith.truncf %105 : vector<4x8x32xf32> to vector<4x8x32xbf16>
    %c0_40 = arith.constant 0 : index
    %c0_41 = arith.constant 0 : index
    %c0_42 = arith.constant 0 : index
    %107 = vector.load %arg10[%c0_40, %c0_41, %c0_42] : memref<4x8x32xbf16, #tpu.memory_space<vmem>>, vector<4x8x32xbf16>
    tpu.vector_store %arg10[%c0_40, %c0_41, %c0_42], %106 {strides = array<i32>} : memref<4x8x32xbf16, #tpu.memory_space<vmem>>, vector<4x8x32xbf16>,
    return
  }
  func.func @transform_0(%arg0: i32) -> (i32, i32, i32) {
    %c0_i32 = arith.constant 0 : i32
    %c0_i32_0 = arith.constant 0 : i32
    %c0_i32_1 = arith.constant 0 : i32
    return %arg0, %c0_i32, %c0_i32_0 : i32, i32, i32
  }
  func.func @transform_1(%arg0: i32) -> (i32, i32, i32) {
    %c0_i32 = arith.constant 0 : i32
    %c0_i32_0 = arith.constant 0 : i32
    %c0_i32_1 = arith.constant 0 : i32
    return %arg0, %c0_i32, %c0_i32_0 : i32, i32, i32
  }
  func.func @transform_2(%arg0: i32) -> (i32, i32) {
    %c0_i32 = arith.constant 0 : i32
    %c0_i32_0 = arith.constant 0 : i32
    %c0_i32_1 = arith.constant 0 : i32
    return %c0_i32, %c0_i32_0 : i32, i32
  }
  func.func @transform_3(%arg0: i32) -> (i32, i32) {
    %c0_i32 = arith.constant 0 : i32
    %c0_i32_0 = arith.constant 0 : i32
    %c0_i32_1 = arith.constant 0 : i32
    return %c0_i32, %c0_i32_0 : i32, i32
  }
  func.func @transform_4(%arg0: i32) -> (i32, i32) {
    %c0_i32 = arith.constant 0 : i32
    %c0_i32_0 = arith.constant 0 : i32
    %c0_i32_1 = arith.constant 0 : i32
    return %c0_i32, %c0_i32_0 : i32, i32
  }
  func.func @transform_5(%arg0: i32) -> (i32, i32) {
    %c0_i32 = arith.constant 0 : i32
    %c0_i32_0 = arith.constant 0 : i32
    %c0_i32_1 = arith.constant 0 : i32
    return %c0_i32, %c0_i32_0 : i32, i32
  }
  func.func @transform_6(%arg0: i32) -> (i32, i32) {
    %c0_i32 = arith.constant 0 : i32
    %c0_i32_0 = arith.constant 0 : i32
    %c0_i32_1 = arith.constant 0 : i32
    return %c0_i32, %c0_i32_0 : i32, i32
  }
  func.func @transform_7(%arg0: i32) -> (i32, i32) {
    %c0_i32 = arith.constant 0 : i32
    %c0_i32_0 = arith.constant 0 : i32
    %c0_i32_1 = arith.constant 0 : i32
    return %c0_i32, %c0_i32_0 : i32, i32
  }
  func.func @transform_8(%arg0: i32) -> (i32, i32) {
    %c0_i32 = arith.constant 0 : i32
    %c0_i32_0 = arith.constant 0 : i32
    %c0_i32_1 = arith.constant 0 : i32
    return %c0_i32, %c0_i32_0 : i32, i32
  }
  func.func @transform_9(%arg0: i32) -> (i32, i32, i32) {
    %c0_i32 = arith.constant 0 : i32
    %c0_i32_0 = arith.constant 0 : i32
    %c0_i32_1 = arith.constant 0 : i32
    return %arg0, %c0_i32, %c0_i32_0 : i32, i32, i32
  }
}

module attributes {stable_mosaic.version = 11 : i64} {
  func.func @_conv_res_kernel(%arg0: i32, %arg1: memref<1x10x10x32xbf16, #tpu.memory_space<vmem>>, %arg2: memref<1x8x8x32xf32, #tpu.memory_space<vmem>>, %arg3: memref<9x32x32xbf16, #tpu.memory_space<vmem>>, %arg4: memref<1x32xf32, #tpu.memory_space<vmem>>, %arg5: memref<1x8x8x32xf32, #tpu.memory_space<vmem>>) attributes {dimension_semantics = [#tpu.dimension_semantics<parallel>], iteration_bounds = array<i64: 2>, scalar_prefetch = 0 : i64, scratch_operands = 0 : i64, tpu.core_type = #tpu.core_type<tc>, window_params = [{transform_indices = @transform_0, window_bounds = array<i64: 1, 10, 10, 32>}, {transform_indices = @transform_1, window_bounds = array<i64: 1, 8, 8, 32>}, {pipeline_mode = #tpu.pipeline_mode<synchronous>, transform_indices = @transform_2, window_bounds = array<i64: 9, 32, 32>}, {pipeline_mode = #tpu.pipeline_mode<synchronous>, transform_indices = @transform_3, window_bounds = array<i64: 1, 32>}, {transform_indices = @transform_4, window_bounds = array<i64: 1, 8, 8, 32>}]} {
    %c0 = arith.constant 0 : index
    %c0_0 = arith.constant 0 : index
    %c0_1 = arith.constant 0 : index
    %c0_2 = arith.constant 0 : index
    %0 = vector.load %arg1[%c0, %c0_0, %c0_1, %c0_2] : memref<1x10x10x32xbf16, #tpu.memory_space<vmem>>, vector<1x10x10x32xbf16>
    %cst = arith.constant 0.000000e+00 : f32
    %1 = vector.broadcast %cst : f32 to vector<64x32xf32>
    %2 = vector.extract_strided_slice %0 {offsets = [0, 0, 0, 0], sizes = [1, 8, 8, 32], strides = [1, 1, 1, 1]} : vector<1x10x10x32xbf16> to vector<1x8x8x32xbf16>
    %3 = vector.shape_cast %2 : vector<1x8x8x32xbf16> to vector<8x8x32xbf16>
    %4 = vector.shape_cast %3 : vector<8x8x32xbf16> to vector<64x32xbf16>
    %c0_3 = arith.constant 0 : index
    %c0_4 = arith.constant 0 : index
    %c0_5 = arith.constant 0 : index
    %5 = vector.load %arg3[%c0_3, %c0_4, %c0_5] : memref<9x32x32xbf16, #tpu.memory_space<vmem>>, vector<1x32x32xbf16>
    %6 = vector.shape_cast %5 : vector<1x32x32xbf16> to vector<32x32xbf16>
    %cst_6 = arith.constant dense<0.000000e+00> : vector<64x32xf32>
    %7 = tpu.matmul %4, %6, %cst_6 {dimension_numbers = #tpu.dot_dimension_numbers<[1], [0], [0], [1], [0, 0, 1, 1], [], []>} : vector<64x32xbf16>, vector<32x32xbf16>, vector<64x32xf32> -> vector<64x32xf32>
    %8 = arith.addf %1, %7 : vector<64x32xf32>
    %9 = vector.extract_strided_slice %0 {offsets = [0, 0, 1, 0], sizes = [1, 8, 8, 32], strides = [1, 1, 1, 1]} : vector<1x10x10x32xbf16> to vector<1x8x8x32xbf16>
    %10 = vector.shape_cast %9 : vector<1x8x8x32xbf16> to vector<8x8x32xbf16>
    %11 = vector.shape_cast %10 : vector<8x8x32xbf16> to vector<64x32xbf16>
    %c1 = arith.constant 1 : index
    %c0_7 = arith.constant 0 : index
    %c0_8 = arith.constant 0 : index
    %12 = vector.load %arg3[%c1, %c0_7, %c0_8] : memref<9x32x32xbf16, #tpu.memory_space<vmem>>, vector<1x32x32xbf16>
    %13 = vector.shape_cast %12 : vector<1x32x32xbf16> to vector<32x32xbf16>
    %cst_9 = arith.constant dense<0.000000e+00> : vector<64x32xf32>
    %14 = tpu.matmul %11, %13, %cst_9 {dimension_numbers = #tpu.dot_dimension_numbers<[1], [0], [0], [1], [0, 0, 1, 1], [], []>} : vector<64x32xbf16>, vector<32x32xbf16>, vector<64x32xf32> -> vector<64x32xf32>
    %15 = arith.addf %8, %14 : vector<64x32xf32>
    %16 = vector.extract_strided_slice %0 {offsets = [0, 0, 2, 0], sizes = [1, 8, 8, 32], strides = [1, 1, 1, 1]} : vector<1x10x10x32xbf16> to vector<1x8x8x32xbf16>
    %17 = vector.shape_cast %16 : vector<1x8x8x32xbf16> to vector<8x8x32xbf16>
    %18 = vector.shape_cast %17 : vector<8x8x32xbf16> to vector<64x32xbf16>
    %c2 = arith.constant 2 : index
    %c0_10 = arith.constant 0 : index
    %c0_11 = arith.constant 0 : index
    %19 = vector.load %arg3[%c2, %c0_10, %c0_11] : memref<9x32x32xbf16, #tpu.memory_space<vmem>>, vector<1x32x32xbf16>
    %20 = vector.shape_cast %19 : vector<1x32x32xbf16> to vector<32x32xbf16>
    %cst_12 = arith.constant dense<0.000000e+00> : vector<64x32xf32>
    %21 = tpu.matmul %18, %20, %cst_12 {dimension_numbers = #tpu.dot_dimension_numbers<[1], [0], [0], [1], [0, 0, 1, 1], [], []>} : vector<64x32xbf16>, vector<32x32xbf16>, vector<64x32xf32> -> vector<64x32xf32>
    %22 = arith.addf %15, %21 : vector<64x32xf32>
    %23 = vector.extract_strided_slice %0 {offsets = [0, 1, 0, 0], sizes = [1, 8, 8, 32], strides = [1, 1, 1, 1]} : vector<1x10x10x32xbf16> to vector<1x8x8x32xbf16>
    %24 = vector.shape_cast %23 : vector<1x8x8x32xbf16> to vector<8x8x32xbf16>
    %25 = vector.shape_cast %24 : vector<8x8x32xbf16> to vector<64x32xbf16>
    %c3 = arith.constant 3 : index
    %c0_13 = arith.constant 0 : index
    %c0_14 = arith.constant 0 : index
    %26 = vector.load %arg3[%c3, %c0_13, %c0_14] : memref<9x32x32xbf16, #tpu.memory_space<vmem>>, vector<1x32x32xbf16>
    %27 = vector.shape_cast %26 : vector<1x32x32xbf16> to vector<32x32xbf16>
    %cst_15 = arith.constant dense<0.000000e+00> : vector<64x32xf32>
    %28 = tpu.matmul %25, %27, %cst_15 {dimension_numbers = #tpu.dot_dimension_numbers<[1], [0], [0], [1], [0, 0, 1, 1], [], []>} : vector<64x32xbf16>, vector<32x32xbf16>, vector<64x32xf32> -> vector<64x32xf32>
    %29 = arith.addf %22, %28 : vector<64x32xf32>
    %30 = vector.extract_strided_slice %0 {offsets = [0, 1, 1, 0], sizes = [1, 8, 8, 32], strides = [1, 1, 1, 1]} : vector<1x10x10x32xbf16> to vector<1x8x8x32xbf16>
    %31 = vector.shape_cast %30 : vector<1x8x8x32xbf16> to vector<8x8x32xbf16>
    %32 = vector.shape_cast %31 : vector<8x8x32xbf16> to vector<64x32xbf16>
    %c4 = arith.constant 4 : index
    %c0_16 = arith.constant 0 : index
    %c0_17 = arith.constant 0 : index
    %33 = vector.load %arg3[%c4, %c0_16, %c0_17] : memref<9x32x32xbf16, #tpu.memory_space<vmem>>, vector<1x32x32xbf16>
    %34 = vector.shape_cast %33 : vector<1x32x32xbf16> to vector<32x32xbf16>
    %cst_18 = arith.constant dense<0.000000e+00> : vector<64x32xf32>
    %35 = tpu.matmul %32, %34, %cst_18 {dimension_numbers = #tpu.dot_dimension_numbers<[1], [0], [0], [1], [0, 0, 1, 1], [], []>} : vector<64x32xbf16>, vector<32x32xbf16>, vector<64x32xf32> -> vector<64x32xf32>
    %36 = arith.addf %29, %35 : vector<64x32xf32>
    %37 = vector.extract_strided_slice %0 {offsets = [0, 1, 2, 0], sizes = [1, 8, 8, 32], strides = [1, 1, 1, 1]} : vector<1x10x10x32xbf16> to vector<1x8x8x32xbf16>
    %38 = vector.shape_cast %37 : vector<1x8x8x32xbf16> to vector<8x8x32xbf16>
    %39 = vector.shape_cast %38 : vector<8x8x32xbf16> to vector<64x32xbf16>
    %c5 = arith.constant 5 : index
    %c0_19 = arith.constant 0 : index
    %c0_20 = arith.constant 0 : index
    %40 = vector.load %arg3[%c5, %c0_19, %c0_20] : memref<9x32x32xbf16, #tpu.memory_space<vmem>>, vector<1x32x32xbf16>
    %41 = vector.shape_cast %40 : vector<1x32x32xbf16> to vector<32x32xbf16>
    %cst_21 = arith.constant dense<0.000000e+00> : vector<64x32xf32>
    %42 = tpu.matmul %39, %41, %cst_21 {dimension_numbers = #tpu.dot_dimension_numbers<[1], [0], [0], [1], [0, 0, 1, 1], [], []>} : vector<64x32xbf16>, vector<32x32xbf16>, vector<64x32xf32> -> vector<64x32xf32>
    %43 = arith.addf %36, %42 : vector<64x32xf32>
    %44 = vector.extract_strided_slice %0 {offsets = [0, 2, 0, 0], sizes = [1, 8, 8, 32], strides = [1, 1, 1, 1]} : vector<1x10x10x32xbf16> to vector<1x8x8x32xbf16>
    %45 = vector.shape_cast %44 : vector<1x8x8x32xbf16> to vector<8x8x32xbf16>
    %46 = vector.shape_cast %45 : vector<8x8x32xbf16> to vector<64x32xbf16>
    %c6 = arith.constant 6 : index
    %c0_22 = arith.constant 0 : index
    %c0_23 = arith.constant 0 : index
    %47 = vector.load %arg3[%c6, %c0_22, %c0_23] : memref<9x32x32xbf16, #tpu.memory_space<vmem>>, vector<1x32x32xbf16>
    %48 = vector.shape_cast %47 : vector<1x32x32xbf16> to vector<32x32xbf16>
    %cst_24 = arith.constant dense<0.000000e+00> : vector<64x32xf32>
    %49 = tpu.matmul %46, %48, %cst_24 {dimension_numbers = #tpu.dot_dimension_numbers<[1], [0], [0], [1], [0, 0, 1, 1], [], []>} : vector<64x32xbf16>, vector<32x32xbf16>, vector<64x32xf32> -> vector<64x32xf32>
    %50 = arith.addf %43, %49 : vector<64x32xf32>
    %51 = vector.extract_strided_slice %0 {offsets = [0, 2, 1, 0], sizes = [1, 8, 8, 32], strides = [1, 1, 1, 1]} : vector<1x10x10x32xbf16> to vector<1x8x8x32xbf16>
    %52 = vector.shape_cast %51 : vector<1x8x8x32xbf16> to vector<8x8x32xbf16>
    %53 = vector.shape_cast %52 : vector<8x8x32xbf16> to vector<64x32xbf16>
    %c7 = arith.constant 7 : index
    %c0_25 = arith.constant 0 : index
    %c0_26 = arith.constant 0 : index
    %54 = vector.load %arg3[%c7, %c0_25, %c0_26] : memref<9x32x32xbf16, #tpu.memory_space<vmem>>, vector<1x32x32xbf16>
    %55 = vector.shape_cast %54 : vector<1x32x32xbf16> to vector<32x32xbf16>
    %cst_27 = arith.constant dense<0.000000e+00> : vector<64x32xf32>
    %56 = tpu.matmul %53, %55, %cst_27 {dimension_numbers = #tpu.dot_dimension_numbers<[1], [0], [0], [1], [0, 0, 1, 1], [], []>} : vector<64x32xbf16>, vector<32x32xbf16>, vector<64x32xf32> -> vector<64x32xf32>
    %57 = arith.addf %50, %56 : vector<64x32xf32>
    %58 = vector.extract_strided_slice %0 {offsets = [0, 2, 2, 0], sizes = [1, 8, 8, 32], strides = [1, 1, 1, 1]} : vector<1x10x10x32xbf16> to vector<1x8x8x32xbf16>
    %59 = vector.shape_cast %58 : vector<1x8x8x32xbf16> to vector<8x8x32xbf16>
    %60 = vector.shape_cast %59 : vector<8x8x32xbf16> to vector<64x32xbf16>
    %c8 = arith.constant 8 : index
    %c0_28 = arith.constant 0 : index
    %c0_29 = arith.constant 0 : index
    %61 = vector.load %arg3[%c8, %c0_28, %c0_29] : memref<9x32x32xbf16, #tpu.memory_space<vmem>>, vector<1x32x32xbf16>
    %62 = vector.shape_cast %61 : vector<1x32x32xbf16> to vector<32x32xbf16>
    %cst_30 = arith.constant dense<0.000000e+00> : vector<64x32xf32>
    %63 = tpu.matmul %60, %62, %cst_30 {dimension_numbers = #tpu.dot_dimension_numbers<[1], [0], [0], [1], [0, 0, 1, 1], [], []>} : vector<64x32xbf16>, vector<32x32xbf16>, vector<64x32xf32> -> vector<64x32xf32>
    %64 = arith.addf %57, %63 : vector<64x32xf32>
    %c0_31 = arith.constant 0 : index
    %c0_32 = arith.constant 0 : index
    %c0_33 = arith.constant 0 : index
    %c0_34 = arith.constant 0 : index
    %65 = vector.load %arg2[%c0_31, %c0_32, %c0_33, %c0_34] : memref<1x8x8x32xf32, #tpu.memory_space<vmem>>, vector<1x8x8x32xf32>
    %66 = vector.shape_cast %65 : vector<1x8x8x32xf32> to vector<8x8x32xf32>
    %67 = vector.shape_cast %66 : vector<8x8x32xf32> to vector<64x32xf32>
    %68 = arith.addf %67, %64 : vector<64x32xf32>
    %c0_35 = arith.constant 0 : index
    %c0_36 = arith.constant 0 : index
    %69 = vector.load %arg4[%c0_35, %c0_36] : memref<1x32xf32, #tpu.memory_space<vmem>>, vector<1x32xf32>
    %70 = vector.shape_cast %69 : vector<1x32xf32> to vector<32xf32>
    %71 = vector.shape_cast %70 : vector<32xf32> to vector<1x32xf32>
    %72 = vector.broadcast %71 : vector<1x32xf32> to vector<64x32xf32>
    %73 = arith.addf %68, %72 : vector<64x32xf32>
    %74 = vector.shape_cast %73 : vector<64x32xf32> to vector<1x8x8x32xf32>
    %c0_37 = arith.constant 0 : index
    %c0_38 = arith.constant 0 : index
    %c0_39 = arith.constant 0 : index
    %c0_40 = arith.constant 0 : index
    %75 = vector.load %arg5[%c0_37, %c0_38, %c0_39, %c0_40] : memref<1x8x8x32xf32, #tpu.memory_space<vmem>>, vector<1x8x8x32xf32>
    tpu.vector_store %arg5[%c0_37, %c0_38, %c0_39, %c0_40], %74 {strides = array<i32>} : memref<1x8x8x32xf32, #tpu.memory_space<vmem>>, vector<1x8x8x32xf32>,
    return
  }
  func.func @transform_0(%arg0: i32) -> (i32, i32, i32, i32) {
    %c0_i32 = arith.constant 0 : i32
    %c0_i32_0 = arith.constant 0 : i32
    %c0_i32_1 = arith.constant 0 : i32
    %c0_i32_2 = arith.constant 0 : i32
    return %arg0, %c0_i32, %c0_i32_0, %c0_i32_1 : i32, i32, i32, i32
  }
  func.func @transform_1(%arg0: i32) -> (i32, i32, i32, i32) {
    %c0_i32 = arith.constant 0 : i32
    %c0_i32_0 = arith.constant 0 : i32
    %c0_i32_1 = arith.constant 0 : i32
    %c0_i32_2 = arith.constant 0 : i32
    return %arg0, %c0_i32, %c0_i32_0, %c0_i32_1 : i32, i32, i32, i32
  }
  func.func @transform_2(%arg0: i32) -> (i32, i32, i32) {
    %c0_i32 = arith.constant 0 : i32
    %c0_i32_0 = arith.constant 0 : i32
    %c0_i32_1 = arith.constant 0 : i32
    %c0_i32_2 = arith.constant 0 : i32
    return %c0_i32, %c0_i32_0, %c0_i32_1 : i32, i32, i32
  }
  func.func @transform_3(%arg0: i32) -> (i32, i32) {
    %c0_i32 = arith.constant 0 : i32
    %c0_i32_0 = arith.constant 0 : i32
    %c0_i32_1 = arith.constant 0 : i32
    return %c0_i32, %c0_i32_0 : i32, i32
  }
  func.func @transform_4(%arg0: i32) -> (i32, i32, i32, i32) {
    %c0_i32 = arith.constant 0 : i32
    %c0_i32_0 = arith.constant 0 : i32
    %c0_i32_1 = arith.constant 0 : i32
    %c0_i32_2 = arith.constant 0 : i32
    return %arg0, %c0_i32, %c0_i32_0, %c0_i32_1 : i32, i32, i32, i32
  }
}

</mosaic_0001>

<llo_original>
// kernel: sk_reference_attention.3
$region0: #{sk_reference_attention.3}
  #allocation0 [shape = 'u32[]', space=smem, size = 0x4, offset = 0x4, fixed_abs, tag = 'smem constant byte address 0x4 - core index']
  #allocation1 [shape = 'u32[144,128]{1,0:T(1,128)}', space=vmem, size = 0x12000, scoped, tag = 'internal scratch']
  %s0 = inlined_call_operand.vmem [shape: bf16[16,8,32], index: 0, kind: input, shape index: {}]
  %s1 = inlined_call_operand.vmem [shape: bf16[16,8,32], index: 1, kind: input, shape index: {}]
  %s2 = inlined_call_operand.vmem [shape: f32[16,32], index: 2, kind: input, shape index: {}]
  %s3 = inlined_call_operand.vmem [shape: f32[1,32], index: 3, kind: input, shape index: {}]
  %s4 = inlined_call_operand.vmem [shape: f32[1,32], index: 4, kind: input, shape index: {}]
  %s5 = inlined_call_operand.vmem [shape: bf16[32,32], index: 5, kind: input, shape index: {}]
  %s6 = inlined_call_operand.vmem [shape: bf16[32,64], index: 6, kind: input, shape index: {}]
  %s7 = inlined_call_operand.vmem [shape: bf16[32,32], index: 7, kind: input, shape index: {}]
  %s8 = inlined_call_operand.vmem [shape: f32[1,32], index: 8, kind: input, shape index: {}]
  %s9 = inlined_call_operand.vmem [shape: bf16[16,8,32], index: 9, kind: output, shape index: {}]
  %s10 = sld [smem:[#allocation0]]
  $region69: #{sk_reference_attention.3} parent=0
    _
  %s12 = ssub.s32 1, %s10
  %s13 = scalar_select 0, %s12, %s10
  loop: start=0, step=1, limit=6
  $region2: #{sk_reference_attention.3} parent=0 // loop_pre_header
    _
  $region3: #{sk_reference_attention.3} parent=0 // loop_header
    %s15 = sphi 0, %s19
    %p16 = scmp.ge.s32.totalorder %s15, 6
    %s25 = sphi 0, %s27
    %s28 = sphi 0, %s25
    %s29 = sphi 0, %s28
    %s45 = sphi 0, %s29
    %s51 = sphi 0, %s53
    %s54 = sphi 0, %s51
    %s55 = sphi 0, %s54
    %s71 = sphi 0, %s55
    %s75 = sphi 0, %s75
    %s77 = sphi 0, %s75
    %s78 = sphi 0, %s77
    %s92 = sphi 0, %s78
    %s96 = sphi 0, %s96
    %s98 = sphi 0, %s96
    %s99 = sphi 0, %s98
    %s113 = sphi 0, %s99
    %s117 = sphi 0, %s117
    %s119 = sphi 0, %s117
    %s120 = sphi 0, %s119
    %s134 = sphi 0, %s120
    %s138 = sphi 0, %s138
    %s140 = sphi 0, %s138
    %s141 = sphi 0, %s140
    %s155 = sphi 0, %s141
    %s159 = sphi 0, %s159
    %s161 = sphi 0, %s159
    %s162 = sphi 0, %s161
    %s176 = sphi 0, %s162
    %s180 = sphi 0, %s180
    %s182 = sphi 0, %s180
    %s183 = sphi 0, %s182
    %s197 = sphi 0, %s183
    %s201 = sphi 0, %s201
    %s203 = sphi 0, %s201
    %s204 = sphi 0, %s203
    %s218 = sphi 0, %s204
    %s224 = sphi 0, %s226
    %s227 = sphi 0, %s224
    %s228 = sphi 0, %s227
    %s244 = sphi 0, %s228
  $region4: #{sk_reference_attention.3} parent=0 // loop_header_branch
    %18 = sbr.rel (%p16) target = $region8
  $region5: #{sk_reference_attention.3} parent=0 // loop_body
    %s20 = ssub.s32 %s15, 1
    %s21 = ssub.s32 %s15, 2
    %s22 = sadd.s32 %s15, 1
    %s23 = ssub.s32 %s15, %s22
    %p24 = scmp.eq.s32.totalorder %s23, 0
    %s26 = sadd.s32 %s25, 1
    %s27 = scalar_select %p24, %s25, %s26
    %p30 = pneg %p24
    %p31 = scmp.eq.s32.totalorder %s15, 3
    %p32 = por %p30, %p31
    %p33 = scmp.ne.s32.totalorder %s25, %s28
    %p34 = scmp.eq.s32.totalorder %s15, 0
    %p35 = por %p33, %p34
    %p36 = scmp.ne.s32.totalorder %s25, %s28
    %p37 = scmp.eq.s32.totalorder %s20, 3
    %p38 = por %p36, %p37
    %p39 = scmp.ne.s32.totalorder %s28, %s29
    %p40 = scmp.eq.s32.totalorder %s20, 0
    %p41 = por %p39, %p40
    %p42 = scmp.ne.s32.totalorder %s28, %s29
    %p43 = scmp.eq.s32.totalorder %s21, 3
    %p44 = por %p42, %p43
    %p46 = scmp.ne.s32.totalorder %s29, %s45
    %p47 = scmp.eq.s32.totalorder %s21, 0
    %p48 = por %p46, %p47
    %s49 = ssub.s32 %s15, %s22
    %p50 = scmp.eq.s32.totalorder %s49, 0
    %s52 = sadd.s32 %s51, 1
    %s53 = scalar_select %p50, %s51, %s52
    %p56 = pneg %p50
    %p57 = scmp.eq.s32.totalorder %s15, 3
    %p58 = por %p56, %p57
    %p59 = scmp.ne.s32.totalorder %s51, %s54
    %p60 = scmp.eq.s32.totalorder %s15, 0
    %p61 = por %p59, %p60
    %p62 = scmp.ne.s32.totalorder %s51, %s54
    %p63 = scmp.eq.s32.totalorder %s20, 3
    %p64 = por %p62, %p63
    %p65 = scmp.ne.s32.totalorder %s54, %s55
    %p66 = scmp.eq.s32.totalorder %s20, 0
    %p67 = por %p65, %p66
    %p68 = scmp.ne.s32.totalorder %s54, %s55
    %p69 = scmp.eq.s32.totalorder %s21, 3
    %p70 = por %p68, %p69
    %p72 = scmp.ne.s32.totalorder %s55, %s71
    %p73 = scmp.eq.s32.totalorder %s21, 0
    %p74 = por %p72, %p73
    %s76 = sadd.s32 %s75, 1
    %p79 = scmp.eq.s32.totalorder %s15, 3
    %p80 = scmp.ne.s32.totalorder %s75, %s77
    %p81 = scmp.eq.s32.totalorder %s15, 0
    %p82 = por %p80, %p81
    %p83 = scmp.ne.s32.totalorder %s75, %s77
    %p84 = scmp.eq.s32.totalorder %s20, 3
    %p85 = por %p83, %p84
    %p86 = scmp.ne.s32.totalorder %s77, %s78
    %p87 = scmp.eq.s32.totalorder %s20, 0
    %p88 = por %p86, %p87
    %p89 = scmp.ne.s32.totalorder %s77, %s78
    %p90 = scmp.eq.s32.totalorder %s21, 3
    %p91 = por %p89, %p90
    %p93 = scmp.ne.s32.totalorder %s78, %s92
    %p94 = scmp.eq.s32.totalorder %s21, 0
    %p95 = por %p93, %p94
    %s97 = sadd.s32 %s96, 1
    %p100 = scmp.eq.s32.totalorder %s15, 3
    %p101 = scmp.ne.s32.totalorder %s96, %s98
    %p102 = scmp.eq.s32.totalorder %s15, 0
    %p103 = por %p101, %p102
    %p104 = scmp.ne.s32.totalorder %s96, %s98
    %p105 = scmp.eq.s32.totalorder %s20, 3
    %p106 = por %p104, %p105
    %p107 = scmp.ne.s32.totalorder %s98, %s99
    %p108 = scmp.eq.s32.totalorder %s20, 0
    %p109 = por %p107, %p108
    %p110 = scmp.ne.s32.totalorder %s98, %s99
    %p111 = scmp.eq.s32.totalorder %s21, 3
    %p112 = por %p110, %p111
    %p114 = scmp.ne.s32.totalorder %s99, %s113
    %p115 = scmp.eq.s32.totalorder %s21, 0
    %p116 = por %p114, %p115
    %s118 = sadd.s32 %s117, 1
    %p121 = scmp.eq.s32.totalorder %s15, 3
    %p122 = scmp.ne.s32.totalorder %s117, %s119
    %p123 = scmp.eq.s32.totalorder %s15, 0
    %p124 = por %p122, %p123
    %p125 = scmp.ne.s32.totalorder %s117, %s119
    %p126 = scmp.eq.s32.totalorder %s20, 3
    %p127 = por %p125, %p126
    %p128 = scmp.ne.s32.totalorder %s119, %s120
    %p129 = scmp.eq.s32.totalorder %s20, 0
    %p130 = por %p128, %p129
    %p131 = scmp.ne.s32.totalorder %s119, %s120
    %p132 = scmp.eq.s32.totalorder %s21, 3
    %p133 = por %p131, %p132
    %p135 = scmp.ne.s32.totalorder %s120, %s134
    %p136 = scmp.eq.s32.totalorder %s21, 0
    %p137 = por %p135, %p136
    %s139 = sadd.s32 %s138, 1
    %p142 = scmp.eq.s32.totalorder %s15, 3
    %p143 = scmp.ne.s32.totalorder %s138, %s140
    %p144 = scmp.eq.s32.totalorder %s15, 0
    %p145 = por %p143, %p144
    %p146 = scmp.ne.s32.totalorder %s138, %s140
    %p147 = scmp.eq.s32.totalorder %s20, 3
    %p148 = por %p146, %p147
    %p149 = scmp.ne.s32.totalorder %s140, %s141
    %p150 = scmp.eq.s32.totalorder %s20, 0
    %p151 = por %p149, %p150
    %p152 = scmp.ne.s32.totalorder %s140, %s141
    %p153 = scmp.eq.s32.totalorder %s21, 3
    %p154 = por %p152, %p153
    %p156 = scmp.ne.s32.totalorder %s141, %s155
    %p157 = scmp.eq.s32.totalorder %s21, 0
    %p158 = por %p156, %p157
    %s160 = sadd.s32 %s159, 1
    %p163 = scmp.eq.s32.totalorder %s15, 3
    %p164 = scmp.ne.s32.totalorder %s159, %s161
    %p165 = scmp.eq.s32.totalorder %s15, 0
    %p166 = por %p164, %p165
    %p167 = scmp.ne.s32.totalorder %s159, %s161
    %p168 = scmp.eq.s32.totalorder %s20, 3
    %p169 = por %p167, %p168
    %p170 = scmp.ne.s32.totalorder %s161, %s162
    %p171 = scmp.eq.s32.totalorder %s20, 0
    %p172 = por %p170, %p171
    %p173 = scmp.ne.s32.totalorder %s161, %s162
    %p174 = scmp.eq.s32.totalorder %s21, 3
    %p175 = por %p173, %p174
    %p177 = scmp.ne.s32.totalorder %s162, %s176
    %p178 = scmp.eq.s32.totalorder %s21, 0
    %p179 = por %p177, %p178
    %s181 = sadd.s32 %s180, 1
    %p184 = scmp.eq.s32.totalorder %s15, 3
    %p185 = scmp.ne.s32.totalorder %s180, %s182
    %p186 = scmp.eq.s32.totalorder %s15, 0
    %p187 = por %p185, %p186
    %p188 = scmp.ne.s32.totalorder %s180, %s182
    %p189 = scmp.eq.s32.totalorder %s20, 3
    %p190 = por %p188, %p189
    %p191 = scmp.ne.s32.totalorder %s182, %s183
    %p192 = scmp.eq.s32.totalorder %s20, 0
    %p193 = por %p191, %p192
    %p194 = scmp.ne.s32.totalorder %s182, %s183
    %p195 = scmp.eq.s32.totalorder %s21, 3
    %p196 = por %p194, %p195
    %p198 = scmp.ne.s32.totalorder %s183, %s197
    %p199 = scmp.eq.s32.totalorder %s21, 0
    %p200 = por %p198, %p199
    %s202 = sadd.s32 %s201, 1
    %p205 = scmp.eq.s32.totalorder %s15, 3
    %p206 = scmp.ne.s32.totalorder %s201, %s203
    %p207 = scmp.eq.s32.totalorder %s15, 0
    %p208 = por %p206, %p207
    %p209 = scmp.ne.s32.totalorder %s201, %s203
    %p210 = scmp.eq.s32.totalorder %s20, 3
    %p211 = por %p209, %p210
    %p212 = scmp.ne.s32.totalorder %s203, %s204
    %p213 = scmp.eq.s32.totalorder %s20, 0
    %p214 = por %p212, %p213
    %p215 = scmp.ne.s32.totalorder %s203, %s204
    %p216 = scmp.eq.s32.totalorder %s21, 3
    %p217 = por %p215, %p216
    %p219 = scmp.ne.s32.totalorder %s204, %s218
    %p220 = scmp.eq.s32.totalorder %s21, 0
    %p221 = por %p219, %p220
    %s222 = ssub.s32 %s15, %s22
    %p223 = scmp.eq.s32.totalorder %s222, 0
    %s225 = sadd.s32 %s224, 1
    %s226 = scalar_select %p223, %s224, %s225
    %p229 = pneg %p223
    %p230 = scmp.eq.s32.totalorder %s15, 3
    %p231 = por %p229, %p230
    %p232 = scmp.ne.s32.totalorder %s224, %s227
    %p233 = scmp.eq.s32.totalorder %s15, 0
    %p234 = por %p232, %p233
    %p235 = scmp.ne.s32.totalorder %s224, %s227
    %p236 = scmp.eq.s32.totalorder %s20, 3
    %p237 = por %p235, %p236
    %p238 = scmp.ne.s32.totalorder %s227, %s228
    %p239 = scmp.eq.s32.totalorder %s20, 0
    %p240 = por %p238, %p239
    %p241 = scmp.ne.s32.totalorder %s227, %s228
    %p242 = scmp.eq.s32.totalorder %s21, 3
    %p243 = por %p241, %p242
    %p245 = scmp.ne.s32.totalorder %s228, %s244
    %p246 = scmp.eq.s32.totalorder %s21, 0
    %p247 = por %p245, %p246
    %p248 = scmp.le.s32.totalorder 1, %s15
    %p249 = scmp.lt.s32.totalorder %s15, 5
    %p250 = pnand %p248, %p249
    %p251 = pneg %p250
    // Predicated region
    $region9: #{sk_reference_attention.3} parent=5 // pred_check
      _
    $region10: #{sk_reference_attention.3} parent=5 // pred_check_branch
      %253 = sbr.rel (%p250) target = $region12
    $region11: #{sk_reference_attention.3} parent=5 // pred_region
      %s254 = ssub.s32 %s15, 1
      // Predicated region
      $region13: #{sk_reference_attention.3} parent=11 // pred_check
        %p255 = pneg %p88
      $region14: #{sk_reference_attention.3} parent=11 // pred_check_branch
        %257 = sbr.rel (%p255) target = $region16
      $region15: #{sk_reference_attention.3} parent=11 // pred_region
        _
      $region16: #{sk_reference_attention.3} parent=11 // pred_fallthru
        _
      // Predicated region
      $region17: #{sk_reference_attention.3} parent=11 // pred_check
        %p258 = pneg %p109
      $region18: #{sk_reference_attention.3} parent=11 // pred_check_branch
        %260 = sbr.rel (%p258) target = $region20
      $region19: #{sk_reference_attention.3} parent=11 // pred_region
        _
      $region20: #{sk_reference_attention.3} parent=11 // pred_fallthru
        _
      // Predicated region
      $region21: #{sk_reference_attention.3} parent=11 // pred_check
        %p261 = pneg %p130
      $region22: #{sk_reference_attention.3} parent=11 // pred_check_branch
        %263 = sbr.rel (%p261) target = $region24
      $region23: #{sk_reference_attention.3} parent=11 // pred_region
        _
      $region24: #{sk_reference_attention.3} parent=11 // pred_fallthru
        _
      // Predicated region
      $region25: #{sk_reference_attention.3} parent=11 // pred_check
        %p264 = pneg %p151
      $region26: #{sk_reference_attention.3} parent=11 // pred_check_branch
        %266 = sbr.rel (%p264) target = $region28
      $region27: #{sk_reference_attention.3} parent=11 // pred_region
        _
      $region28: #{sk_reference_attention.3} parent=11 // pred_fallthru
        _
      // Predicated region
      $region29: #{sk_reference_attention.3} parent=11 // pred_check
        %p267 = pneg %p172
      $region30: #{sk_reference_attention.3} parent=11 // pred_check_branch
        %269 = sbr.rel (%p267) target = $region32
      $region31: #{sk_reference_attention.3} parent=11 // pred_region
        _
      $region32: #{sk_reference_attention.3} parent=11 // pred_fallthru
        _
      // Predicated region
      $region33: #{sk_reference_attention.3} parent=11 // pred_check
        %p270 = pneg %p193
      $region34: #{sk_reference_attention.3} parent=11 // pred_check_branch
        %272 = sbr.rel (%p270) target = $region36
      $region35: #{sk_reference_attention.3} parent=11 // pred_region
        _
      $region36: #{sk_reference_attention.3} parent=11 // pred_fallthru
        _
      // Predicated region
      $region37: #{sk_reference_attention.3} parent=11 // pred_check
        %p273 = pneg %p214
      $region38: #{sk_reference_attention.3} parent=11 // pred_check_branch
        %275 = sbr.rel (%p273) target = $region40
      $region39: #{sk_reference_attention.3} parent=11 // pred_region
        _
      $region40: #{sk_reference_attention.3} parent=11 // pred_fallthru
        _
    $region12: #{sk_reference_attention.3} parent=5 // pred_fallthru
      _
    %p276 = scmp.lt.s32.totalorder %s15, 4
    // Predicated region
    $region41: #{sk_reference_attention.3} parent=5 // pred_check
      %p277 = pneg %p276
    $region42: #{sk_reference_attention.3} parent=5 // pred_check_branch
      %279 = sbr.rel (%p277) target = $region44
    $region43: #{sk_reference_attention.3} parent=5 // pred_region
      // Predicated region
      $region45: #{sk_reference_attention.3} parent=43 // pred_check
        %p280 = pneg %p35
      $region46: #{sk_reference_attention.3} parent=43 // pred_check_branch
        %282 = sbr.rel (%p280) target = $region48
      $region47: #{sk_reference_attention.3} parent=43 // pred_region
        %s283 = smul.u32 4, %s15
        %p284 = scmp.lt.s32.totalorder %s283, 15
        %s285 = scalar_select %p284, %s283, 15
        %s286 = smul.addr %s285, 4
        %s287 = scalar_lea.vmem %s0, %s286
        %s288 = smul.u32 4, %s15
      $region48: #{sk_reference_attention.3} parent=43 // pred_fallthru
        _
      // Predicated region
      $region49: #{sk_reference_attention.3} parent=43 // pred_check
        %p289 = pneg %p61
      $region50: #{sk_reference_attention.3} parent=43 // pred_check_branch
        %291 = sbr.rel (%p289) target = $region52
      $region51: #{sk_reference_attention.3} parent=43 // pred_region
        %s292 = smul.u32 4, %s15
        %p293 = scmp.lt.s32.totalorder %s292, 15
        %s294 = scalar_select %p293, %s292, 15
        %s295 = smul.addr %s294, 4
        %s296 = scalar_lea.vmem %s1, %s295
        %s297 = smul.u32 4, %s15
      $region52: #{sk_reference_attention.3} parent=43 // pred_fallthru
        _
    $region44: #{sk_reference_attention.3} parent=5 // pred_fallthru
      _
    %p298 = scmp.le.s32.totalorder 1, %s15
    %p299 = scmp.lt.s32.totalorder %s15, 5
    %p300 = pnand %p298, %p299
    %p301 = pneg %p300
    // Predicated region
    $region53: #{sk_reference_attention.3} parent=5 // pred_check
      _
    $region54: #{sk_reference_attention.3} parent=5 // pred_check_branch
      %303 = sbr.rel (%p300) target = $region56
    $region55: #{sk_reference_attention.3} parent=5 // pred_region
      %s304 = ssub.s32 %s15, 1
      %s305 = smul.u32 4, %s20
      %p306 = scmp.lt.s32.totalorder %s305, 15
      %s307 = scalar_select %p306, %s305, 15
      %s308 = smul.addr %s307, 4
      %s309 = scalar_lea.vmem %s0, %s308
      %p310 = pneg %p41
      %p311 = pneg %p38
      %s312 = smul.u32 4, %s20
      %p313 = scmp.lt.s32.totalorder %s312, 15
      %s314 = scalar_select %p313, %s312, 15
      %s315 = smul.addr %s314, 4
      %s316 = scalar_lea.vmem %s1, %s315
      %p317 = pneg %p67
      %p318 = pneg %p64
      %p319 = pneg %p88
      %p320 = pneg %p85
      %p321 = pneg %p109
      %p322 = pneg %p106
      %p323 = pneg %p130
      %p324 = pneg %p127
      %p325 = pneg %p151
      %p326 = pneg %p148
      %p327 = pneg %p172
      %p328 = pneg %p169
      %p329 = pneg %p193
      %p330 = pneg %p190
      %p331 = pneg %p214
      %p332 = pneg %p211
      %p333 = pneg %p240
      %p334 = pneg %p237
      %s335 = smul.u32 4, %s20
      %p336 = scmp.lt.s32.totalorder %s335, 15
      %s337 = scalar_select %p336, %s335, 15
      %s338 = smul.addr %s337, 4
      %s339 = scalar_lea.vmem %s9, %s338
      %s340 = smul.u32 4, %s20
      %p341 = scmp.lt.s32.totalorder %s340, 15
      %s342 = scalar_select %p341, %s340, 15
      %s343 = smul.addr %s342, 4
      %s344 = scalar_lea.vmem %s0, %s343
      %s345 = smul.u32 4, %s20
      %s346 = smul.u32 4, %s20
      %p347 = scmp.lt.s32.totalorder %s346, 15
      %s348 = scalar_select %p347, %s346, 15
      %s349 = smul.addr %s348, 4
      %s350 = scalar_lea.vmem %s1, %s349
      %s351 = smul.u32 4, %s20
      %s352 = smul.u32 4, %s20
      %p353 = scmp.lt.s32.totalorder %s352, 15
      %s354 = scalar_select %p353, %s352, 15
      %s355 = smul.addr %s354, 4
      %s356 = scalar_lea.vmem %s9, %s355
      %s357 = smul.u32 4, %s20
      %v359 = vld [vmem:[%s344] sm:$0xf]
      %v360 = vld [vmem:[%s344 + $0x4] sm:$0xf]
      %v361 = vld [vmem:[%s344 + $0x8] sm:$0xf]
      %v362 = vld [vmem:[%s344 + $0xc] sm:$0xf]
      %v363 = vunpack.c.l.bf16 %v359
      %v364 = vunpack.c.l.bf16 %v360
      %v365 = vunpack.c.l.bf16 %v361
      %v366 = vunpack.c.l.bf16 %v362
      %v367 = vld [vmem:[%s2] sm:$0xff]
      %v368 = vadd.f32 %v363, %v367
      %v369 = vadd.f32 %v364, %v367
      %v370 = vadd.f32 %v365, %v367
      %v371 = vadd.f32 %v366, %v367
      %v372 = vld [vmem:[%s350] sm:$0xf]
      %v373 = vld [vmem:[%s350 + $0x4] sm:$0xf]
      %v374 = vld [vmem:[%s350 + $0x8] sm:$0xf]
      %v375 = vld [vmem:[%s350 + $0xc] sm:$0xf]
      %v376 = vunpack.c.l.bf16 %v372
      %v377 = vunpack.c.l.bf16 %v373
      %v378 = vunpack.c.l.bf16 %v374
      %v379 = vunpack.c.l.bf16 %v375
      %v380 = vld [vmem:[%s2 + $0x8] sm:$0xff]
      %v381 = vadd.f32 %v376, %v380
      %v382 = vadd.f32 %v377, %v380
      %v383 = vadd.f32 %v378, %v380
      %v384 = vadd.f32 %v379, %v380
      %vm385 = vcmask 261120
      %v386 = vsel %vm385, %v368, 0.0
      %387 = vadd.xlane.f32.xlu0 %v386
      %v388 = vpop.xlane.xlu0 %387
      %v389 = vsel %vm385, %v369, 0.0
      %390 = vadd.xlane.f32.xlu0 %v389
      %v391 = vpop.xlane.xlu0 %390
      %v392 = vsel %vm385, %v370, 0.0
      %393 = vadd.xlane.f32.xlu0 %v392
      %v394 = vpop.xlane.xlu0 %393
      %v395 = vsel %vm385, %v371, 0.0
      %396 = vadd.xlane.f32.xlu0 %v395
      %v397 = vpop.xlane.xlu0 %396
      %v398 = vrcp.pop 32.0
      %v399 = vmul.f32 %v388, %v398
      %v400 = vmul.f32 %v391, %v398
      %v401 = vmul.f32 %v394, %v398
      %v402 = vmul.f32 %v397, %v398
      %v403 = vsub.f32 %v368, %v399
      %v404 = vsub.f32 %v369, %v400
      %v405 = vsub.f32 %v370, %v401
      %v406 = vsub.f32 %v371, %v402
      %v407 = vmul.f32 %v403, %v403
      %v408 = vmul.f32 %v404, %v404
      %v409 = vmul.f32 %v405, %v405
      %v410 = vmul.f32 %v406, %v406
      %v411 = vsel %vm385, %v407, 0.0
      %412 = vadd.xlane.f32.xlu0 %v411
      %v413 = vpop.xlane.xlu0 %412
      %v414 = vsel %vm385, %v408, 0.0
      %415 = vadd.xlane.f32.xlu0 %v414
      %v416 = vpop.xlane.xlu0 %415
      %v417 = vsel %vm385, %v409, 0.0
      %418 = vadd.xlane.f32.xlu0 %v417
      %v419 = vpop.xlane.xlu0 %418
      %v420 = vsel %vm385, %v410, 0.0
      %421 = vadd.xlane.f32.xlu0 %v420
      %v422 = vpop.xlane.xlu0 %421
      %v423 = vmul.f32 %v413, %v398
      %v424 = vmul.f32 %v416, %v398
      %v425 = vmul.f32 %v419, %v398
      %v426 = vmul.f32 %v422, %v398
      %v427 = vadd.f32 %v423, 1e-05
      %v428 = vadd.f32 %v424, 1e-05
      %v429 = vadd.f32 %v425, 1e-05
      %v430 = vadd.f32 %v426, 1e-05
      %v431 = vrsqrt.pop %v427
      %v432 = vrsqrt.pop %v428
      %v433 = vrsqrt.pop %v429
      %v434 = vrsqrt.pop %v430
      %v435 = vmul.f32 %v403, %v431
      %v436 = vmul.f32 %v404, %v432
      %v437 = vmul.f32 %v405, %v433
      %v438 = vmul.f32 %v406, %v434
      %v439 = vld [vmem:[%s3] sm:$0x1]
      %v441 = vlaneseq
      %v442 = vshrl.u32 %v441, 7
      %v443 = vsub.s32 0, %v442
      %v444 = vrot.slane %v439, %v443
      %v446 = vmul.f32 %v435, %v444
      %v447 = vmul.f32 %v436, %v444
      %v448 = vmul.f32 %v437, %v444
      %v449 = vmul.f32 %v438, %v444
      %v450 = vld [vmem:[%s4] sm:$0x1]
      %v452 = vlaneseq
      %v453 = vshrl.u32 %v452, 7
      %v454 = vsub.s32 0, %v453
      %v455 = vrot.slane %v450, %v454
      %v457 = vadd.f32 %v446, %v455
      %v458 = vadd.f32 %v447, %v455
      %v459 = vadd.f32 %v448, %v455
      %v460 = vadd.f32 %v449, %v455
      %v461 = vsel %vm385, %v381, 0.0
      %462 = vadd.xlane.f32.xlu0 %v461
      %v463 = vpop.xlane.xlu0 %462
      %v464 = vsel %vm385, %v382, 0.0
      %465 = vadd.xlane.f32.xlu0 %v464
      %v466 = vpop.xlane.xlu0 %465
      %v467 = vsel %vm385, %v383, 0.0
      %468 = vadd.xlane.f32.xlu0 %v467
      %v469 = vpop.xlane.xlu0 %468
      %v470 = vsel %vm385, %v384, 0.0
      %471 = vadd.xlane.f32.xlu0 %v470
      %v472 = vpop.xlane.xlu0 %471
      %v473 = vmul.f32 %v463, %v398
      %v474 = vmul.f32 %v466, %v398
      %v475 = vmul.f32 %v469, %v398
      %v476 = vmul.f32 %v472, %v398
      %v477 = vsub.f32 %v381, %v473
      %v478 = vsub.f32 %v382, %v474
      %v479 = vsub.f32 %v383, %v475
      %v480 = vsub.f32 %v384, %v476
      %v481 = vmul.f32 %v477, %v477
      %v482 = vmul.f32 %v478, %v478
      %v483 = vmul.f32 %v479, %v479
      %v484 = vmul.f32 %v480, %v480
      %v485 = vsel %vm385, %v481, 0.0
      %486 = vadd.xlane.f32.xlu0 %v485
      %v487 = vpop.xlane.xlu0 %486
      %v488 = vsel %vm385, %v482, 0.0
      %489 = vadd.xlane.f32.xlu0 %v488
      %v490 = vpop.xlane.xlu0 %489
      %v491 = vsel %vm385, %v483, 0.0
      %492 = vadd.xlane.f32.xlu0 %v491
      %v493 = vpop.xlane.xlu0 %492
      %v494 = vsel %vm385, %v484, 0.0
      %495 = vadd.xlane.f32.xlu0 %v494
      %v496 = vpop.xlane.xlu0 %495
      %v497 = vmul.f32 %v487, %v398
      %v498 = vmul.f32 %v490, %v398
      %v499 = vmul.f32 %v493, %v398
      %v500 = vmul.f32 %v496, %v398
      %v501 = vadd.f32 %v497, 1e-05
      %v502 = vadd.f32 %v498, 1e-05
      %v503 = vadd.f32 %v499, 1e-05
      %v504 = vadd.f32 %v500, 1e-05
      %v505 = vrsqrt.pop %v501
      %v506 = vrsqrt.pop %v502
      %v507 = vrsqrt.pop %v503
      %v508 = vrsqrt.pop %v504
      %v509 = vmul.f32 %v477, %v505
      %v510 = vmul.f32 %v478, %v506
      %v511 = vmul.f32 %v479, %v507
      %v512 = vmul.f32 %v480, %v508
      %v513 = vmul.f32 %v509, %v444
      %v514 = vmul.f32 %v510, %v444
      %v515 = vmul.f32 %v511, %v444
      %v516 = vmul.f32 %v512, %v444
      %v517 = vadd.f32 %v513, %v455
      %v518 = vadd.f32 %v514, %v455
      %v519 = vadd.f32 %v515, %v455
      %v520 = vadd.f32 %v516, %v455
      %v521 = vpack.c.bf16 %v458, %v457
      %v522 = vpack.c.bf16 %v460, %v459
      %v523 = vld [vmem:[%s5] sm:$0xf]
      %v524 = vld [vmem:[%s5 + $0x4] sm:$0xf]
      %v525 = vld [vmem:[%s5 + $0x8] sm:$0xf]
      %v526 = vld [vmem:[%s5 + $0xc] sm:$0xf]
      %v531 = vunpack.c.l.b16 %v523
      %v532 = vunpack.c.l.b16 %v524
      %v533 = vunpack.c.l.b16 %v525
      %v534 = vunpack.c.l.b16 %v526
      %v535 = vpack.c.b16 %v532, %v531
      %v536 = vpack.c.b16 %v534, %v533
      %v540 = vsel %vm385, %v521, 0
      %v543 = vsel %vm385, %v522, 0
      %545 = vmatprep.subr.bf16.mxu0 0
      %546 = vmatpush1.bf16.msra.mxu0 %v535
      %547 = vmatprep.subr.bf16.mxu0 0
      %548 = vmatpush1.bf16.msra.mxu0 %v536
      %549 = vmatprep.subr.bf16.mxu0 0
      %550 = vmatpush1.bf16.msra.mxu0 0
      %551 = vmatprep.subr.bf16.mxu0 0
      %552 = vmatpush1.bf16.msra.mxu0 0
      %553 = vmatprep.subr.bf16.mxu0 0
      %554 = vmatpush1.bf16.msra.mxu0 0
      %555 = vmatprep.subr.bf16.mxu0 0
      %556 = vmatpush1.bf16.msra.mxu0 0
      %557 = vmatprep.subr.bf16.mxu0 0
      %558 = vmatpush1.bf16.msra.mxu0 0
      %559 = vmatprep.subr.bf16.mxu0 0
      %560 = vmatpush1.bf16.msra.mxu0 0
      %561 = vmatprep.subr.bf16.mxu0 0
      %562 = vmatpush1.bf16.msra.mxu0 0
      %563 = vmatprep.subr.bf16.mxu0 0
      %564 = vmatpush1.bf16.msra.mxu0 0
      %565 = vmatprep.subr.bf16.mxu0 0
      %566 = vmatpush1.bf16.msra.mxu0 0
      %567 = vmatprep.subr.bf16.mxu0 0
      %568 = vmatpush1.bf16.msra.mxu0 0
      %569 = vmatprep.subr.bf16.mxu0 0
      %570 = vmatpush1.bf16.msra.mxu0 0
      %571 = vmatprep.subr.bf16.mxu0 0
      %572 = vmatpush1.bf16.msra.mxu0 0
      %573 = vmatprep.subr.bf16.mxu0 0
      %574 = vmatpush1.bf16.msra.mxu0 0
      %575 = vmatprep.subr.bf16.mxu0 0
      %576 = vmatpush1.bf16.msra.mxu0 0
      %577 = vmatprep.mubr.bf16.mxu0 0
      %578 = vmatmul.mubr.bf16.gmra.mrb[0].mxu0 %v540
      %v579 = vpop.f32.mrb[0].mxu0
      %v580 = vadd.f32 0.0, %v579
      %v581 = vpop.f32.mrb[0].mxu0
      %v582 = vpop.f32.mrb[0].mxu0
      %v583 = vadd.f32 0.0, %v582
      %v584 = vpop.f32.mrb[0].mxu0
      %585 = vmatprep.mubr.bf16.mxu0 0
      %586 = vmatmul.mubr.bf16.gmra.mrb[0].mxu0 %v543
      %v587 = vpop.f32.mrb[0].mxu0
      %v588 = vadd.f32 0.0, %v587
      %v589 = vpop.f32.mrb[0].mxu0
      %v590 = vpop.f32.mrb[0].mxu0
      %v591 = vadd.f32 0.0, %v590
      %v592 = vpop.f32.mrb[0].mxu0
      %593 = vdwg.mxu0
      %v594 = vpack.c.bf16 %v583, %v580
      %v595 = vpack.c.bf16 %v591, %v588
      %v598 = vunpack.c.l.b16 %v594
      %v599 = vunpack.c.h.b16 %v594
      %v600 = vunpack.c.l.b16 %v595
      %v601 = vunpack.c.h.b16 %v595
      %v602 = vpack.c.b16 %v598, %v598
      %v603 = vpack.c.b16 %v599, %v599
      %v604 = vpack.c.b16 %v600, %v600
      %v605 = vpack.c.b16 %v601, %v601
      %v606 = vpack.c.bf16 %v517, %v457
      %v607 = vpack.c.bf16 %v518, %v458
      %v608 = vpack.c.bf16 %v519, %v459
      %v609 = vpack.c.bf16 %v520, %v460
      %v610 = vld [vmem:[%s6] sm:$0xf]
      %v611 = vld [vmem:[%s6 + $0x4] sm:$0xf]
      %v612 = vld [vmem:[%s6 + $0x8] sm:$0xf]
      %v613 = vld [vmem:[%s6 + $0xc] sm:$0xf]
      %v618 = vunpack.c.l.b16 %v610
      %v619 = vunpack.c.l.b16 %v611
      %v620 = vunpack.c.l.b16 %v612
      %v621 = vunpack.c.l.b16 %v613
      %v622 = vpack.c.b16 %v619, %v618
      %v623 = vpack.c.b16 %v621, %v620
      %v627 = vsel %vm385, %v606, 0
      %v630 = vsel %vm385, %v607, 0
      %v633 = vsel %vm385, %v608, 0
      %v636 = vsel %vm385, %v609, 0
      %638 = vmatprep.subr.bf16.mxu0 0
      %639 = vmatpush1.bf16.msra.mxu0 %v622
      %640 = vmatprep.subr.bf16.mxu0 0
      %641 = vmatpush1.bf16.msra.mxu0 %v623
      %642 = vmatprep.subr.bf16.mxu0 0
      %643 = vmatpush1.bf16.msra.mxu0 0
      %644 = vmatprep.subr.bf16.mxu0 0
      %645 = vmatpush1.bf16.msra.mxu0 0
      %646 = vmatprep.subr.bf16.mxu0 0
      %647 = vmatpush1.bf16.msra.mxu0 0
      %648 = vmatprep.subr.bf16.mxu0 0
      %649 = vmatpush1.bf16.msra.mxu0 0
      %650 = vmatprep.subr.bf16.mxu0 0
      %651 = vmatpush1.bf16.msra.mxu0 0
      %652 = vmatprep.subr.bf16.mxu0 0
      %653 = vmatpush1.bf16.msra.mxu0 0
      %654 = vmatprep.subr.bf16.mxu0 0
      %655 = vmatpush1.bf16.msra.mxu0 0
      %656 = vmatprep.subr.bf16.mxu0 0
      %657 = vmatpush1.bf16.msra.mxu0 0
      %658 = vmatprep.subr.bf16.mxu0 0
      %659 = vmatpush1.bf16.msra.mxu0 0
      %660 = vmatprep.subr.bf16.mxu0 0
      %661 = vmatpush1.bf16.msra.mxu0 0
      %662 = vmatprep.subr.bf16.mxu0 0
      %663 = vmatpush1.bf16.msra.mxu0 0
      %664 = vmatprep.subr.bf16.mxu0 0
      %665 = vmatpush1.bf16.msra.mxu0 0
      %666 = vmatprep.subr.bf16.mxu0 0
      %667 = vmatpush1.bf16.msra.mxu0 0
      %668 = vmatprep.subr.bf16.mxu0 0
      %669 = vmatpush1.bf16.msra.mxu0 0
      %670 = vmatprep.mubr.bf16.mxu0 0
      %671 = vmatmul.mubr.bf16.gmra.mrb[0].mxu0 %v627
      %v672 = vpop.f32.mrb[0].mxu0
      %v673 = vadd.f32 0.0, %v672
      %v674 = vpop.f32.mrb[0].mxu0
      %v675 = vpop.f32.mrb[0].mxu0
      %v676 = vadd.f32 0.0, %v675
      %v677 = vpop.f32.mrb[0].mxu0
      %678 = vmatprep.mubr.bf16.mxu0 0
      %679 = vmatmul.mubr.bf16.gmra.mrb[0].mxu0 %v630
      %v680 = vpop.f32.mrb[0].mxu0
      %v681 = vadd.f32 0.0, %v680
      %v682 = vpop.f32.mrb[0].mxu0
      %v683 = vpop.f32.mrb[0].mxu0
      %v684 = vadd.f32 0.0, %v683
      %v685 = vpop.f32.mrb[0].mxu0
      %686 = vmatprep.mubr.bf16.mxu0 0
      %687 = vmatmul.mubr.bf16.gmra.mrb[0].mxu0 %v633
      %v688 = vpop.f32.mrb[0].mxu0
      %v689 = vadd.f32 0.0, %v688
      %v690 = vpop.f32.mrb[0].mxu0
      %v691 = vpop.f32.mrb[0].mxu0
      %v692 = vadd.f32 0.0, %v691
      %v693 = vpop.f32.mrb[0].mxu0
      %694 = vmatprep.mubr.bf16.mxu0 0
      %695 = vmatmul.mubr.bf16.gmra.mrb[0].mxu0 %v636
      %v696 = vpop.f32.mrb[0].mxu0
      %v697 = vadd.f32 0.0, %v696
      %v698 = vpop.f32.mrb[0].mxu0
      %v699 = vpop.f32.mrb[0].mxu0
      %v700 = vadd.f32 0.0, %v699
      %v701 = vpop.f32.mrb[0].mxu0
      %702 = vdwg.mxu0
      %v703 = vpack.c.bf16 %v676, %v673
      %v704 = vpack.c.bf16 %v684, %v681
      %v705 = vpack.c.bf16 %v692, %v689
      %v706 = vpack.c.bf16 %v700, %v697
      %v708 = vsel %vm385, %v602, 0
      %v711 = vsel %vm385, %v703, 0
      %713 = vmatprep.subr.bf16.mxu0 0
      %714 = vmatpush1.bf16.xpose.msra.mxu0 %v711
      %715 = vmatprep.subr.bf16.mxu0 0
      %716 = vmatpush1.bf16.xpose.msra.mxu0 0
      %717 = vmatprep.subr.bf16.mxu0 0
      %718 = vmatpush1.bf16.xpose.msra.mxu0 0
      %719 = vmatprep.subr.bf16.mxu0 0
      %720 = vmatpush1.bf16.xpose.msra.mxu0 0
      %721 = vmatprep.subr.bf16.mxu0 0
      %722 = vmatpush1.bf16.xpose.msra.mxu0 0
      %723 = vmatprep.subr.bf16.mxu0 0
      %724 = vmatpush1.bf16.xpose.msra.mxu0 0
      %725 = vmatprep.subr.bf16.mxu0 0
      %726 = vmatpush1.bf16.xpose.msra.mxu0 0
      %727 = vmatprep.subr.bf16.mxu0 0
      %728 = vmatpush1.bf16.xpose.msra.mxu0 0
      %729 = vmatprep.subr.bf16.mxu0 0
      %730 = vmatpush1.bf16.xpose.msra.mxu0 0
      %731 = vmatprep.subr.bf16.mxu0 0
      %732 = vmatpush1.bf16.xpose.msra.mxu0 0
      %733 = vmatprep.subr.bf16.mxu0 0
      %734 = vmatpush1.bf16.xpose.msra.mxu0 0
      %735 = vmatprep.subr.bf16.mxu0 0
      %736 = vmatpush1.bf16.xpose.msra.mxu0 0
      %737 = vmatprep.subr.bf16.mxu0 0
      %738 = vmatpush1.bf16.xpose.msra.mxu0 0
      %739 = vmatprep.subr.bf16.mxu0 0
      %740 = vmatpush1.bf16.xpose.msra.mxu0 0
      %741 = vmatprep.subr.bf16.mxu0 0
      %742 = vmatpush1.bf16.xpose.msra.mxu0 0
      %743 = vmatprep.subr.bf16.mxu0 0
      %744 = vmatpush1.bf16.xpose.msra.mxu0 0
      %745 = vmatprep.mubr.bf16.mxu0 0
      %746 = vmatmul.mubr.bf16.gmra.mrb[0].mxu0 %v708
      %v747 = vpop.f32.mrb[0].mxu0
      %v748 = vadd.f32 0.0, %v747
      %v749 = vpop.f32.mrb[0].mxu0
      %v750 = vpop.f32.mrb[0].mxu0
      %v751 = vpop.f32.mrb[0].mxu0
      %752 = vdwg.mxu0
      %v754 = vsel %vm385, %v603, 0
      %v757 = vsel %vm385, %v704, 0
      %759 = vmatprep.subr.bf16.mxu0 0
      %760 = vmatpush1.bf16.xpose.msra.mxu0 %v757
      %761 = vmatprep.subr.bf16.mxu0 0
      %762 = vmatpush1.bf16.xpose.msra.mxu0 0
      %763 = vmatprep.subr.bf16.mxu0 0
      %764 = vmatpush1.bf16.xpose.msra.mxu0 0
      %765 = vmatprep.subr.bf16.mxu0 0
      %766 = vmatpush1.bf16.xpose.msra.mxu0 0
      %767 = vmatprep.subr.bf16.mxu0 0
      %768 = vmatpush1.bf16.xpose.msra.mxu0 0
      %769 = vmatprep.subr.bf16.mxu0 0
      %770 = vmatpush1.bf16.xpose.msra.mxu0 0
      %771 = vmatprep.subr.bf16.mxu0 0
      %772 = vmatpush1.bf16.xpose.msra.mxu0 0
      %773 = vmatprep.subr.bf16.mxu0 0
      %774 = vmatpush1.bf16.xpose.msra.mxu0 0
      %775 = vmatprep.subr.bf16.mxu0 0
      %776 = vmatpush1.bf16.xpose.msra.mxu0 0
      %777 = vmatprep.subr.bf16.mxu0 0
      %778 = vmatpush1.bf16.xpose.msra.mxu0 0
      %779 = vmatprep.subr.bf16.mxu0 0
      %780 = vmatpush1.bf16.xpose.msra.mxu0 0
      %781 = vmatprep.subr.bf16.mxu0 0
      %782 = vmatpush1.bf16.xpose.msra.mxu0 0
      %783 = vmatprep.subr.bf16.mxu0 0
      %784 = vmatpush1.bf16.xpose.msra.mxu0 0
      %785 = vmatprep.subr.bf16.mxu0 0
      %786 = vmatpush1.bf16.xpose.msra.mxu0 0
      %787 = vmatprep.subr.bf16.mxu0 0
      %788 = vmatpush1.bf16.xpose.msra.mxu0 0
      %789 = vmatprep.subr.bf16.mxu0 0
      %790 = vmatpush1.bf16.xpose.msra.mxu0 0
      %791 = vmatprep.mubr.bf16.mxu0 0
      %792 = vmatmul.mubr.bf16.gmra.mrb[0].mxu0 %v754
      %v793 = vpop.f32.mrb[0].mxu0
      %v794 = vadd.f32 0.0, %v793
      %v795 = vpop.f32.mrb[0].mxu0
      %v796 = vpop.f32.mrb[0].mxu0
      %v797 = vpop.f32.mrb[0].mxu0
      %798 = vdwg.mxu0
      %v800 = vsel %vm385, %v604, 0
      %v803 = vsel %vm385, %v705, 0
      %805 = vmatprep.subr.bf16.mxu0 0
      %806 = vmatpush1.bf16.xpose.msra.mxu0 %v803
      %807 = vmatprep.subr.bf16.mxu0 0
      %808 = vmatpush1.bf16.xpose.msra.mxu0 0
      %809 = vmatprep.subr.bf16.mxu0 0
      %810 = vmatpush1.bf16.xpose.msra.mxu0 0
      %811 = vmatprep.subr.bf16.mxu0 0
      %812 = vmatpush1.bf16.xpose.msra.mxu0 0
      %813 = vmatprep.subr.bf16.mxu0 0
      %814 = vmatpush1.bf16.xpose.msra.mxu0 0
      %815 = vmatprep.subr.bf16.mxu0 0
      %816 = vmatpush1.bf16.xpose.msra.mxu0 0
      %817 = vmatprep.subr.bf16.mxu0 0
      %818 = vmatpush1.bf16.xpose.msra.mxu0 0
      %819 = vmatprep.subr.bf16.mxu0 0
      %820 = vmatpush1.bf16.xpose.msra.mxu0 0
      %821 = vmatprep.subr.bf16.mxu0 0
      %822 = vmatpush1.bf16.xpose.msra.mxu0 0
      %823 = vmatprep.subr.bf16.mxu0 0
      %824 = vmatpush1.bf16.xpose.msra.mxu0 0
      %825 = vmatprep.subr.bf16.mxu0 0
      %826 = vmatpush1.bf16.xpose.msra.mxu0 0
      %827 = vmatprep.subr.bf16.mxu0 0
      %828 = vmatpush1.bf16.xpose.msra.mxu0 0
      %829 = vmatprep.subr.bf16.mxu0 0
      %830 = vmatpush1.bf16.xpose.msra.mxu0 0
      %831 = vmatprep.subr.bf16.mxu0 0
      %832 = vmatpush1.bf16.xpose.msra.mxu0 0
      %833 = vmatprep.subr.bf16.mxu0 0
      %834 = vmatpush1.bf16.xpose.msra.mxu0 0
      %835 = vmatprep.subr.bf16.mxu0 0
      %836 = vmatpush1.bf16.xpose.msra.mxu0 0
      %837 = vmatprep.mubr.bf16.mxu0 0
      %838 = vmatmul.mubr.bf16.gmra.mrb[0].mxu0 %v800
      %v839 = vpop.f32.mrb[0].mxu0
      %v840 = vadd.f32 0.0, %v839
      %v841 = vpop.f32.mrb[0].mxu0
      %v842 = vpop.f32.mrb[0].mxu0
      %v843 = vpop.f32.mrb[0].mxu0
      %844 = vdwg.mxu0
      %v846 = vsel %vm385, %v605, 0
      %v849 = vsel %vm385, %v706, 0
      %851 = vmatprep.subr.bf16.mxu0 0
      %852 = vmatpush1.bf16.xpose.msra.mxu0 %v849
      %853 = vmatprep.subr.bf16.mxu0 0
      %854 = vmatpush1.bf16.xpose.msra.mxu0 0
      %855 = vmatprep.subr.bf16.mxu0 0
      %856 = vmatpush1.bf16.xpose.msra.mxu0 0
      %857 = vmatprep.subr.bf16.mxu0 0
      %858 = vmatpush1.bf16.xpose.msra.mxu0 0
      %859 = vmatprep.subr.bf16.mxu0 0
      %860 = vmatpush1.bf16.xpose.msra.mxu0 0
      %861 = vmatprep.subr.bf16.mxu0 0
      %862 = vmatpush1.bf16.xpose.msra.mxu0 0
      %863 = vmatprep.subr.bf16.mxu0 0
      %864 = vmatpush1.bf16.xpose.msra.mxu0 0
      %865 = vmatprep.subr.bf16.mxu0 0
      %866 = vmatpush1.bf16.xpose.msra.mxu0 0
      %867 = vmatprep.subr.bf16.mxu0 0
      %868 = vmatpush1.bf16.xpose.msra.mxu0 0
      %869 = vmatprep.subr.bf16.mxu0 0
      %870 = vmatpush1.bf16.xpose.msra.mxu0 0
      %871 = vmatprep.subr.bf16.mxu0 0
      %872 = vmatpush1.bf16.xpose.msra.mxu0 0
      %873 = vmatprep.subr.bf16.mxu0 0
      %874 = vmatpush1.bf16.xpose.msra.mxu0 0
      %875 = vmatprep.subr.bf16.mxu0 0
      %876 = vmatpush1.bf16.xpose.msra.mxu0 0
      %877 = vmatprep.subr.bf16.mxu0 0
      %878 = vmatpush1.bf16.xpose.msra.mxu0 0
      %879 = vmatprep.subr.bf16.mxu0 0
      %880 = vmatpush1.bf16.xpose.msra.mxu0 0
      %881 = vmatprep.subr.bf16.mxu0 0
      %882 = vmatpush1.bf16.xpose.msra.mxu0 0
      %883 = vmatprep.mubr.bf16.mxu0 0
      %884 = vmatmul.mubr.bf16.gmra.mrb[0].mxu0 %v846
      %v885 = vpop.f32.mrb[0].mxu0
      %v886 = vadd.f32 0.0, %v885
      %v887 = vpop.f32.mrb[0].mxu0
      %v888 = vpop.f32.mrb[0].mxu0
      %v889 = vpop.f32.mrb[0].mxu0
      %890 = vdwg.mxu0
      %vm891 = vcmask 130048
      %v892 = vsel %vm891, %v748, -inf
      %893 = vmax.xlane.f32.xlu0 %v892
      %v894 = vpop.xlane.xlu0 %893
      %v895 = vsel %vm891, %v794, -inf
      %896 = vmax.xlane.f32.xlu0 %v895
      %v897 = vpop.xlane.xlu0 %896
      %v898 = vsel %vm891, %v840, -inf
      %899 = vmax.xlane.f32.xlu0 %v898
      %v900 = vpop.xlane.xlu0 %899
      %v901 = vsel %vm891, %v886, -inf
      %902 = vmax.xlane.f32.xlu0 %v901
      %v903 = vpop.xlane.xlu0 %902
      %v904 = vsub.f32 %v748, %v894
      %v905 = vsub.f32 %v794, %v897
      %v906 = vsub.f32 %v840, %v900
      %v907 = vsub.f32 %v886, %v903
      %v908 = vmul.f32 %v904, 1.442695
      %v909 = vpow.pop %v908
      %v910 = vmul.f32 %v905, 1.442695
      %v911 = vpow.pop %v910
      %v912 = vmul.f32 %v906, 1.442695
      %v913 = vpow.pop %v912
      %v914 = vmul.f32 %v907, 1.442695
      %v915 = vpow.pop %v914
      %v916 = vsel %vm891, %v909, 0.0
      %917 = vadd.xlane.f32.xlu0 %v916
      %v918 = vpop.xlane.xlu0 %917
      %v919 = vsel %vm891, %v911, 0.0
      %920 = vadd.xlane.f32.xlu0 %v919
      %v921 = vpop.xlane.xlu0 %920
      %v922 = vsel %vm891, %v913, 0.0
      %923 = vadd.xlane.f32.xlu0 %v922
      %v924 = vpop.xlane.xlu0 %923
      %v925 = vsel %vm891, %v915, 0.0
      %926 = vadd.xlane.f32.xlu0 %v925
      %v927 = vpop.xlane.xlu0 %926
      %v928 = vrcp.pop %v918
      %v929 = vrcp.pop %v921
      %v930 = vrcp.pop %v924
      %v931 = vrcp.pop %v927
      %v932 = vmul.f32 %v909, %v928
      %v933 = vmul.f32 %v911, %v929
      %v934 = vmul.f32 %v913, %v930
      %v935 = vmul.f32 %v915, %v931
      %v936 = vpack.c.bf16 %v932, %v932
      %v937 = vpack.c.bf16 %v933, %v933
      %v938 = vpack.c.bf16 %v934, %v934
      %v939 = vpack.c.bf16 %v935, %v935
      %941 = vrot.lane.b32.xlu0 %v703, 96
      %v942 = vpop.permute.xlu0 %941
      %v945 = vsel %vm891, %v936, 0
      %947 = vmatprep.subr.bf16.mxu0 0
      %948 = vmatpush1.bf16.msra.mxu0 %v942
      %949 = vmatprep.subr.bf16.mxu0 0
      %950 = vmatpush1.bf16.msra.mxu0 0
      %951 = vmatprep.subr.bf16.mxu0 0
      %952 = vmatpush1.bf16.msra.mxu0 0
      %953 = vmatprep.subr.bf16.mxu0 0
      %954 = vmatpush1.bf16.msra.mxu0 0
      %955 = vmatprep.subr.bf16.mxu0 0
      %956 = vmatpush1.bf16.msra.mxu0 0
      %957 = vmatprep.subr.bf16.mxu0 0
      %958 = vmatpush1.bf16.msra.mxu0 0
      %959 = vmatprep.subr.bf16.mxu0 0
      %960 = vmatpush1.bf16.msra.mxu0 0
      %961 = vmatprep.subr.bf16.mxu0 0
      %962 = vmatpush1.bf16.msra.mxu0 0
      %963 = vmatprep.subr.bf16.mxu0 0
      %964 = vmatpush1.bf16.msra.mxu0 0
      %965 = vmatprep.subr.bf16.mxu0 0
      %966 = vmatpush1.bf16.msra.mxu0 0
      %967 = vmatprep.subr.bf16.mxu0 0
      %968 = vmatpush1.bf16.msra.mxu0 0
      %969 = vmatprep.subr.bf16.mxu0 0
      %970 = vmatpush1.bf16.msra.mxu0 0
      %971 = vmatprep.subr.bf16.mxu0 0
      %972 = vmatpush1.bf16.msra.mxu0 0
      %973 = vmatprep.subr.bf16.mxu0 0
      %974 = vmatpush1.bf16.msra.mxu0 0
      %975 = vmatprep.subr.bf16.mxu0 0
      %976 = vmatpush1.bf16.msra.mxu0 0
      %977 = vmatprep.subr.bf16.mxu0 0
      %978 = vmatpush1.bf16.msra.mxu0 0
      %979 = vmatprep.mubr.bf16.mxu0 0
      %980 = vmatmul.mubr.bf16.gmra.mrb[0].mxu0 %v945
      %v981 = vpop.f32.mrb[0].mxu0
      %v982 = vadd.f32 0.0, %v981
      %v983 = vpop.f32.mrb[0].mxu0
      %v984 = vpop.f32.mrb[0].mxu0
      %v985 = vpop.f32.mrb[0].mxu0
      %986 = vdwg.mxu0
      %988 = vrot.lane.b32.xlu0 %v704, 96
      %v989 = vpop.permute.xlu0 %988
      %v992 = vsel %vm891, %v937, 0
      %994 = vmatprep.subr.bf16.mxu0 0
      %995 = vmatpush1.bf16.msra.mxu0 %v989
      %996 = vmatprep.subr.bf16.mxu0 0
      %997 = vmatpush1.bf16.msra.mxu0 0
      %998 = vmatprep.subr.bf16.mxu0 0
      %999 = vmatpush1.bf16.msra.mxu0 0
      %1000 = vmatprep.subr.bf16.mxu0 0
      %1001 = vmatpush1.bf16.msra.mxu0 0
      %1002 = vmatprep.subr.bf16.mxu0 0
      %1003 = vmatpush1.bf16.msra.mxu0 0
      %1004 = vmatprep.subr.bf16.mxu0 0
      %1005 = vmatpush1.bf16.msra.mxu0 0
      %1006 = vmatprep.subr.bf16.mxu0 0
      %1007 = vmatpush1.bf16.msra.mxu0 0
      %1008 = vmatprep.subr.bf16.mxu0 0
      %1009 = vmatpush1.bf16.msra.mxu0 0
      %1010 = vmatprep.subr.bf16.mxu0 0
      %1011 = vmatpush1.bf16.msra.mxu0 0
      %1012 = vmatprep.subr.bf16.mxu0 0
      %1013 = vmatpush1.bf16.msra.mxu0 0
      %1014 = vmatprep.subr.bf16.mxu0 0
      %1015 = vmatpush1.bf16.msra.mxu0 0
      %1016 = vmatprep.subr.bf16.mxu0 0
      %1017 = vmatpush1.bf16.msra.mxu0 0
      %1018 = vmatprep.subr.bf16.mxu0 0
      %1019 = vmatpush1.bf16.msra.mxu0 0
      %1020 = vmatprep.subr.bf16.mxu0 0
      %1021 = vmatpush1.bf16.msra.mxu0 0
      %1022 = vmatprep.subr.bf16.mxu0 0
      %1023 = vmatpush1.bf16.msra.mxu0 0
      %1024 = vmatprep.subr.bf16.mxu0 0
      %1025 = vmatpush1.bf16.msra.mxu0 0
      %1026 = vmatprep.mubr.bf16.mxu0 0
      %1027 = vmatmul.mubr.bf16.gmra.mrb[0].mxu0 %v992
      %v1028 = vpop.f32.mrb[0].mxu0
      %v1029 = vadd.f32 0.0, %v1028
      %v1030 = vpop.f32.mrb[0].mxu0
      %v1031 = vpop.f32.mrb[0].mxu0
      %v1032 = vpop.f32.mrb[0].mxu0
      %1033 = vdwg.mxu0
      %1035 = vrot.lane.b32.xlu0 %v705, 96
      %v1036 = vpop.permute.xlu0 %1035
      %v1039 = vsel %vm891, %v938, 0
      %1041 = vmatprep.subr.bf16.mxu0 0
      %1042 = vmatpush1.bf16.msra.mxu0 %v1036
      %1043 = vmatprep.subr.bf16.mxu0 0
      %1044 = vmatpush1.bf16.msra.mxu0 0
      %1045 = vmatprep.subr.bf16.mxu0 0
      %1046 = vmatpush1.bf16.msra.mxu0 0
      %1047 = vmatprep.subr.bf16.mxu0 0
      %1048 = vmatpush1.bf16.msra.mxu0 0
      %1049 = vmatprep.subr.bf16.mxu0 0
      %1050 = vmatpush1.bf16.msra.mxu0 0
      %1051 = vmatprep.subr.bf16.mxu0 0
      %1052 = vmatpush1.bf16.msra.mxu0 0
      %1053 = vmatprep.subr.bf16.mxu0 0
      %1054 = vmatpush1.bf16.msra.mxu0 0
      %1055 = vmatprep.subr.bf16.mxu0 0
      %1056 = vmatpush1.bf16.msra.mxu0 0
      %1057 = vmatprep.subr.bf16.mxu0 0
      %1058 = vmatpush1.bf16.msra.mxu0 0
      %1059 = vmatprep.subr.bf16.mxu0 0
      %1060 = vmatpush1.bf16.msra.mxu0 0
      %1061 = vmatprep.subr.bf16.mxu0 0
      %1062 = vmatpush1.bf16.msra.mxu0 0
      %1063 = vmatprep.subr.bf16.mxu0 0
      %1064 = vmatpush1.bf16.msra.mxu0 0
      %1065 = vmatprep.subr.bf16.mxu0 0
      %1066 = vmatpush1.bf16.msra.mxu0 0
      %1067 = vmatprep.subr.bf16.mxu0 0
      %1068 = vmatpush1.bf16.msra.mxu0 0
      %1069 = vmatprep.subr.bf16.mxu0 0
      %1070 = vmatpush1.bf16.msra.mxu0 0
      %1071 = vmatprep.subr.bf16.mxu0 0
      %1072 = vmatpush1.bf16.msra.mxu0 0
      %1073 = vmatprep.mubr.bf16.mxu0 0
      %1074 = vmatmul.mubr.bf16.gmra.mrb[0].mxu0 %v1039
      %v1075 = vpop.f32.mrb[0].mxu0
      %v1076 = vadd.f32 0.0, %v1075
      %v1077 = vpop.f32.mrb[0].mxu0
      %v1078 = vpop.f32.mrb[0].mxu0
      %v1079 = vpop.f32.mrb[0].mxu0
      %1080 = vdwg.mxu0
      %1082 = vrot.lane.b32.xlu0 %v706, 96
      %v1083 = vpop.permute.xlu0 %1082
      %v1086 = vsel %vm891, %v939, 0
      %1088 = vmatprep.subr.bf16.mxu0 0
      %1089 = vmatpush1.bf16.msra.mxu0 %v1083
      %1090 = vmatprep.subr.bf16.mxu0 0
      %1091 = vmatpush1.bf16.msra.mxu0 0
      %1092 = vmatprep.subr.bf16.mxu0 0
      %1093 = vmatpush1.bf16.msra.mxu0 0
      %1094 = vmatprep.subr.bf16.mxu0 0
      %1095 = vmatpush1.bf16.msra.mxu0 0
      %1096 = vmatprep.subr.bf16.mxu0 0
      %1097 = vmatpush1.bf16.msra.mxu0 0
      %1098 = vmatprep.subr.bf16.mxu0 0
      %1099 = vmatpush1.bf16.msra.mxu0 0
      %1100 = vmatprep.subr.bf16.mxu0 0
      %1101 = vmatpush1.bf16.msra.mxu0 0
      %1102 = vmatprep.subr.bf16.mxu0 0
      %1103 = vmatpush1.bf16.msra.mxu0 0
      %1104 = vmatprep.subr.bf16.mxu0 0
      %1105 = vmatpush1.bf16.msra.mxu0 0
      %1106 = vmatprep.subr.bf16.mxu0 0
      %1107 = vmatpush1.bf16.msra.mxu0 0
      %1108 = vmatprep.subr.bf16.mxu0 0
      %1109 = vmatpush1.bf16.msra.mxu0 0
      %1110 = vmatprep.subr.bf16.mxu0 0
      %1111 = vmatpush1.bf16.msra.mxu0 0
      %1112 = vmatprep.subr.bf16.mxu0 0
      %1113 = vmatpush1.bf16.msra.mxu0 0
      %1114 = vmatprep.subr.bf16.mxu0 0
      %1115 = vmatpush1.bf16.msra.mxu0 0
      %1116 = vmatprep.subr.bf16.mxu0 0
      %1117 = vmatpush1.bf16.msra.mxu0 0
      %1118 = vmatprep.subr.bf16.mxu0 0
      %1119 = vmatpush1.bf16.msra.mxu0 0
      %1120 = vmatprep.mubr.bf16.mxu0 0
      %1121 = vmatmul.mubr.bf16.gmra.mrb[0].mxu0 %v1086
      %v1122 = vpop.f32.mrb[0].mxu0
      %v1123 = vadd.f32 0.0, %v1122
      %v1124 = vpop.f32.mrb[0].mxu0
      %v1125 = vpop.f32.mrb[0].mxu0
      %v1126 = vpop.f32.mrb[0].mxu0
      %1127 = vdwg.mxu0
      %v1128 = vpack.c.bf16 %v982, %v982
      %v1129 = vpack.c.bf16 %v1029, %v1029
      %v1130 = vpack.c.bf16 %v1076, %v1076
      %v1131 = vpack.c.bf16 %v1123, %v1123
      %v1132 = vld [vmem:[%s7] sm:$0xf]
      %v1133 = vld [vmem:[%s7 + $0x4] sm:$0xf]
      %v1134 = vld [vmem:[%s7 + $0x8] sm:$0xf]
      %v1135 = vld [vmem:[%s7 + $0xc] sm:$0xf]
      %v1136 = vld [vmem:[%s8] sm:$0x1]
      %v1138 = vlaneseq
      %v1139 = vshrl.u32 %v1138, 7
      %v1140 = vsub.s32 0, %v1139
      %v1141 = vrot.slane %v1136, %v1140
      %v1147 = vunpack.c.l.b16 %v1128
      %v1148 = vunpack.c.l.b16 %v1129
      %v1149 = vunpack.c.l.b16 %v1130
      %v1150 = vunpack.c.l.b16 %v1131
      %v1151 = vpack.c.b16 %v1148, %v1147
      %v1152 = vpack.c.b16 %v1150, %v1149
      %v1157 = vunpack.c.l.b16 %v1132
      %v1158 = vunpack.c.l.b16 %v1133
      %v1159 = vunpack.c.l.b16 %v1134
      %v1160 = vunpack.c.l.b16 %v1135
      %v1161 = vpack.c.b16 %v1158, %v1157
      %v1162 = vpack.c.b16 %v1160, %v1159
      %v1166 = vsel %vm385, %v1151, 0
      %v1169 = vsel %vm385, %v1152, 0
      %1171 = vmatprep.subr.bf16.mxu0 0
      %1172 = vmatpush1.bf16.msra.mxu0 %v1161
      %1173 = vmatprep.subr.bf16.mxu0 0
      %1174 = vmatpush1.bf16.msra.mxu0 %v1162
      %1175 = vmatprep.subr.bf16.mxu0 0
      %1176 = vmatpush1.bf16.msra.mxu0 0
      %1177 = vmatprep.subr.bf16.mxu0 0
      %1178 = vmatpush1.bf16.msra.mxu0 0
      %1179 = vmatprep.subr.bf16.mxu0 0
      %1180 = vmatpush1.bf16.msra.mxu0 0
      %1181 = vmatprep.subr.bf16.mxu0 0
      %1182 = vmatpush1.bf16.msra.mxu0 0
      %1183 = vmatprep.subr.bf16.mxu0 0
      %1184 = vmatpush1.bf16.msra.mxu0 0
      %1185 = vmatprep.subr.bf16.mxu0 0
      %1186 = vmatpush1.bf16.msra.mxu0 0
      %1187 = vmatprep.subr.bf16.mxu0 0
      %1188 = vmatpush1.bf16.msra.mxu0 0
      %1189 = vmatprep.subr.bf16.mxu0 0
      %1190 = vmatpush1.bf16.msra.mxu0 0
      %1191 = vmatprep.subr.bf16.mxu0 0
      %1192 = vmatpush1.bf16.msra.mxu0 0
      %1193 = vmatprep.subr.bf16.mxu0 0
      %1194 = vmatpush1.bf16.msra.mxu0 0
      %1195 = vmatprep.subr.bf16.mxu0 0
      %1196 = vmatpush1.bf16.msra.mxu0 0
      %1197 = vmatprep.subr.bf16.mxu0 0
      %1198 = vmatpush1.bf16.msra.mxu0 0
      %1199 = vmatprep.subr.bf16.mxu0 0
      %1200 = vmatpush1.bf16.msra.mxu0 0
      %1201 = vmatprep.subr.bf16.mxu0 0
      %1202 = vmatpush1.bf16.msra.mxu0 0
      %1203 = vmatprep.mubr.bf16.mxu0 0
      %1204 = vmatmul.mubr.bf16.gmra.mrb[0].mxu0 %v1166
      %v1205 = vpop.f32.mrb[0].mxu0
      %v1206 = vadd.f32 %v1141, %v1205
      %v1207 = vpop.f32.mrb[0].mxu0
      %v1208 = vpop.f32.mrb[0].mxu0
      %v1209 = vadd.f32 %v1141, %v1208
      %v1210 = vpop.f32.mrb[0].mxu0
      %1211 = vmatprep.mubr.bf16.mxu0 0
      %1212 = vmatmul.mubr.bf16.gmra.mrb[0].mxu0 %v1169
      %v1213 = vpop.f32.mrb[0].mxu0
      %v1214 = vadd.f32 %v1141, %v1213
      %v1215 = vpop.f32.mrb[0].mxu0
      %v1216 = vpop.f32.mrb[0].mxu0
      %v1217 = vadd.f32 %v1141, %v1216
      %v1218 = vpop.f32.mrb[0].mxu0
      %1219 = vdwg.mxu0
      %v1220 = vpack.c.bf16 %v1206, %v1206
      %v1221 = vpack.c.bf16 %v1209, %v1209
      %v1222 = vpack.c.bf16 %v1214, %v1214
      %v1223 = vpack.c.bf16 %v1217, %v1217
      %vm1224 = vcmask 257024
      %1225 = vst.msk [vmem:[%s356] sm:$0xf] %vm1224, %v1220
      %1226 = vst.msk [vmem:[%s356 + $0x4] sm:$0xf] %vm1224, %v1221
      %1227 = vst.msk [vmem:[%s356 + $0x8] sm:$0xf] %vm1224, %v1222
      %1228 = vst.msk [vmem:[%s356 + $0xc] sm:$0xf] %vm1224, %v1223
      %s1229 = smul.u32 4, %s20
      %p1230 = scmp.lt.s32.totalorder %s1229, 15
      %s1231 = scalar_select %p1230, %s1229, 15
      %s1232 = smul.addr %s1231, 4
      %s1233 = scalar_lea.vmem %s9, %s1232
      // Predicated region
      $region57: #{sk_reference_attention.3} parent=55 // pred_check
        %p1234 = pneg %p237
      $region58: #{sk_reference_attention.3} parent=55 // pred_check_branch
        %1236 = sbr.rel (%p1234) target = $region60
      $region59: #{sk_reference_attention.3} parent=55 // pred_region
        %s1237 = smul.u32 4, %s20
      $region60: #{sk_reference_attention.3} parent=55 // pred_fallthru
        _
    $region56: #{sk_reference_attention.3} parent=5 // pred_fallthru
      _
    %p1238 = scmp.le.s32.totalorder 2, %s15
    // Predicated region
    $region61: #{sk_reference_attention.3} parent=5 // pred_check
      %p1239 = pneg %p1238
    $region62: #{sk_reference_attention.3} parent=5 // pred_check_branch
      %1241 = sbr.rel (%p1239) target = $region64
    $region63: #{sk_reference_attention.3} parent=5 // pred_region
      %s1242 = ssub.s32 %s15, 2
      // Predicated region
      $region65: #{sk_reference_attention.3} parent=63 // pred_check
        %p1243 = pneg %p243
      $region66: #{sk_reference_attention.3} parent=63 // pred_check_branch
        %1245 = sbr.rel (%p1243) target = $region68
      $region67: #{sk_reference_attention.3} parent=63 // pred_region
        %s1246 = smul.u32 4, %s21
        %p1247 = scmp.lt.s32.totalorder %s1246, 15
        %s1248 = scalar_select %p1247, %s1246, 15
        %s1249 = smul.addr %s1248, 4
        %s1250 = scalar_lea.vmem %s9, %s1249
      $region68: #{sk_reference_attention.3} parent=63 // pred_fallthru
        _
    $region64: #{sk_reference_attention.3} parent=5 // pred_fallthru
      _
  $region6: #{sk_reference_attention.3} parent=0 // loop_footer
    %s19 = sadd.s32 1, %s15
  $region7: #{sk_reference_attention.3} parent=0 // loop_footer_branch
    %14 = sbr.rel target = $region3
  $region8: #{sk_reference_attention.3} parent=0 // loop_exit
    _

// kernel: sk_reference_attention.5
$region0: #{sk_reference_attention.5}
  #allocation0 [shape = 'u32[]', space=smem, size = 0x4, offset = 0x4, fixed_abs, tag = 'smem constant byte address 0x4 - core index']
  #allocation1 [shape = 'u32[144,128]{1,0:T(1,128)}', space=vmem, size = 0x12000, scoped, tag = 'internal scratch']
  %s0 = inlined_call_operand.vmem [shape: bf16[2,10,10,32], index: 0, kind: input, shape index: {}]
  %s1 = inlined_call_operand.vmem [shape: f32[2,8,8,32], index: 1, kind: input, shape index: {}]
  %s2 = inlined_call_operand.vmem [shape: bf16[9,32,32], index: 2, kind: input, shape index: {}]
  %s3 = inlined_call_operand.vmem [shape: f32[1,32], index: 3, kind: input, shape index: {}]
  %s4 = inlined_call_operand.hbm [shape: f32[2,8,8,32], index: 4, kind: output, shape index: {}]
  %s5 = sld [smem:[#allocation0]]
  $region49: #{sk_reference_attention.5} parent=0
    _
  %s7 = ssub.s32 1, %s5
  %s8 = scalar_select 0, %s7, %s5
  $region1: #{sk_reference_attention.5} parent=0
    #allocation2 [shape = 'u8[65536]{0}', space=vmem, size = 0x10000, scoped, tag = 'output window, operand 0']
    #allocation3 [shape = 's32[2]{0}', space=sflag, size = 0x8, scoped, tag = 'scoped memory for sk_reference_attention.5']
    %9 = vsyncpa [#allocation3], 0
    %s10 = scalar_lea.sflag [#allocation3], 1
    %11 = vsyncpa %s10, 0
    loop: start=0, step=1, limit=4
    $region2: #{sk_reference_attention.5} parent=1 // loop_pre_header
      _
    $region3: #{sk_reference_attention.5} parent=1 // loop_header
      %s13 = sphi 0, %s17
      %p14 = scmp.ge.s32.totalorder %s13, 4
      %s23 = sphi 0, %s25
      %s26 = sphi 0, %s23
      %s27 = sphi 0, %s26
      %s43 = sphi 0, %s27
      %s49 = sphi 0, %s51
      %s52 = sphi 0, %s49
      %s53 = sphi 0, %s52
      %s69 = sphi 0, %s53
      %s73 = sphi 0, %s73
      %s75 = sphi 0, %s73
      %s76 = sphi 0, %s75
      %s90 = sphi 0, %s76
      %s94 = sphi 0, %s94
      %s96 = sphi 0, %s94
      %s97 = sphi 0, %s96
      %s111 = sphi 0, %s97
      %s117 = sphi 0, %s119
      %s120 = sphi 0, %s117
      %s121 = sphi 0, %s120
      %s137 = sphi 0, %s121
    $region4: #{sk_reference_attention.5} parent=1 // loop_header_branch
      %16 = sbr.rel (%p14) target = $region8
    $region5: #{sk_reference_attention.5} parent=1 // loop_body
      %s18 = ssub.s32 %s13, 1
      %s19 = ssub.s32 %s13, 2
      %s20 = sadd.s32 %s13, 1
      %s21 = ssub.s32 %s13, %s20
      %p22 = scmp.eq.s32.totalorder %s21, 0
      %s24 = sadd.s32 %s23, 1
      %s25 = scalar_select %p22, %s23, %s24
      %p28 = pneg %p22
      %p29 = scmp.eq.s32.totalorder %s13, 1
      %p30 = por %p28, %p29
      %p31 = scmp.ne.s32.totalorder %s23, %s26
      %p32 = scmp.eq.s32.totalorder %s13, 0
      %p33 = por %p31, %p32
      %p34 = scmp.ne.s32.totalorder %s23, %s26
      %p35 = scmp.eq.s32.totalorder %s18, 1
      %p36 = por %p34, %p35
      %p37 = scmp.ne.s32.totalorder %s26, %s27
      %p38 = scmp.eq.s32.totalorder %s18, 0
      %p39 = por %p37, %p38
      %p40 = scmp.ne.s32.totalorder %s26, %s27
      %p41 = scmp.eq.s32.totalorder %s19, 1
      %p42 = por %p40, %p41
      %p44 = scmp.ne.s32.totalorder %s27, %s43
      %p45 = scmp.eq.s32.totalorder %s19, 0
      %p46 = por %p44, %p45
      %s47 = ssub.s32 %s13, %s20
      %p48 = scmp.eq.s32.totalorder %s47, 0
      %s50 = sadd.s32 %s49, 1
      %s51 = scalar_select %p48, %s49, %s50
      %p54 = pneg %p48
      %p55 = scmp.eq.s32.totalorder %s13, 1
      %p56 = por %p54, %p55
      %p57 = scmp.ne.s32.totalorder %s49, %s52
      %p58 = scmp.eq.s32.totalorder %s13, 0
      %p59 = por %p57, %p58
      %p60 = scmp.ne.s32.totalorder %s49, %s52
      %p61 = scmp.eq.s32.totalorder %s18, 1
      %p62 = por %p60, %p61
      %p63 = scmp.ne.s32.totalorder %s52, %s53
      %p64 = scmp.eq.s32.totalorder %s18, 0
      %p65 = por %p63, %p64
      %p66 = scmp.ne.s32.totalorder %s52, %s53
      %p67 = scmp.eq.s32.totalorder %s19, 1
      %p68 = por %p66, %p67
      %p70 = scmp.ne.s32.totalorder %s53, %s69
      %p71 = scmp.eq.s32.totalorder %s19, 0
      %p72 = por %p70, %p71
      %s74 = sadd.s32 %s73, 1
      %p77 = scmp.eq.s32.totalorder %s13, 1
      %p78 = scmp.ne.s32.totalorder %s73, %s75
      %p79 = scmp.eq.s32.totalorder %s13, 0
      %p80 = por %p78, %p79
      %p81 = scmp.ne.s32.totalorder %s73, %s75
      %p82 = scmp.eq.s32.totalorder %s18, 1
      %p83 = por %p81, %p82
      %p84 = scmp.ne.s32.totalorder %s75, %s76
      %p85 = scmp.eq.s32.totalorder %s18, 0
      %p86 = por %p84, %p85
      %p87 = scmp.ne.s32.totalorder %s75, %s76
      %p88 = scmp.eq.s32.totalorder %s19, 1
      %p89 = por %p87, %p88
      %p91 = scmp.ne.s32.totalorder %s76, %s90
      %p92 = scmp.eq.s32.totalorder %s19, 0
      %p93 = por %p91, %p92
      %s95 = sadd.s32 %s94, 1
      %p98 = scmp.eq.s32.totalorder %s13, 1
      %p99 = scmp.ne.s32.totalorder %s94, %s96
      %p100 = scmp.eq.s32.totalorder %s13, 0
      %p101 = por %p99, %p100
      %p102 = scmp.ne.s32.totalorder %s94, %s96
      %p103 = scmp.eq.s32.totalorder %s18, 1
      %p104 = por %p102, %p103
      %p105 = scmp.ne.s32.totalorder %s96, %s97
      %p106 = scmp.eq.s32.totalorder %s18, 0
      %p107 = por %p105, %p106
      %p108 = scmp.ne.s32.totalorder %s96, %s97
      %p109 = scmp.eq.s32.totalorder %s19, 1
      %p110 = por %p108, %p109
      %p112 = scmp.ne.s32.totalorder %s97, %s111
      %p113 = scmp.eq.s32.totalorder %s19, 0
      %p114 = por %p112, %p113
      %s115 = ssub.s32 %s13, %s20
      %p116 = scmp.eq.s32.totalorder %s115, 0
      %s118 = sadd.s32 %s117, 1
      %s119 = scalar_select %p116, %s117, %s118
      %p122 = pneg %p116
      %p123 = scmp.eq.s32.totalorder %s13, 1
      %p124 = por %p122, %p123
      %p125 = scmp.ne.s32.totalorder %s117, %s120
      %p126 = scmp.eq.s32.totalorder %s13, 0
      %p127 = por %p125, %p126
      %p128 = scmp.ne.s32.totalorder %s117, %s120
      %p129 = scmp.eq.s32.totalorder %s18, 1
      %p130 = por %p128, %p129
      %p131 = scmp.ne.s32.totalorder %s120, %s121
      %p132 = scmp.eq.s32.totalorder %s18, 0
      %p133 = por %p131, %p132
      %p134 = scmp.ne.s32.totalorder %s120, %s121
      %p135 = scmp.eq.s32.totalorder %s19, 1
      %p136 = por %p134, %p135
      %p138 = scmp.ne.s32.totalorder %s121, %s137
      %p139 = scmp.eq.s32.totalorder %s19, 0
      %p140 = por %p138, %p139
      %p141 = scmp.le.s32.totalorder 1, %s13
      %p142 = scmp.lt.s32.totalorder %s13, 3
      %p143 = pnand %p141, %p142
      %p144 = pneg %p143
      // Predicated region
      $region9: #{sk_reference_attention.5} parent=5 // pred_check
        _
      $region10: #{sk_reference_attention.5} parent=5 // pred_check_branch
        %146 = sbr.rel (%p143) target = $region12
      $region11: #{sk_reference_attention.5} parent=5 // pred_region
        %s147 = ssub.s32 %s13, 1
        // Predicated region
        $region13: #{sk_reference_attention.5} parent=11 // pred_check
          %p148 = pneg %p86
        $region14: #{sk_reference_attention.5} parent=11 // pred_check_branch
          %150 = sbr.rel (%p148) target = $region16
        $region15: #{sk_reference_attention.5} parent=11 // pred_region
          _
        $region16: #{sk_reference_attention.5} parent=11 // pred_fallthru
          _
        // Predicated region
        $region17: #{sk_reference_attention.5} parent=11 // pred_check
          %p151 = pneg %p107
        $region18: #{sk_reference_attention.5} parent=11 // pred_check_branch
          %153 = sbr.rel (%p151) target = $region20
        $region19: #{sk_reference_attention.5} parent=11 // pred_region
          _
        $region20: #{sk_reference_attention.5} parent=11 // pred_fallthru
          _
      $region12: #{sk_reference_attention.5} parent=5 // pred_fallthru
        _
      %p154 = scmp.lt.s32.totalorder %s13, 2
      // Predicated region
      $region21: #{sk_reference_attention.5} parent=5 // pred_check
        %p155 = pneg %p154
      $region22: #{sk_reference_attention.5} parent=5 // pred_check_branch
        %157 = sbr.rel (%p155) target = $region24
      $region23: #{sk_reference_attention.5} parent=5 // pred_region
        // Predicated region
        $region25: #{sk_reference_attention.5} parent=23 // pred_check
          %p158 = pneg %p33
        $region26: #{sk_reference_attention.5} parent=23 // pred_check_branch
          %160 = sbr.rel (%p158) target = $region28
        $region27: #{sk_reference_attention.5} parent=23 // pred_region
          %p161 = scmp.lt.s32.totalorder %s13, 1
          %s162 = scalar_select %p161, %s13, 1
          %s163 = smul.addr %s162, 20
          %s164 = smul.addr %s163, 4
          %s165 = scalar_lea.vmem %s0, %s164
        $region28: #{sk_reference_attention.5} parent=23 // pred_fallthru
          _
        // Predicated region
        $region29: #{sk_reference_attention.5} parent=23 // pred_check
          %p166 = pneg %p59
        $region30: #{sk_reference_attention.5} parent=23 // pred_check_branch
          %168 = sbr.rel (%p166) target = $region32
        $region31: #{sk_reference_attention.5} parent=23 // pred_region
          %p169 = scmp.lt.s32.totalorder %s13, 1
          %s170 = scalar_select %p169, %s13, 1
          %s171 = smul.addr %s170, 8
          %s172 = smul.addr %s171, 8
          %s173 = scalar_lea.vmem %s1, %s172
        $region32: #{sk_reference_attention.5} parent=23 // pred_fallthru
          _
      $region24: #{sk_reference_attention.5} parent=5 // pred_fallthru
        _
      %p174 = scmp.le.s32.totalorder 1, %s13
      %p175 = scmp.lt.s32.totalorder %s13, 3
      %p176 = pnand %p174, %p175
      %p177 = pneg %p176
      // Predicated region
      $region33: #{sk_reference_attention.5} parent=5 // pred_check
        _
      $region34: #{sk_reference_attention.5} parent=5 // pred_check_branch
        %179 = sbr.rel (%p176) target = $region36
      $region35: #{sk_reference_attention.5} parent=5 // pred_region
        %s180 = ssub.s32 %s13, 1
        %p181 = scmp.lt.s32.totalorder %s18, 1
        %s182 = scalar_select %p181, %s18, 1
        %s183 = smul.addr %s182, 20
        %s184 = smul.addr %s183, 4
        %s185 = scalar_lea.vmem %s0, %s184
        %p186 = pneg %p39
        %p187 = pneg %p36
        %p188 = scmp.lt.s32.totalorder %s18, 1
        %s189 = scalar_select %p188, %s18, 1
        %s190 = smul.addr %s189, 8
        %s191 = smul.addr %s190, 8
        %s192 = scalar_lea.vmem %s1, %s191
        %p193 = pneg %p65
        %p194 = pneg %p62
        %p195 = pneg %p86
        %p196 = pneg %p83
        %p197 = pneg %p107
        %p198 = pneg %p104
        %p199 = pneg %p133
        %p200 = pneg %p130
        %s201 = sand.u32 %s120, 1
        %s202 = scalar_lea.sflag [#allocation3], %s201
        %s203 = sand.u32 %s120, 1
        %s204 = smul.addr %s203, 64
        %s205 = scalar_lea.vmem [#allocation2], %s204
        %p206 = scmp.lt.s32.totalorder %s18, 1
        %s207 = scalar_select %p206, %s18, 1
        %s208 = smul.addr %s207, 20
        %s209 = smul.addr %s208, 4
        %s210 = scalar_lea.vmem %s0, %s209
        %p211 = scmp.lt.s32.totalorder %s18, 1
        %s212 = scalar_select %p211, %s18, 1
        %s213 = smul.addr %s212, 8
        %s214 = smul.addr %s213, 8
        %s215 = scalar_lea.vmem %s1, %s214
        %v217 = vld [vmem:[%s210] sm:$0xf]
        %v218 = vld [vmem:[%s210 + $0x4] sm:$0x1]
        %v219 = vld [vmem:[%s210 + $0x8] sm:$0xf]
        %v220 = vld [vmem:[%s210 + $0xc] sm:$0x1]
        %v221 = vld [vmem:[%s210 + $0x10] sm:$0xf]
        %v222 = vld [vmem:[%s210 + $0x14] sm:$0x1]
        %v223 = vld [vmem:[%s210 + $0x18] sm:$0xf]
        %v224 = vld [vmem:[%s210 + $0x1c] sm:$0x1]
        %v225 = vld [vmem:[%s210 + $0x20] sm:$0xf]
        %v226 = vld [vmem:[%s210 + $0x24] sm:$0x1]
        %v227 = vld [vmem:[%s210 + $0x28] sm:$0xf]
        %v228 = vld [vmem:[%s210 + $0x2c] sm:$0x1]
        %v229 = vld [vmem:[%s210 + $0x30] sm:$0xf]
        %v230 = vld [vmem:[%s210 + $0x34] sm:$0x1]
        %v231 = vld [vmem:[%s210 + $0x38] sm:$0xf]
        %v232 = vld [vmem:[%s210 + $0x3c] sm:$0x1]
        %v233 = vld [vmem:[%s210 + $0x40] sm:$0xf]
        %v234 = vld [vmem:[%s210 + $0x44] sm:$0x1]
        %v235 = vld [vmem:[%s210 + $0x48] sm:$0xf]
        %v236 = vld [vmem:[%s210 + $0x4c] sm:$0x1]
        %v237 = vld [vmem:[%s2] sm:$0xf]
        %v238 = vld [vmem:[%s2 + $0x4] sm:$0xf]
        %v239 = vld [vmem:[%s2 + $0x8] sm:$0xf]
        %v240 = vld [vmem:[%s2 + $0xc] sm:$0xf]
        %vm241 = vsmask.f32 3328
        %vm242 = vsmask.f32 7440
        %vm243 = vmor %vm241, %vm242
        %v245 = vshrl.u32 %v217, 16
        %v247 = vrot.slane %v245, 4
        %v248 = vshll.u32 %v217, 16
        %v250 = vrot.slane %v248, 5
        %v251 = vor.u32 %v247, %v250
        %v252 = vrot.slane %v251, 4
        %v254 = vshll.u32 %v218, 16
        %v256 = vrot.slane %v254, 5
        %v257 = vsel %vm243, %v252, %v256
        %v259 = vshrl.u32 %v219, 16
        %v261 = vrot.slane %v259, 4
        %v262 = vshll.u32 %v219, 16
        %v264 = vrot.slane %v262, 5
        %v265 = vor.u32 %v261, %v264
        %v266 = vrot.slane %v265, 4
        %v268 = vshll.u32 %v220, 16
        %v270 = vrot.slane %v268, 5
        %v271 = vsel %vm243, %v266, %v270
        %v273 = vshrl.u32 %v221, 16
        %v275 = vrot.slane %v273, 4
        %v276 = vshll.u32 %v221, 16
        %v278 = vrot.slane %v276, 5
        %v279 = vor.u32 %v275, %v278
        %v280 = vrot.slane %v279, 4
        %v282 = vshll.u32 %v222, 16
        %v284 = vrot.slane %v282, 5
        %v285 = vsel %vm243, %v280, %v284
        %v287 = vshrl.u32 %v223, 16
        %v289 = vrot.slane %v287, 4
        %v290 = vshll.u32 %v223, 16
        %v292 = vrot.slane %v290, 5
        %v293 = vor.u32 %v289, %v292
        %v294 = vrot.slane %v293, 4
        %v296 = vshll.u32 %v224, 16
        %v298 = vrot.slane %v296, 5
        %v299 = vsel %vm243, %v294, %v298
        %v301 = vshrl.u32 %v225, 16
        %v303 = vrot.slane %v301, 4
        %v304 = vshll.u32 %v225, 16
        %v306 = vrot.slane %v304, 5
        %v307 = vor.u32 %v303, %v306
        %v308 = vrot.slane %v307, 4
        %v310 = vshll.u32 %v226, 16
        %v312 = vrot.slane %v310, 5
        %v313 = vsel %vm243, %v308, %v312
        %v315 = vshrl.u32 %v227, 16
        %v317 = vrot.slane %v315, 4
        %v318 = vshll.u32 %v227, 16
        %v320 = vrot.slane %v318, 5
        %v321 = vor.u32 %v317, %v320
        %v322 = vrot.slane %v321, 4
        %v324 = vshll.u32 %v228, 16
        %v326 = vrot.slane %v324, 5
        %v327 = vsel %vm243, %v322, %v326
        %v329 = vshrl.u32 %v229, 16
        %v331 = vrot.slane %v329, 4
        %v332 = vshll.u32 %v229, 16
        %v334 = vrot.slane %v332, 5
        %v335 = vor.u32 %v331, %v334
        %v336 = vrot.slane %v335, 4
        %v338 = vshll.u32 %v230, 16
        %v340 = vrot.slane %v338, 5
        %v341 = vsel %vm243, %v336, %v340
        %v343 = vshrl.u32 %v231, 16
        %v345 = vrot.slane %v343, 4
        %v346 = vshll.u32 %v231, 16
        %v348 = vrot.slane %v346, 5
        %v349 = vor.u32 %v345, %v348
        %v350 = vrot.slane %v349, 4
        %v352 = vshll.u32 %v232, 16
        %v354 = vrot.slane %v352, 5
        %v355 = vsel %vm243, %v350, %v354
        %s356 = scalar_lea.vmem %s2, 16
        %v357 = vld [vmem:[%s356] sm:$0xf]
        %v358 = vld [vmem:[%s356 + $0x4] sm:$0xf]
        %v359 = vld [vmem:[%s356 + $0x8] sm:$0xf]
        %v360 = vld [vmem:[%s356 + $0xc] sm:$0xf]
        %v361 = vunpack.c.l.b16 %v257
        %v362 = vunpack.c.l.b16 %v271
        %v363 = vunpack.c.l.b16 %v285
        %v364 = vunpack.c.l.b16 %v299
        %v365 = vunpack.c.l.b16 %v313
        %v366 = vunpack.c.l.b16 %v327
        %v367 = vunpack.c.l.b16 %v341
        %v368 = vunpack.c.l.b16 %v355
        %v369 = vpack.c.b16 %v362, %v361
        %v370 = vpack.c.b16 %v364, %v363
        %v371 = vpack.c.b16 %v366, %v365
        %v372 = vpack.c.b16 %v368, %v367
        %v377 = vunpack.c.l.b16 %v357
        %v378 = vunpack.c.l.b16 %v358
        %v379 = vunpack.c.l.b16 %v359
        %v380 = vunpack.c.l.b16 %v360
        %v381 = vpack.c.b16 %v378, %v377
        %v382 = vpack.c.b16 %v380, %v379
        %vm385 = vcmask 261120
        %v387 = vsel %vm385, %v369, 0
        %v390 = vsel %vm385, %v370, 0
        %v393 = vsel %vm385, %v371, 0
        %v396 = vsel %vm385, %v372, 0
        %398 = vmatprep.subr.bf16.mxu0 0
        %399 = vmatpush1.bf16.msra.mxu0 %v381
        %400 = vmatprep.subr.bf16.mxu0 0
        %401 = vmatpush1.bf16.msra.mxu0 %v382
        %402 = vmatprep.subr.bf16.mxu0 0
        %403 = vmatpush1.bf16.msra.mxu0 0
        %404 = vmatprep.subr.bf16.mxu0 0
        %405 = vmatpush1.bf16.msra.mxu0 0
        %406 = vmatprep.subr.bf16.mxu0 0
        %407 = vmatpush1.bf16.msra.mxu0 0
        %408 = vmatprep.subr.bf16.mxu0 0
        %409 = vmatpush1.bf16.msra.mxu0 0
        %410 = vmatprep.subr.bf16.mxu0 0
        %411 = vmatpush1.bf16.msra.mxu0 0
        %412 = vmatprep.subr.bf16.mxu0 0
        %413 = vmatpush1.bf16.msra.mxu0 0
        %414 = vmatprep.subr.bf16.mxu0 0
        %415 = vmatpush1.bf16.msra.mxu0 0
        %416 = vmatprep.subr.bf16.mxu0 0
        %417 = vmatpush1.bf16.msra.mxu0 0
        %418 = vmatprep.subr.bf16.mxu0 0
        %419 = vmatpush1.bf16.msra.mxu0 0
        %420 = vmatprep.subr.bf16.mxu0 0
        %421 = vmatpush1.bf16.msra.mxu0 0
        %422 = vmatprep.subr.bf16.mxu0 0
        %423 = vmatpush1.bf16.msra.mxu0 0
        %424 = vmatprep.subr.bf16.mxu0 0
        %425 = vmatpush1.bf16.msra.mxu0 0
        %426 = vmatprep.subr.bf16.mxu0 0
        %427 = vmatpush1.bf16.msra.mxu0 0
        %428 = vmatprep.subr.bf16.mxu0 0
        %429 = vmatpush1.bf16.msra.mxu0 0
        %430 = vmatprep.mubr.bf16.mxu0 0
        %431 = vmatmul.mubr.bf16.gmra.mrb[0].mxu0 %v387
        %v432 = vpop.f32.mrb[0].mxu0
        %v433 = vadd.f32 0.0, %v432
        %v434 = vpop.f32.mrb[0].mxu0
        %v435 = vpop.f32.mrb[0].mxu0
        %v436 = vadd.f32 0.0, %v435
        %v437 = vpop.f32.mrb[0].mxu0
        %438 = vmatprep.mubr.bf16.mxu0 0
        %439 = vmatmul.mubr.bf16.gmra.mrb[0].mxu0 %v390
        %v440 = vpop.f32.mrb[0].mxu0
        %v441 = vadd.f32 0.0, %v440
        %v442 = vpop.f32.mrb[0].mxu0
        %v443 = vpop.f32.mrb[0].mxu0
        %v444 = vadd.f32 0.0, %v443
        %v445 = vpop.f32.mrb[0].mxu0
        %446 = vmatprep.mubr.bf16.mxu0 0
        %447 = vmatmul.mubr.bf16.gmra.mrb[0].mxu0 %v393
        %v448 = vpop.f32.mrb[0].mxu0
        %v449 = vadd.f32 0.0, %v448
        %v450 = vpop.f32.mrb[0].mxu0
        %v451 = vpop.f32.mrb[0].mxu0
        %v452 = vadd.f32 0.0, %v451
        %v453 = vpop.f32.mrb[0].mxu0
        %454 = vmatprep.mubr.bf16.mxu0 0
        %455 = vmatmul.mubr.bf16.gmra.mrb[0].mxu0 %v396
        %v456 = vpop.f32.mrb[0].mxu0
        %v457 = vadd.f32 0.0, %v456
        %v458 = vpop.f32.mrb[0].mxu0
        %v459 = vpop.f32.mrb[0].mxu0
        %v460 = vadd.f32 0.0, %v459
        %v461 = vpop.f32.mrb[0].mxu0
        %462 = vdwg.mxu0
        %v471 = vunpack.c.l.b16 %v217
        %v472 = vunpack.c.l.b16 %v219
        %v473 = vunpack.c.l.b16 %v221
        %v474 = vunpack.c.l.b16 %v223
        %v475 = vunpack.c.l.b16 %v225
        %v476 = vunpack.c.l.b16 %v227
        %v477 = vunpack.c.l.b16 %v229
        %v478 = vunpack.c.l.b16 %v231
        %v479 = vpack.c.b16 %v472, %v471
        %v480 = vpack.c.b16 %v474, %v473
        %v481 = vpack.c.b16 %v476, %v475
        %v482 = vpack.c.b16 %v478, %v477
        %v487 = vunpack.c.l.b16 %v237
        %v488 = vunpack.c.l.b16 %v238
        %v489 = vunpack.c.l.b16 %v239
        %v490 = vunpack.c.l.b16 %v240
        %v491 = vpack.c.b16 %v488, %v487
        %v492 = vpack.c.b16 %v490, %v489
        %v496 = vsel %vm385, %v479, 0
        %v499 = vsel %vm385, %v480, 0
        %v502 = vsel %vm385, %v481, 0
        %v505 = vsel %vm385, %v482, 0
        %507 = vmatprep.subr.bf16.mxu0 0
        %508 = vmatpush1.bf16.msra.mxu0 %v491
        %509 = vmatprep.subr.bf16.mxu0 0
        %510 = vmatpush1.bf16.msra.mxu0 %v492
        %511 = vmatprep.subr.bf16.mxu0 0
        %512 = vmatpush1.bf16.msra.mxu0 0
        %513 = vmatprep.subr.bf16.mxu0 0
        %514 = vmatpush1.bf16.msra.mxu0 0
        %515 = vmatprep.subr.bf16.mxu0 0
        %516 = vmatpush1.bf16.msra.mxu0 0
        %517 = vmatprep.subr.bf16.mxu0 0
        %518 = vmatpush1.bf16.msra.mxu0 0
        %519 = vmatprep.subr.bf16.mxu0 0
        %520 = vmatpush1.bf16.msra.mxu0 0
        %521 = vmatprep.subr.bf16.mxu0 0
        %522 = vmatpush1.bf16.msra.mxu0 0
        %523 = vmatprep.subr.bf16.mxu0 0
        %524 = vmatpush1.bf16.msra.mxu0 0
        %525 = vmatprep.subr.bf16.mxu0 0
        %526 = vmatpush1.bf16.msra.mxu0 0
        %527 = vmatprep.subr.bf16.mxu0 0
        %528 = vmatpush1.bf16.msra.mxu0 0
        %529 = vmatprep.subr.bf16.mxu0 0
        %530 = vmatpush1.bf16.msra.mxu0 0
        %531 = vmatprep.subr.bf16.mxu0 0
        %532 = vmatpush1.bf16.msra.mxu0 0
        %533 = vmatprep.subr.bf16.mxu0 0
        %534 = vmatpush1.bf16.msra.mxu0 0
        %535 = vmatprep.subr.bf16.mxu0 0
        %536 = vmatpush1.bf16.msra.mxu0 0
        %537 = vmatprep.subr.bf16.mxu0 0
        %538 = vmatpush1.bf16.msra.mxu0 0
        %539 = vmatprep.mubr.bf16.mxu0 0
        %540 = vmatmul.mubr.bf16.gmra.mrb[0].mxu0 %v496
        %v541 = vpop.f32.mrb[0].mxu0
        %v542 = vadd.f32 %v433, %v541
        %v543 = vpop.f32.mrb[0].mxu0
        %v544 = vpop.f32.mrb[0].mxu0
        %v545 = vadd.f32 %v436, %v544
        %v546 = vpop.f32.mrb[0].mxu0
        %547 = vmatprep.mubr.bf16.mxu0 0
        %548 = vmatmul.mubr.bf16.gmra.mrb[0].mxu0 %v499
        %v549 = vpop.f32.mrb[0].mxu0
        %v550 = vadd.f32 %v441, %v549
        %v551 = vpop.f32.mrb[0].mxu0
        %v552 = vpop.f32.mrb[0].mxu0
        %v553 = vadd.f32 %v444, %v552
        %v554 = vpop.f32.mrb[0].mxu0
        %555 = vmatprep.mubr.bf16.mxu0 0
        %556 = vmatmul.mubr.bf16.gmra.mrb[0].mxu0 %v502
        %v557 = vpop.f32.mrb[0].mxu0
        %v558 = vadd.f32 %v449, %v557
        %v559 = vpop.f32.mrb[0].mxu0
        %v560 = vpop.f32.mrb[0].mxu0
        %v561 = vadd.f32 %v452, %v560
        %v562 = vpop.f32.mrb[0].mxu0
        %563 = vmatprep.mubr.bf16.mxu0 0
        %564 = vmatmul.mubr.bf16.gmra.mrb[0].mxu0 %v505
        %v565 = vpop.f32.mrb[0].mxu0
        %v566 = vadd.f32 %v457, %v565
        %v567 = vpop.f32.mrb[0].mxu0
        %v568 = vpop.f32.mrb[0].mxu0
        %v569 = vadd.f32 %v460, %v568
        %v570 = vpop.f32.mrb[0].mxu0
        %571 = vdwg.mxu0
        %vm580 = vcmask 1042432
        %vm581 = vcmask 1046532
        %vm582 = vmor %vm580, %vm581
        %v583 = vrot.slane %v217, 5
        %v584 = vrot.slane %v583, 4
        %v585 = vrot.slane %v218, 5
        %v586 = vsel %vm582, %v584, %v585
        %v587 = vrot.slane %v219, 5
        %v588 = vrot.slane %v587, 4
        %v589 = vrot.slane %v220, 5
        %v590 = vsel %vm582, %v588, %v589
        %v591 = vrot.slane %v221, 5
        %v592 = vrot.slane %v591, 4
        %v593 = vrot.slane %v222, 5
        %v594 = vsel %vm582, %v592, %v593
        %v595 = vrot.slane %v223, 5
        %v596 = vrot.slane %v595, 4
        %v597 = vrot.slane %v224, 5
        %v598 = vsel %vm582, %v596, %v597
        %v599 = vrot.slane %v225, 5
        %v600 = vrot.slane %v599, 4
        %v601 = vrot.slane %v226, 5
        %v602 = vsel %vm582, %v600, %v601
        %v603 = vrot.slane %v227, 5
        %v604 = vrot.slane %v603, 4
        %v605 = vrot.slane %v228, 5
        %v606 = vsel %vm582, %v604, %v605
        %v607 = vrot.slane %v229, 5
        %v608 = vrot.slane %v607, 4
        %v609 = vrot.slane %v230, 5
        %v610 = vsel %vm582, %v608, %v609
        %v611 = vrot.slane %v231, 5
        %v612 = vrot.slane %v611, 4
        %v613 = vrot.slane %v232, 5
        %v614 = vsel %vm582, %v612, %v613
        %s615 = scalar_lea.vmem %s2, 32
        %v616 = vld [vmem:[%s615] sm:$0xf]
        %v617 = vld [vmem:[%s615 + $0x4] sm:$0xf]
        %v618 = vld [vmem:[%s615 + $0x8] sm:$0xf]
        %v619 = vld [vmem:[%s615 + $0xc] sm:$0xf]
        %v620 = vunpack.c.l.b16 %v586
        %v621 = vunpack.c.l.b16 %v590
        %v622 = vunpack.c.l.b16 %v594
        %v623 = vunpack.c.l.b16 %v598
        %v624 = vunpack.c.l.b16 %v602
        %v625 = vunpack.c.l.b16 %v606
        %v626 = vunpack.c.l.b16 %v610
        %v627 = vunpack.c.l.b16 %v614
        %v628 = vpack.c.b16 %v621, %v620
        %v629 = vpack.c.b16 %v623, %v622
        %v630 = vpack.c.b16 %v625, %v624
        %v631 = vpack.c.b16 %v627, %v626
        %v636 = vunpack.c.l.b16 %v616
        %v637 = vunpack.c.l.b16 %v617
        %v638 = vunpack.c.l.b16 %v618
        %v639 = vunpack.c.l.b16 %v619
        %v640 = vpack.c.b16 %v637, %v636
        %v641 = vpack.c.b16 %v639, %v638
        %v645 = vsel %vm385, %v628, 0
        %v648 = vsel %vm385, %v629, 0
        %v651 = vsel %vm385, %v630, 0
        %v654 = vsel %vm385, %v631, 0
        %656 = vmatprep.subr.bf16.mxu0 0
        %657 = vmatpush1.bf16.msra.mxu0 %v640
        %658 = vmatprep.subr.bf16.mxu0 0
        %659 = vmatpush1.bf16.msra.mxu0 %v641
        %660 = vmatprep.subr.bf16.mxu0 0
        %661 = vmatpush1.bf16.msra.mxu0 0
        %662 = vmatprep.subr.bf16.mxu0 0
        %663 = vmatpush1.bf16.msra.mxu0 0
        %664 = vmatprep.subr.bf16.mxu0 0
        %665 = vmatpush1.bf16.msra.mxu0 0
        %666 = vmatprep.subr.bf16.mxu0 0
        %667 = vmatpush1.bf16.msra.mxu0 0
        %668 = vmatprep.subr.bf16.mxu0 0
        %669 = vmatpush1.bf16.msra.mxu0 0
        %670 = vmatprep.subr.bf16.mxu0 0
        %671 = vmatpush1.bf16.msra.mxu0 0
        %672 = vmatprep.subr.bf16.mxu0 0
        %673 = vmatpush1.bf16.msra.mxu0 0
        %674 = vmatprep.subr.bf16.mxu0 0
        %675 = vmatpush1.bf16.msra.mxu0 0
        %676 = vmatprep.subr.bf16.mxu0 0
        %677 = vmatpush1.bf16.msra.mxu0 0
        %678 = vmatprep.subr.bf16.mxu0 0
        %679 = vmatpush1.bf16.msra.mxu0 0
        %680 = vmatprep.subr.bf16.mxu0 0
        %681 = vmatpush1.bf16.msra.mxu0 0
        %682 = vmatprep.subr.bf16.mxu0 0
        %683 = vmatpush1.bf16.msra.mxu0 0
        %684 = vmatprep.subr.bf16.mxu0 0
        %685 = vmatpush1.bf16.msra.mxu0 0
        %686 = vmatprep.subr.bf16.mxu0 0
        %687 = vmatpush1.bf16.msra.mxu0 0
        %688 = vmatprep.mubr.bf16.mxu0 0
        %689 = vmatmul.mubr.bf16.gmra.mrb[0].mxu0 %v645
        %v690 = vpop.f32.mrb[0].mxu0
        %v691 = vadd.f32 0.0, %v690
        %v692 = vpop.f32.mrb[0].mxu0
        %v693 = vpop.f32.mrb[0].mxu0
        %v694 = vadd.f32 0.0, %v693
        %v695 = vpop.f32.mrb[0].mxu0
        %696 = vmatprep.mubr.bf16.mxu0 0
        %697 = vmatmul.mubr.bf16.gmra.mrb[0].mxu0 %v648
        %v698 = vpop.f32.mrb[0].mxu0
        %v699 = vadd.f32 0.0, %v698
        %v700 = vpop.f32.mrb[0].mxu0
        %v701 = vpop.f32.mrb[0].mxu0
        %v702 = vadd.f32 0.0, %v701
        %v703 = vpop.f32.mrb[0].mxu0
        %704 = vmatprep.mubr.bf16.mxu0 0
        %705 = vmatmul.mubr.bf16.gmra.mrb[0].mxu0 %v651
        %v706 = vpop.f32.mrb[0].mxu0
        %v707 = vadd.f32 0.0, %v706
        %v708 = vpop.f32.mrb[0].mxu0
        %v709 = vpop.f32.mrb[0].mxu0
        %v710 = vadd.f32 0.0, %v709
        %v711 = vpop.f32.mrb[0].mxu0
        %712 = vmatprep.mubr.bf16.mxu0 0
        %713 = vmatmul.mubr.bf16.gmra.mrb[0].mxu0 %v654
        %v714 = vpop.f32.mrb[0].mxu0
        %v715 = vadd.f32 0.0, %v714
        %v716 = vpop.f32.mrb[0].mxu0
        %v717 = vpop.f32.mrb[0].mxu0
        %v718 = vadd.f32 0.0, %v717
        %v719 = vpop.f32.mrb[0].mxu0
        %720 = vdwg.mxu0
        %v721 = vadd.f32 %v542, %v691
        %v722 = vadd.f32 %v545, %v694
        %v723 = vadd.f32 %v550, %v699
        %v724 = vadd.f32 %v553, %v702
        %v725 = vadd.f32 %v558, %v707
        %v726 = vadd.f32 %v561, %v710
        %v727 = vadd.f32 %v566, %v715
        %v728 = vadd.f32 %v569, %v718
        %s729 = scalar_lea.vmem %s2, 48
        %v730 = vld [vmem:[%s729] sm:$0xf]
        %v731 = vld [vmem:[%s729 + $0x4] sm:$0xf]
        %v732 = vld [vmem:[%s729 + $0x8] sm:$0xf]
        %v733 = vld [vmem:[%s729 + $0xc] sm:$0xf]
        %v735 = vunpack.c.l.b16 %v233
        %v736 = vpack.c.b16 %v473, %v472
        %v737 = vpack.c.b16 %v475, %v474
        %v738 = vpack.c.b16 %v477, %v476
        %v739 = vpack.c.b16 %v735, %v478
        %v744 = vunpack.c.l.b16 %v730
        %v745 = vunpack.c.l.b16 %v731
        %v746 = vunpack.c.l.b16 %v732
        %v747 = vunpack.c.l.b16 %v733
        %v748 = vpack.c.b16 %v745, %v744
        %v749 = vpack.c.b16 %v747, %v746
        %v753 = vsel %vm385, %v736, 0
        %v756 = vsel %vm385, %v737, 0
        %v759 = vsel %vm385, %v738, 0
        %v762 = vsel %vm385, %v739, 0
        %764 = vmatprep.subr.bf16.mxu0 0
        %765 = vmatpush1.bf16.msra.mxu0 %v748
        %766 = vmatprep.subr.bf16.mxu0 0
        %767 = vmatpush1.bf16.msra.mxu0 %v749
        %768 = vmatprep.subr.bf16.mxu0 0
        %769 = vmatpush1.bf16.msra.mxu0 0
        %770 = vmatprep.subr.bf16.mxu0 0
        %771 = vmatpush1.bf16.msra.mxu0 0
        %772 = vmatprep.subr.bf16.mxu0 0
        %773 = vmatpush1.bf16.msra.mxu0 0
        %774 = vmatprep.subr.bf16.mxu0 0
        %775 = vmatpush1.bf16.msra.mxu0 0
        %776 = vmatprep.subr.bf16.mxu0 0
        %777 = vmatpush1.bf16.msra.mxu0 0
        %778 = vmatprep.subr.bf16.mxu0 0
        %779 = vmatpush1.bf16.msra.mxu0 0
        %780 = vmatprep.subr.bf16.mxu0 0
        %781 = vmatpush1.bf16.msra.mxu0 0
        %782 = vmatprep.subr.bf16.mxu0 0
        %783 = vmatpush1.bf16.msra.mxu0 0
        %784 = vmatprep.subr.bf16.mxu0 0
        %785 = vmatpush1.bf16.msra.mxu0 0
        %786 = vmatprep.subr.bf16.mxu0 0
        %787 = vmatpush1.bf16.msra.mxu0 0
        %788 = vmatprep.subr.bf16.mxu0 0
        %789 = vmatpush1.bf16.msra.mxu0 0
        %790 = vmatprep.subr.bf16.mxu0 0
        %791 = vmatpush1.bf16.msra.mxu0 0
        %792 = vmatprep.subr.bf16.mxu0 0
        %793 = vmatpush1.bf16.msra.mxu0 0
        %794 = vmatprep.subr.bf16.mxu0 0
        %795 = vmatpush1.bf16.msra.mxu0 0
        %796 = vmatprep.mubr.bf16.mxu0 0
        %797 = vmatmul.mubr.bf16.gmra.mrb[0].mxu0 %v753
        %v798 = vpop.f32.mrb[0].mxu0
        %v799 = vadd.f32 0.0, %v798
        %v800 = vpop.f32.mrb[0].mxu0
        %v801 = vpop.f32.mrb[0].mxu0
        %v802 = vadd.f32 0.0, %v801
        %v803 = vpop.f32.mrb[0].mxu0
        %804 = vmatprep.mubr.bf16.mxu0 0
        %805 = vmatmul.mubr.bf16.gmra.mrb[0].mxu0 %v756
        %v806 = vpop.f32.mrb[0].mxu0
        %v807 = vadd.f32 0.0, %v806
        %v808 = vpop.f32.mrb[0].mxu0
        %v809 = vpop.f32.mrb[0].mxu0
        %v810 = vadd.f32 0.0, %v809
        %v811 = vpop.f32.mrb[0].mxu0
        %812 = vmatprep.mubr.bf16.mxu0 0
        %813 = vmatmul.mubr.bf16.gmra.mrb[0].mxu0 %v759
        %v814 = vpop.f32.mrb[0].mxu0
        %v815 = vadd.f32 0.0, %v814
        %v816 = vpop.f32.mrb[0].mxu0
        %v817 = vpop.f32.mrb[0].mxu0
        %v818 = vadd.f32 0.0, %v817
        %v819 = vpop.f32.mrb[0].mxu0
        %820 = vmatprep.mubr.bf16.mxu0 0
        %821 = vmatmul.mubr.bf16.gmra.mrb[0].mxu0 %v762
        %v822 = vpop.f32.mrb[0].mxu0
        %v823 = vadd.f32 0.0, %v822
        %v824 = vpop.f32.mrb[0].mxu0
        %v825 = vpop.f32.mrb[0].mxu0
        %v826 = vadd.f32 0.0, %v825
        %v827 = vpop.f32.mrb[0].mxu0
        %828 = vdwg.mxu0
        %v829 = vadd.f32 %v721, %v799
        %v830 = vadd.f32 %v722, %v802
        %v831 = vadd.f32 %v723, %v807
        %v832 = vadd.f32 %v724, %v810
        %v833 = vadd.f32 %v725, %v815
        %v834 = vadd.f32 %v726, %v818
        %v835 = vadd.f32 %v727, %v823
        %v836 = vadd.f32 %v728, %v826
        %v838 = vshrl.u32 %v233, 16
        %v840 = vrot.slane %v838, 4
        %v841 = vshll.u32 %v233, 16
        %v843 = vrot.slane %v841, 5
        %v844 = vor.u32 %v840, %v843
        %v845 = vrot.slane %v844, 4
        %v847 = vshll.u32 %v234, 16
        %v849 = vrot.slane %v847, 5
        %v850 = vsel %vm243, %v845, %v849
        %s851 = scalar_lea.vmem %s2, 64
        %v852 = vld [vmem:[%s851] sm:$0xf]
        %v853 = vld [vmem:[%s851 + $0x4] sm:$0xf]
        %v854 = vld [vmem:[%s851 + $0x8] sm:$0xf]
        %v855 = vld [vmem:[%s851 + $0xc] sm:$0xf]
        %v856 = vunpack.c.l.b16 %v850
        %v857 = vpack.c.b16 %v363, %v362
        %v858 = vpack.c.b16 %v365, %v364
        %v859 = vpack.c.b16 %v367, %v366
        %v860 = vpack.c.b16 %v856, %v368
        %v865 = vunpack.c.l.b16 %v852
        %v866 = vunpack.c.l.b16 %v853
        %v867 = vunpack.c.l.b16 %v854
        %v868 = vunpack.c.l.b16 %v855
        %v869 = vpack.c.b16 %v866, %v865
        %v870 = vpack.c.b16 %v868, %v867
        %v874 = vsel %vm385, %v857, 0
        %v877 = vsel %vm385, %v858, 0
        %v880 = vsel %vm385, %v859, 0
        %v883 = vsel %vm385, %v860, 0
        %885 = vmatprep.subr.bf16.mxu0 0
        %886 = vmatpush1.bf16.msra.mxu0 %v869
        %887 = vmatprep.subr.bf16.mxu0 0
        %888 = vmatpush1.bf16.msra.mxu0 %v870
        %889 = vmatprep.subr.bf16.mxu0 0
        %890 = vmatpush1.bf16.msra.mxu0 0
        %891 = vmatprep.subr.bf16.mxu0 0
        %892 = vmatpush1.bf16.msra.mxu0 0
        %893 = vmatprep.subr.bf16.mxu0 0
        %894 = vmatpush1.bf16.msra.mxu0 0
        %895 = vmatprep.subr.bf16.mxu0 0
        %896 = vmatpush1.bf16.msra.mxu0 0
        %897 = vmatprep.subr.bf16.mxu0 0
        %898 = vmatpush1.bf16.msra.mxu0 0
        %899 = vmatprep.subr.bf16.mxu0 0
        %900 = vmatpush1.bf16.msra.mxu0 0
        %901 = vmatprep.subr.bf16.mxu0 0
        %902 = vmatpush1.bf16.msra.mxu0 0
        %903 = vmatprep.subr.bf16.mxu0 0
        %904 = vmatpush1.bf16.msra.mxu0 0
        %905 = vmatprep.subr.bf16.mxu0 0
        %906 = vmatpush1.bf16.msra.mxu0 0
        %907 = vmatprep.subr.bf16.mxu0 0
        %908 = vmatpush1.bf16.msra.mxu0 0
        %909 = vmatprep.subr.bf16.mxu0 0
        %910 = vmatpush1.bf16.msra.mxu0 0
        %911 = vmatprep.subr.bf16.mxu0 0
        %912 = vmatpush1.bf16.msra.mxu0 0
        %913 = vmatprep.subr.bf16.mxu0 0
        %914 = vmatpush1.bf16.msra.mxu0 0
        %915 = vmatprep.subr.bf16.mxu0 0
        %916 = vmatpush1.bf16.msra.mxu0 0
        %917 = vmatprep.mubr.bf16.mxu0 0
        %918 = vmatmul.mubr.bf16.gmra.mrb[0].mxu0 %v874
        %v919 = vpop.f32.mrb[0].mxu0
        %v920 = vadd.f32 0.0, %v919
        %v921 = vpop.f32.mrb[0].mxu0
        %v922 = vpop.f32.mrb[0].mxu0
        %v923 = vadd.f32 0.0, %v922
        %v924 = vpop.f32.mrb[0].mxu0
        %925 = vmatprep.mubr.bf16.mxu0 0
        %926 = vmatmul.mubr.bf16.gmra.mrb[0].mxu0 %v877
        %v927 = vpop.f32.mrb[0].mxu0
        %v928 = vadd.f32 0.0, %v927
        %v929 = vpop.f32.mrb[0].mxu0
        %v930 = vpop.f32.mrb[0].mxu0
        %v931 = vadd.f32 0.0, %v930
        %v932 = vpop.f32.mrb[0].mxu0
        %933 = vmatprep.mubr.bf16.mxu0 0
        %934 = vmatmul.mubr.bf16.gmra.mrb[0].mxu0 %v880
        %v935 = vpop.f32.mrb[0].mxu0
        %v936 = vadd.f32 0.0, %v935
        %v937 = vpop.f32.mrb[0].mxu0
        %v938 = vpop.f32.mrb[0].mxu0
        %v939 = vadd.f32 0.0, %v938
        %v940 = vpop.f32.mrb[0].mxu0
        %941 = vmatprep.mubr.bf16.mxu0 0
        %942 = vmatmul.mubr.bf16.gmra.mrb[0].mxu0 %v883
        %v943 = vpop.f32.mrb[0].mxu0
        %v944 = vadd.f32 0.0, %v943
        %v945 = vpop.f32.mrb[0].mxu0
        %v946 = vpop.f32.mrb[0].mxu0
        %v947 = vadd.f32 0.0, %v946
        %v948 = vpop.f32.mrb[0].mxu0
        %949 = vdwg.mxu0
        %v950 = vadd.f32 %v829, %v920
        %v951 = vadd.f32 %v830, %v923
        %v952 = vadd.f32 %v831, %v928
        %v953 = vadd.f32 %v832, %v931
        %v954 = vadd.f32 %v833, %v936
        %v955 = vadd.f32 %v834, %v939
        %v956 = vadd.f32 %v835, %v944
        %v957 = vadd.f32 %v836, %v947
        %v959 = vrot.slane %v233, 5
        %v960 = vrot.slane %v959, 4
        %v961 = vrot.slane %v234, 5
        %v962 = vsel %vm582, %v960, %v961
        %s963 = scalar_lea.vmem %s2, 80
        %v964 = vld [vmem:[%s963] sm:$0xf]
        %v965 = vld [vmem:[%s963 + $0x4] sm:$0xf]
        %v966 = vld [vmem:[%s963 + $0x8] sm:$0xf]
        %v967 = vld [vmem:[%s963 + $0xc] sm:$0xf]
        %v968 = vunpack.c.l.b16 %v962
        %v969 = vpack.c.b16 %v622, %v621
        %v970 = vpack.c.b16 %v624, %v623
        %v971 = vpack.c.b16 %v626, %v625
        %v972 = vpack.c.b16 %v968, %v627
        %v977 = vunpack.c.l.b16 %v964
        %v978 = vunpack.c.l.b16 %v965
        %v979 = vunpack.c.l.b16 %v966
        %v980 = vunpack.c.l.b16 %v967
        %v981 = vpack.c.b16 %v978, %v977
        %v982 = vpack.c.b16 %v980, %v979
        %v986 = vsel %vm385, %v969, 0
        %v989 = vsel %vm385, %v970, 0
        %v992 = vsel %vm385, %v971, 0
        %v995 = vsel %vm385, %v972, 0
        %997 = vmatprep.subr.bf16.mxu0 0
        %998 = vmatpush1.bf16.msra.mxu0 %v981
        %999 = vmatprep.subr.bf16.mxu0 0
        %1000 = vmatpush1.bf16.msra.mxu0 %v982
        %1001 = vmatprep.subr.bf16.mxu0 0
        %1002 = vmatpush1.bf16.msra.mxu0 0
        %1003 = vmatprep.subr.bf16.mxu0 0
        %1004 = vmatpush1.bf16.msra.mxu0 0
        %1005 = vmatprep.subr.bf16.mxu0 0
        %1006 = vmatpush1.bf16.msra.mxu0 0
        %1007 = vmatprep.subr.bf16.mxu0 0
        %1008 = vmatpush1.bf16.msra.mxu0 0
        %1009 = vmatprep.subr.bf16.mxu0 0
        %1010 = vmatpush1.bf16.msra.mxu0 0
        %1011 = vmatprep.subr.bf16.mxu0 0
        %1012 = vmatpush1.bf16.msra.mxu0 0
        %1013 = vmatprep.subr.bf16.mxu0 0
        %1014 = vmatpush1.bf16.msra.mxu0 0
        %1015 = vmatprep.subr.bf16.mxu0 0
        %1016 = vmatpush1.bf16.msra.mxu0 0
        %1017 = vmatprep.subr.bf16.mxu0 0
        %1018 = vmatpush1.bf16.msra.mxu0 0
        %1019 = vmatprep.subr.bf16.mxu0 0
        %1020 = vmatpush1.bf16.msra.mxu0 0
        %1021 = vmatprep.subr.bf16.mxu0 0
        %1022 = vmatpush1.bf16.msra.mxu0 0
        %1023 = vmatprep.subr.bf16.mxu0 0
        %1024 = vmatpush1.bf16.msra.mxu0 0
        %1025 = vmatprep.subr.bf16.mxu0 0
        %1026 = vmatpush1.bf16.msra.mxu0 0
        %1027 = vmatprep.subr.bf16.mxu0 0
        %1028 = vmatpush1.bf16.msra.mxu0 0
        %1029 = vmatprep.mubr.bf16.mxu0 0
        %1030 = vmatmul.mubr.bf16.gmra.mrb[0].mxu0 %v986
        %v1031 = vpop.f32.mrb[0].mxu0
        %v1032 = vadd.f32 0.0, %v1031
        %v1033 = vpop.f32.mrb[0].mxu0
        %v1034 = vpop.f32.mrb[0].mxu0
        %v1035 = vadd.f32 0.0, %v1034
        %v1036 = vpop.f32.mrb[0].mxu0
        %1037 = vmatprep.mubr.bf16.mxu0 0
        %1038 = vmatmul.mubr.bf16.gmra.mrb[0].mxu0 %v989
        %v1039 = vpop.f32.mrb[0].mxu0
        %v1040 = vadd.f32 0.0, %v1039
        %v1041 = vpop.f32.mrb[0].mxu0
        %v1042 = vpop.f32.mrb[0].mxu0
        %v1043 = vadd.f32 0.0, %v1042
        %v1044 = vpop.f32.mrb[0].mxu0
        %1045 = vmatprep.mubr.bf16.mxu0 0
        %1046 = vmatmul.mubr.bf16.gmra.mrb[0].mxu0 %v992
        %v1047 = vpop.f32.mrb[0].mxu0
        %v1048 = vadd.f32 0.0, %v1047
        %v1049 = vpop.f32.mrb[0].mxu0
        %v1050 = vpop.f32.mrb[0].mxu0
        %v1051 = vadd.f32 0.0, %v1050
        %v1052 = vpop.f32.mrb[0].mxu0
        %1053 = vmatprep.mubr.bf16.mxu0 0
        %1054 = vmatmul.mubr.bf16.gmra.mrb[0].mxu0 %v995
        %v1055 = vpop.f32.mrb[0].mxu0
        %v1056 = vadd.f32 0.0, %v1055
        %v1057 = vpop.f32.mrb[0].mxu0
        %v1058 = vpop.f32.mrb[0].mxu0
        %v1059 = vadd.f32 0.0, %v1058
        %v1060 = vpop.f32.mrb[0].mxu0
        %1061 = vdwg.mxu0
        %v1062 = vadd.f32 %v950, %v1032
        %v1063 = vadd.f32 %v951, %v1035
        %v1064 = vadd.f32 %v952, %v1040
        %v1065 = vadd.f32 %v953, %v1043
        %v1066 = vadd.f32 %v954, %v1048
        %v1067 = vadd.f32 %v955, %v1051
        %v1068 = vadd.f32 %v956, %v1056
        %v1069 = vadd.f32 %v957, %v1059
        %s1070 = scalar_lea.vmem %s2, 96
        %v1071 = vld [vmem:[%s1070] sm:$0xf]
        %v1072 = vld [vmem:[%s1070 + $0x4] sm:$0xf]
        %v1073 = vld [vmem:[%s1070 + $0x8] sm:$0xf]
        %v1074 = vld [vmem:[%s1070 + $0xc] sm:$0xf]
        %v1076 = vunpack.c.l.b16 %v235
        %v1077 = vpack.c.b16 %v1076, %v735
        %v1082 = vunpack.c.l.b16 %v1071
        %v1083 = vunpack.c.l.b16 %v1072
        %v1084 = vunpack.c.l.b16 %v1073
        %v1085 = vunpack.c.l.b16 %v1074
        %v1086 = vpack.c.b16 %v1083, %v1082
        %v1087 = vpack.c.b16 %v1085, %v1084
        %v1091 = vsel %vm385, %v1077, 0
        %1093 = vmatprep.subr.bf16.mxu0 0
        %1094 = vmatpush1.bf16.msra.mxu0 %v1086
        %1095 = vmatprep.subr.bf16.mxu0 0
        %1096 = vmatpush1.bf16.msra.mxu0 %v1087
        %1097 = vmatprep.subr.bf16.mxu0 0
        %1098 = vmatpush1.bf16.msra.mxu0 0
        %1099 = vmatprep.subr.bf16.mxu0 0
        %1100 = vmatpush1.bf16.msra.mxu0 0
        %1101 = vmatprep.subr.bf16.mxu0 0
        %1102 = vmatpush1.bf16.msra.mxu0 0
        %1103 = vmatprep.subr.bf16.mxu0 0
        %1104 = vmatpush1.bf16.msra.mxu0 0
        %1105 = vmatprep.subr.bf16.mxu0 0
        %1106 = vmatpush1.bf16.msra.mxu0 0
        %1107 = vmatprep.subr.bf16.mxu0 0
        %1108 = vmatpush1.bf16.msra.mxu0 0
        %1109 = vmatprep.subr.bf16.mxu0 0
        %1110 = vmatpush1.bf16.msra.mxu0 0
        %1111 = vmatprep.subr.bf16.mxu0 0
        %1112 = vmatpush1.bf16.msra.mxu0 0
        %1113 = vmatprep.subr.bf16.mxu0 0
        %1114 = vmatpush1.bf16.msra.mxu0 0
        %1115 = vmatprep.subr.bf16.mxu0 0
        %1116 = vmatpush1.bf16.msra.mxu0 0
        %1117 = vmatprep.subr.bf16.mxu0 0
        %1118 = vmatpush1.bf16.msra.mxu0 0
        %1119 = vmatprep.subr.bf16.mxu0 0
        %1120 = vmatpush1.bf16.msra.mxu0 0
        %1121 = vmatprep.subr.bf16.mxu0 0
        %1122 = vmatpush1.bf16.msra.mxu0 0
        %1123 = vmatprep.subr.bf16.mxu0 0
        %1124 = vmatpush1.bf16.msra.mxu0 0
        %1125 = vmatprep.mubr.bf16.mxu0 0
        %1126 = vmatmul.mubr.bf16.gmra.mrb[0].mxu0 %v499
        %v1127 = vpop.f32.mrb[0].mxu0
        %v1128 = vadd.f32 0.0, %v1127
        %v1129 = vpop.f32.mrb[0].mxu0
        %v1130 = vpop.f32.mrb[0].mxu0
        %v1131 = vadd.f32 0.0, %v1130
        %v1132 = vpop.f32.mrb[0].mxu0
        %1133 = vmatprep.mubr.bf16.mxu0 0
        %1134 = vmatmul.mubr.bf16.gmra.mrb[0].mxu0 %v502
        %v1135 = vpop.f32.mrb[0].mxu0
        %v1136 = vadd.f32 0.0, %v1135
        %v1137 = vpop.f32.mrb[0].mxu0
        %v1138 = vpop.f32.mrb[0].mxu0
        %v1139 = vadd.f32 0.0, %v1138
        %v1140 = vpop.f32.mrb[0].mxu0
        %1141 = vmatprep.mubr.bf16.mxu0 0
        %1142 = vmatmul.mubr.bf16.gmra.mrb[0].mxu0 %v505
        %v1143 = vpop.f32.mrb[0].mxu0
        %v1144 = vadd.f32 0.0, %v1143
        %v1145 = vpop.f32.mrb[0].mxu0
        %v1146 = vpop.f32.mrb[0].mxu0
        %v1147 = vadd.f32 0.0, %v1146
        %v1148 = vpop.f32.mrb[0].mxu0
        %1149 = vmatprep.mubr.bf16.mxu0 0
        %1150 = vmatmul.mubr.bf16.gmra.mrb[0].mxu0 %v1091
        %v1151 = vpop.f32.mrb[0].mxu0
        %v1152 = vadd.f32 0.0, %v1151
        %v1153 = vpop.f32.mrb[0].mxu0
        %v1154 = vpop.f32.mrb[0].mxu0
        %v1155 = vadd.f32 0.0, %v1154
        %v1156 = vpop.f32.mrb[0].mxu0
        %1157 = vdwg.mxu0
        %v1158 = vadd.f32 %v1062, %v1128
        %v1159 = vadd.f32 %v1063, %v1131
        %v1160 = vadd.f32 %v1064, %v1136
        %v1161 = vadd.f32 %v1065, %v1139
        %v1162 = vadd.f32 %v1066, %v1144
        %v1163 = vadd.f32 %v1067, %v1147
        %v1164 = vadd.f32 %v1068, %v1152
        %v1165 = vadd.f32 %v1069, %v1155
        %v1167 = vshrl.u32 %v235, 16
        %v1169 = vrot.slane %v1167, 4
        %v1170 = vshll.u32 %v235, 16
        %v1172 = vrot.slane %v1170, 5
        %v1173 = vor.u32 %v1169, %v1172
        %v1174 = vrot.slane %v1173, 4
        %v1176 = vshll.u32 %v236, 16
        %v1178 = vrot.slane %v1176, 5
        %v1179 = vsel %vm243, %v1174, %v1178
        %s1180 = scalar_lea.vmem %s2, 112
        %v1181 = vld [vmem:[%s1180] sm:$0xf]
        %v1182 = vld [vmem:[%s1180 + $0x4] sm:$0xf]
        %v1183 = vld [vmem:[%s1180 + $0x8] sm:$0xf]
        %v1184 = vld [vmem:[%s1180 + $0xc] sm:$0xf]
        %v1185 = vunpack.c.l.b16 %v1179
        %v1186 = vpack.c.b16 %v1185, %v856
        %v1191 = vunpack.c.l.b16 %v1181
        %v1192 = vunpack.c.l.b16 %v1182
        %v1193 = vunpack.c.l.b16 %v1183
        %v1194 = vunpack.c.l.b16 %v1184
        %v1195 = vpack.c.b16 %v1192, %v1191
        %v1196 = vpack.c.b16 %v1194, %v1193
        %v1200 = vsel %vm385, %v1186, 0
        %1202 = vmatprep.subr.bf16.mxu0 0
        %1203 = vmatpush1.bf16.msra.mxu0 %v1195
        %1204 = vmatprep.subr.bf16.mxu0 0
        %1205 = vmatpush1.bf16.msra.mxu0 %v1196
        %1206 = vmatprep.subr.bf16.mxu0 0
        %1207 = vmatpush1.bf16.msra.mxu0 0
        %1208 = vmatprep.subr.bf16.mxu0 0
        %1209 = vmatpush1.bf16.msra.mxu0 0
        %1210 = vmatprep.subr.bf16.mxu0 0
        %1211 = vmatpush1.bf16.msra.mxu0 0
        %1212 = vmatprep.subr.bf16.mxu0 0
        %1213 = vmatpush1.bf16.msra.mxu0 0
        %1214 = vmatprep.subr.bf16.mxu0 0
        %1215 = vmatpush1.bf16.msra.mxu0 0
        %1216 = vmatprep.subr.bf16.mxu0 0
        %1217 = vmatpush1.bf16.msra.mxu0 0
        %1218 = vmatprep.subr.bf16.mxu0 0
        %1219 = vmatpush1.bf16.msra.mxu0 0
        %1220 = vmatprep.subr.bf16.mxu0 0
        %1221 = vmatpush1.bf16.msra.mxu0 0
        %1222 = vmatprep.subr.bf16.mxu0 0
        %1223 = vmatpush1.bf16.msra.mxu0 0
        %1224 = vmatprep.subr.bf16.mxu0 0
        %1225 = vmatpush1.bf16.msra.mxu0 0
        %1226 = vmatprep.subr.bf16.mxu0 0
        %1227 = vmatpush1.bf16.msra.mxu0 0
        %1228 = vmatprep.subr.bf16.mxu0 0
        %1229 = vmatpush1.bf16.msra.mxu0 0
        %1230 = vmatprep.subr.bf16.mxu0 0
        %1231 = vmatpush1.bf16.msra.mxu0 0
        %1232 = vmatprep.subr.bf16.mxu0 0
        %1233 = vmatpush1.bf16.msra.mxu0 0
        %1234 = vmatprep.mubr.bf16.mxu0 0
        %1235 = vmatmul.mubr.bf16.gmra.mrb[0].mxu0 %v390
        %v1236 = vpop.f32.mrb[0].mxu0
        %v1237 = vadd.f32 0.0, %v1236
        %v1238 = vpop.f32.mrb[0].mxu0
        %v1239 = vpop.f32.mrb[0].mxu0
        %v1240 = vadd.f32 0.0, %v1239
        %v1241 = vpop.f32.mrb[0].mxu0
        %1242 = vmatprep.mubr.bf16.mxu0 0
        %1243 = vmatmul.mubr.bf16.gmra.mrb[0].mxu0 %v393
        %v1244 = vpop.f32.mrb[0].mxu0
        %v1245 = vadd.f32 0.0, %v1244
        %v1246 = vpop.f32.mrb[0].mxu0
        %v1247 = vpop.f32.mrb[0].mxu0
        %v1248 = vadd.f32 0.0, %v1247
        %v1249 = vpop.f32.mrb[0].mxu0
        %1250 = vmatprep.mubr.bf16.mxu0 0
        %1251 = vmatmul.mubr.bf16.gmra.mrb[0].mxu0 %v396
        %v1252 = vpop.f32.mrb[0].mxu0
        %v1253 = vadd.f32 0.0, %v1252
        %v1254 = vpop.f32.mrb[0].mxu0
        %v1255 = vpop.f32.mrb[0].mxu0
        %v1256 = vadd.f32 0.0, %v1255
        %v1257 = vpop.f32.mrb[0].mxu0
        %1258 = vmatprep.mubr.bf16.mxu0 0
        %1259 = vmatmul.mubr.bf16.gmra.mrb[0].mxu0 %v1200
        %v1260 = vpop.f32.mrb[0].mxu0
        %v1261 = vadd.f32 0.0, %v1260
        %v1262 = vpop.f32.mrb[0].mxu0
        %v1263 = vpop.f32.mrb[0].mxu0
        %v1264 = vadd.f32 0.0, %v1263
        %v1265 = vpop.f32.mrb[0].mxu0
        %1266 = vdwg.mxu0
        %v1267 = vadd.f32 %v1158, %v1237
        %v1268 = vadd.f32 %v1159, %v1240
        %v1269 = vadd.f32 %v1160, %v1245
        %v1270 = vadd.f32 %v1161, %v1248
        %v1271 = vadd.f32 %v1162, %v1253
        %v1272 = vadd.f32 %v1163, %v1256
        %v1273 = vadd.f32 %v1164, %v1261
        %v1274 = vadd.f32 %v1165, %v1264
        %v1276 = vrot.slane %v235, 5
        %v1277 = vrot.slane %v1276, 4
        %v1278 = vrot.slane %v236, 5
        %v1279 = vsel %vm582, %v1277, %v1278
        %s1280 = scalar_lea.vmem %s2, 128
        %v1281 = vld [vmem:[%s1280] sm:$0xf]
        %v1282 = vld [vmem:[%s1280 + $0x4] sm:$0xf]
        %v1283 = vld [vmem:[%s1280 + $0x8] sm:$0xf]
        %v1284 = vld [vmem:[%s1280 + $0xc] sm:$0xf]
        %v1285 = vunpack.c.l.b16 %v1279
        %v1286 = vpack.c.b16 %v1285, %v968
        %v1291 = vunpack.c.l.b16 %v1281
        %v1292 = vunpack.c.l.b16 %v1282
        %v1293 = vunpack.c.l.b16 %v1283
        %v1294 = vunpack.c.l.b16 %v1284
        %v1295 = vpack.c.b16 %v1292, %v1291
        %v1296 = vpack.c.b16 %v1294, %v1293
        %v1300 = vsel %vm385, %v1286, 0
        %1302 = vmatprep.subr.bf16.mxu0 0
        %1303 = vmatpush1.bf16.msra.mxu0 %v1295
        %1304 = vmatprep.subr.bf16.mxu0 0
        %1305 = vmatpush1.bf16.msra.mxu0 %v1296
        %1306 = vmatprep.subr.bf16.mxu0 0
        %1307 = vmatpush1.bf16.msra.mxu0 0
        %1308 = vmatprep.subr.bf16.mxu0 0
        %1309 = vmatpush1.bf16.msra.mxu0 0
        %1310 = vmatprep.subr.bf16.mxu0 0
        %1311 = vmatpush1.bf16.msra.mxu0 0
        %1312 = vmatprep.subr.bf16.mxu0 0
        %1313 = vmatpush1.bf16.msra.mxu0 0
        %1314 = vmatprep.subr.bf16.mxu0 0
        %1315 = vmatpush1.bf16.msra.mxu0 0
        %1316 = vmatprep.subr.bf16.mxu0 0
        %1317 = vmatpush1.bf16.msra.mxu0 0
        %1318 = vmatprep.subr.bf16.mxu0 0
        %1319 = vmatpush1.bf16.msra.mxu0 0
        %1320 = vmatprep.subr.bf16.mxu0 0
        %1321 = vmatpush1.bf16.msra.mxu0 0
        %1322 = vmatprep.subr.bf16.mxu0 0
        %1323 = vmatpush1.bf16.msra.mxu0 0
        %1324 = vmatprep.subr.bf16.mxu0 0
        %1325 = vmatpush1.bf16.msra.mxu0 0
        %1326 = vmatprep.subr.bf16.mxu0 0
        %1327 = vmatpush1.bf16.msra.mxu0 0
        %1328 = vmatprep.subr.bf16.mxu0 0
        %1329 = vmatpush1.bf16.msra.mxu0 0
        %1330 = vmatprep.subr.bf16.mxu0 0
        %1331 = vmatpush1.bf16.msra.mxu0 0
        %1332 = vmatprep.subr.bf16.mxu0 0
        %1333 = vmatpush1.bf16.msra.mxu0 0
        %1334 = vmatprep.mubr.bf16.mxu0 0
        %1335 = vmatmul.mubr.bf16.gmra.mrb[0].mxu0 %v648
        %v1336 = vpop.f32.mrb[0].mxu0
        %v1337 = vadd.f32 0.0, %v1336
        %v1338 = vpop.f32.mrb[0].mxu0
        %v1339 = vpop.f32.mrb[0].mxu0
        %v1340 = vadd.f32 0.0, %v1339
        %v1341 = vpop.f32.mrb[0].mxu0
        %1342 = vmatprep.mubr.bf16.mxu0 0
        %1343 = vmatmul.mubr.bf16.gmra.mrb[0].mxu0 %v651
        %v1344 = vpop.f32.mrb[0].mxu0
        %v1345 = vadd.f32 0.0, %v1344
        %v1346 = vpop.f32.mrb[0].mxu0
        %v1347 = vpop.f32.mrb[0].mxu0
        %v1348 = vadd.f32 0.0, %v1347
        %v1349 = vpop.f32.mrb[0].mxu0
        %1350 = vmatprep.mubr.bf16.mxu0 0
        %1351 = vmatmul.mubr.bf16.gmra.mrb[0].mxu0 %v654
        %v1352 = vpop.f32.mrb[0].mxu0
        %v1353 = vadd.f32 0.0, %v1352
        %v1354 = vpop.f32.mrb[0].mxu0
        %v1355 = vpop.f32.mrb[0].mxu0
        %v1356 = vadd.f32 0.0, %v1355
        %v1357 = vpop.f32.mrb[0].mxu0
        %1358 = vmatprep.mubr.bf16.mxu0 0
        %1359 = vmatmul.mubr.bf16.gmra.mrb[0].mxu0 %v1300
        %v1360 = vpop.f32.mrb[0].mxu0
        %v1361 = vadd.f32 0.0, %v1360
        %v1362 = vpop.f32.mrb[0].mxu0
        %v1363 = vpop.f32.mrb[0].mxu0
        %v1364 = vadd.f32 0.0, %v1363
        %v1365 = vpop.f32.mrb[0].mxu0
        %1366 = vdwg.mxu0
        %v1367 = vadd.f32 %v1267, %v1337
        %v1368 = vadd.f32 %v1268, %v1340
        %v1369 = vadd.f32 %v1269, %v1345
        %v1370 = vadd.f32 %v1270, %v1348
        %v1371 = vadd.f32 %v1271, %v1353
        %v1372 = vadd.f32 %v1272, %v1356
        %v1373 = vadd.f32 %v1273, %v1361
        %v1374 = vadd.f32 %v1274, %v1364
        %v1375 = vld [vmem:[%s215] sm:$0xff]
        %v1376 = vld [vmem:[%s215 + $0x8] sm:$0xff]
        %v1377 = vld [vmem:[%s215 + $0x10] sm:$0xff]
        %v1378 = vld [vmem:[%s215 + $0x18] sm:$0xff]
        %v1379 = vld [vmem:[%s215 + $0x20] sm:$0xff]
        %v1380 = vld [vmem:[%s215 + $0x28] sm:$0xff]
        %v1381 = vld [vmem:[%s215 + $0x30] sm:$0xff]
        %v1382 = vld [vmem:[%s215 + $0x38] sm:$0xff]
        %v1383 = vadd.f32 %v1375, %v1367
        %v1384 = vadd.f32 %v1376, %v1368
        %v1385 = vadd.f32 %v1377, %v1369
        %v1386 = vadd.f32 %v1378, %v1370
        %v1387 = vadd.f32 %v1379, %v1371
        %v1388 = vadd.f32 %v1380, %v1372
        %v1389 = vadd.f32 %v1381, %v1373
        %v1390 = vadd.f32 %v1382, %v1374
        %v1391 = vld [vmem:[%s3] sm:$0x1]
        %v1393 = vlaneseq
        %v1394 = vshrl.u32 %v1393, 7
        %v1395 = vsub.s32 0, %v1394
        %v1396 = vrot.slane %v1391, %v1395
        %v1398 = vadd.f32 %v1383, %v1396
        %v1399 = vadd.f32 %v1384, %v1396
        %v1400 = vadd.f32 %v1385, %v1396
        %v1401 = vadd.f32 %v1386, %v1396
        %v1402 = vadd.f32 %v1387, %v1396
        %v1403 = vadd.f32 %v1388, %v1396
        %v1404 = vadd.f32 %v1389, %v1396
        %v1405 = vadd.f32 %v1390, %v1396
        %1406 = vst.msk [vmem:[%s205] sm:$0xff] %vm385, %v1398
        %1407 = vst.msk [vmem:[%s205 + $0x8] sm:$0xff] %vm385, %v1399
        %1408 = vst.msk [vmem:[%s205 + $0x10] sm:$0xff] %vm385, %v1400
        %1409 = vst.msk [vmem:[%s205 + $0x18] sm:$0xff] %vm385, %v1401
        %1410 = vst.msk [vmem:[%s205 + $0x20] sm:$0xff] %vm385, %v1402
        %1411 = vst.msk [vmem:[%s205 + $0x28] sm:$0xff] %vm385, %v1403
        %1412 = vst.msk [vmem:[%s205 + $0x30] sm:$0xff] %vm385, %v1404
        %1413 = vst.msk [vmem:[%s205 + $0x38] sm:$0xff] %vm385, %v1405
        %s1414 = sand.u32 %s120, 1
        %s1415 = scalar_lea.sflag [#allocation3], %s1414
        %s1416 = sand.u32 %s120, 1
        %s1417 = smul.addr %s1416, 64
        %s1418 = scalar_lea.vmem [#allocation2], %s1417
        // Predicated region
        $region37: #{sk_reference_attention.5} parent=35 // pred_check
          %p1419 = pneg %p130
        $region38: #{sk_reference_attention.5} parent=35 // pred_check_branch
          %1421 = sbr.rel (%p1419) target = $region40
        $region39: #{sk_reference_attention.5} parent=35 // pred_region
          %s1423 = ssub.s32 1024, 1024
          %1424 = vsyncadd %s1415, %s1423
          %s1425 = smul.addr %s18, 8
          %s1426 = smul.addr %s1425, 128
          %s1427 = scalar_lea.hbm %s4, %s1426
          %s1428 = sshll.u32 %s1418, 4
          %s1429 = int_to_ptr.vmem [resolvable:$true] %s1428
          %1434 = dma.vmem_to_hbm [thread:$0]  %s1429, 1024, %s1427, %s1415, 128, 128, 8
        $region40: #{sk_reference_attention.5} parent=35 // pred_fallthru
          _
      $region36: #{sk_reference_attention.5} parent=5 // pred_fallthru
        _
      %p1435 = scmp.le.s32.totalorder 2, %s13
      // Predicated region
      $region41: #{sk_reference_attention.5} parent=5 // pred_check
        %p1436 = pneg %p1435
      $region42: #{sk_reference_attention.5} parent=5 // pred_check_branch
        %1438 = sbr.rel (%p1436) target = $region44
      $region43: #{sk_reference_attention.5} parent=5 // pred_region
        %s1439 = ssub.s32 %s13, 2
        // Predicated region
        $region45: #{sk_reference_attention.5} parent=43 // pred_check
          %p1440 = pneg %p136
        $region46: #{sk_reference_attention.5} parent=43 // pred_check_branch
          %1442 = sbr.rel (%p1440) target = $region48
        $region47: #{sk_reference_attention.5} parent=43 // pred_region
          %s1443 = sand.u32 %s121, 1
          %s1444 = scalar_lea.sflag [#allocation3], %s1443
          %s1445 = sand.u32 %s121, 1
          %s1446 = smul.addr %s1445, 64
          %s1447 = scalar_lea.vmem [#allocation2], %s1446
          %1448 = dma.done %s1444, 1024
        $region48: #{sk_reference_attention.5} parent=43 // pred_fallthru
          _
      $region44: #{sk_reference_attention.5} parent=5 // pred_fallthru
        _
    $region6: #{sk_reference_attention.5} parent=1 // loop_footer
      %s17 = sadd.s32 1, %s13
    $region7: #{sk_reference_attention.5} parent=1 // loop_footer_branch
      %12 = sbr.rel target = $region3
    $region8: #{sk_reference_attention.5} parent=1 // loop_exit
      _
    %1449 = vsyncpa [#allocation3], 1
    %s1450 = scalar_lea.sflag [#allocation3], 1
    %1451 = vsyncpa %s1450, 1

</llo_original>
